<compile_context>
chip_gen: v7x
topology: tpu7x:2x2x1
jax: 0.10.0
libtpu: 0.0.40
codegen_flags: <defaults>
</compile_context>

<pallas_src>
import jax
import jax.numpy as jnp
from jax.experimental import pallas as pl
from jax.experimental.pallas import tpu as pltpu

NUM_IN = 32          # num_in (module default)
HIDDEN = 128         # fc hidden width
LANES = 128          # TPU lane width
MIN_TM = 1024        # keeps the (TM//128, 128) out block sublane-divisible (>=8)
TM_DEFAULT = 4096    # row tile (tunable); multiple of MIN_TM


def _round_up(v, m):
    return ((v + m - 1) // m) * m


def attention2_kernel(x_ref, w1_ref, b1_ref, w2_ref, b2_ref, o_ref):
    # x_ref:  (TM, NUM_IN)      f32  (cast to bf16 in-kernel for the MXU)
    # w1_ref: (NUM_IN, HIDDEN)  f32  (resident across the grid)
    # b1_ref: (1, HIDDEN)       f32
    # w2_ref: (HIDDEN, 1)       f32  (second linear's weight as a column)
    # b2_ref: (1,)              f32  SMEM scalar
    # o_ref:  (TM // 128, 128)  f32  lane-dense logit block
    tm = x_ref.shape[0]

    x = x_ref[...].astype(jnp.bfloat16)                 # in-kernel cast (VMEM)
    w1 = w1_ref[...].astype(jnp.bfloat16)
    h = jnp.dot(x, w1, preferred_element_type=jnp.float32)   # MXU, f32 acc
    h = jnp.maximum(h + b1_ref[...], 0.0)                    # f32 bias + ReLU

    # Second linear (128 -> 1) on the MXU instead of a per-sublane XLU reduce.
    logit_col = jnp.dot(h, w2_ref[...], preferred_element_type=jnp.float32)

    # Relayout only the TM logits (not h) into the lane-dense output block,
    # then finish bias + sigmoid on the dense (TM//128, 128) layout.
    logit = logit_col.reshape(tm // LANES, LANES) + b2_ref[0]
    sig = pl.reciprocal(1.0 + jnp.exp(-logit), approx=True)   # EUP sigmoid
    o_ref[...] = sig.astype(o_ref.dtype)


def attention2_forward(x, w1, b1, w2, b2, num_instances, tm=TM_DEFAULT):
    """x: (N, NUM_IN) f32. Returns (N // num_instances, num_instances, 1) f32."""
    n, num_in = x.shape
    assert num_in == NUM_IN
    assert n % num_instances == 0, "rows must group evenly into instances"

    # Tile is a multiple of MIN_TM; clamp down for tiny inputs so we don't
    # allocate a pointlessly huge tile.  No padding pass: the last block may
    # be partial (Pallas copies only the valid rows; garbage lanes are sliced).
    tm = min(_round_up(tm, MIN_TM), _round_up(n, MIN_TM))
    grid = pl.cdiv(n, tm)
    out_rows = grid * (tm // LANES)

    params_bytes = (NUM_IN * HIDDEN + HIDDEN + HIDDEN + 1) * 4
    cost = pl.CostEstimate(
        flops=2 * n * NUM_IN * HIDDEN + 2 * n * HIDDEN,
        transcendentals=n,
        bytes_accessed=n * NUM_IN * 4 + n * 4 + params_bytes,
    )

    out = pl.pallas_call(
        attention2_kernel,
        out_shape=jax.ShapeDtypeStruct((out_rows, LANES), jnp.float32),
        grid=(grid,),
        in_specs=[
            pl.BlockSpec((tm, NUM_IN), lambda i: (i, 0)),        # x row tile (f32)
            pl.BlockSpec((NUM_IN, HIDDEN), lambda i: (0, 0)),    # W1 (resident)
            pl.BlockSpec((1, HIDDEN), lambda i: (0, 0)),         # b1
            pl.BlockSpec((HIDDEN, 1), lambda i: (0, 0)),         # W2 column
            pl.BlockSpec(memory_space=pltpu.MemorySpace.SMEM),   # b2 scalar
        ],
        out_specs=pl.BlockSpec((tm // LANES, LANES), lambda i: (i, 0)),
        compiler_params=pltpu.CompilerParams(
            dimension_semantics=("parallel",)),
        cost_estimate=cost,
    )(x, w1, b1, w2, b2)

    # Layout glue: row-major flatten, drop padded lanes, regroup per instance.
    flat = out.reshape(-1)[:n]
    return flat.reshape(-1, num_instances, 1)


def init_params(key):
    """Deterministic init mirroring nn.Linear shapes.

    PyTorch stores Linear weights as (out, in); we keep W1 transposed to
    (in, out) and W2 as a (HIDDEN, 1) column so the kernel needs no transposes.
    """
    k1, k2, k3, k4 = jax.random.split(key, 4)
    bound1 = 1.0 / jnp.sqrt(NUM_IN)
    bound2 = 1.0 / jnp.sqrt(HIDDEN)
    w1 = jax.random.uniform(k1, (NUM_IN, HIDDEN), jnp.float32, -bound1, bound1)
    b1 = jax.random.uniform(k2, (1, HIDDEN), jnp.float32, -bound1, bound1)
    w2 = jax.random.uniform(k3, (HIDDEN, 1), jnp.float32, -bound2, bound2)
    b2 = jax.random.uniform(k4, (1,), jnp.float32, -bound2, bound2)
    return w1, b1, w2, b2


if __name__ == "__main__":
    key = jax.random.PRNGKey(0)
    kx, kp = jax.random.split(key)

    batch = 2
    num_instances = 32                       # module default
    n_rows = batch * num_instances           # 64 rows of num_in features
    x = jax.random.normal(kx, (n_rows, NUM_IN), jnp.float32)
    w1, b1, w2, b2 = init_params(kp)

    out = attention2_forward(x, w1, b1, w2, b2, num_instances)
    out = jax.block_until_ready(out)

    # Pure-JAX f32 reference (same math as the PyTorch forward).
    h_ref = jnp.maximum(x @ w1 + b1, 0.0)
    ref = jax.nn.sigmoid(h_ref @ w2 + b2)
    ref = ref.reshape(-1, num_instances, 1)

    assert out.shape == (batch, num_instances, 1)
    # bf16 MXU inputs + approx reciprocal -> slightly looser tolerance than f32.
    assert jnp.allclose(out, ref, atol=2e-2, rtol=1e-2)

    print("KERNEL_OK")
</pallas_src>

<mosaic_0001>
module attributes {stable_mosaic.version = 11 : i64} {
  func.func @attention2_kernel(%arg0: i32, %arg1: memref<1024x32xf32, #tpu.memory_space<vmem>>, %arg2: memref<32x128xf32, #tpu.memory_space<vmem>>, %arg3: memref<1x128xf32, #tpu.memory_space<vmem>>, %arg4: memref<128x1xf32, #tpu.memory_space<vmem>>, %arg5: memref<1xf32, #tpu.memory_space<smem>>, %arg6: memref<8x128xf32, #tpu.memory_space<vmem>>) attributes {dimension_semantics = [#tpu.dimension_semantics<parallel>], iteration_bounds = array<i64: 1>, scalar_prefetch = 0 : i64, scratch_operands = 0 : i64, tpu.core_type = #tpu.core_type<tc>, window_params = [{transform_indices = @transform_0, window_bounds = array<i64: 1024, 32>}, {pipeline_mode = #tpu.pipeline_mode<synchronous>, transform_indices = @transform_1, window_bounds = array<i64: 32, 128>}, {pipeline_mode = #tpu.pipeline_mode<synchronous>, transform_indices = @transform_2, window_bounds = array<i64: 1, 128>}, {pipeline_mode = #tpu.pipeline_mode<synchronous>, transform_indices = @transform_3, window_bounds = array<i64: 128, 1>}, {transform_indices = @transform_4, window_bounds = array<i64: 1>}, {transform_indices = @transform_5, window_bounds = array<i64: 8, 128>}]} {
    %c0 = arith.constant 0 : index
    %c0_0 = arith.constant 0 : index
    %0 = vector.load %arg1[%c0, %c0_0] : memref<1024x32xf32, #tpu.memory_space<vmem>>, vector<1024x32xf32>
    %1 = arith.truncf %0 : vector<1024x32xf32> to vector<1024x32xbf16>
    %c0_1 = arith.constant 0 : index
    %c0_2 = arith.constant 0 : index
    %2 = vector.load %arg2[%c0_1, %c0_2] : memref<32x128xf32, #tpu.memory_space<vmem>>, vector<32x128xf32>
    %3 = arith.truncf %2 : vector<32x128xf32> to vector<32x128xbf16>
    %cst = arith.constant dense<0.000000e+00> : vector<1024x128xf32>
    %4 = tpu.matmul %1, %3, %cst {dimension_numbers = #tpu.dot_dimension_numbers<[1], [0], [0], [1], [0, 0, 1, 1], [], []>} : vector<1024x32xbf16>, vector<32x128xbf16>, vector<1024x128xf32> -> vector<1024x128xf32>
    %c0_3 = arith.constant 0 : index
    %c0_4 = arith.constant 0 : index
    %5 = vector.load %arg3[%c0_3, %c0_4] : memref<1x128xf32, #tpu.memory_space<vmem>>, vector<1x128xf32>
    %6 = vector.broadcast %5 : vector<1x128xf32> to vector<1024x128xf32>
    %7 = arith.addf %4, %6 : vector<1024x128xf32>
    %cst_5 = arith.constant 0.000000e+00 : f32
    %8 = vector.broadcast %cst_5 : f32 to vector<1024x128xf32>
    %9 = arith.maximumf %7, %8 : vector<1024x128xf32>
    %c0_6 = arith.constant 0 : index
    %c0_7 = arith.constant 0 : index
    %10 = vector.load %arg4[%c0_6, %c0_7] : memref<128x1xf32, #tpu.memory_space<vmem>>, vector<128x1xf32>
    %cst_8 = arith.constant dense<0.000000e+00> : vector<1024x1xf32>
    %11 = tpu.matmul %9, %10, %cst_8 {dimension_numbers = #tpu.dot_dimension_numbers<[1], [0], [0], [1], [0, 0, 1, 1], [], []>} : vector<1024x128xf32>, vector<128x1xf32>, vector<1024x1xf32> -> vector<1024x1xf32>
    %12 = vector.shape_cast %11 : vector<1024x1xf32> to vector<8x128xf32>
    %c0_9 = arith.constant 0 : index
    %13 = memref.load %arg5[%c0_9] : memref<1xf32, #tpu.memory_space<smem>>
    %14 = vector.broadcast %13 : f32 to vector<8x128xf32>
    %15 = arith.addf %12, %14 : vector<8x128xf32>
    %cst_10 = arith.constant 0.000000e+00 : f32
    %16 = vector.broadcast %cst_10 : f32 to vector<8x128xf32>
    %17 = arith.subf %16, %15 : vector<8x128xf32>
    %18 = math.exp %17 : vector<8x128xf32>
    %cst_11 = arith.constant 1.000000e+00 : f32
    %19 = vector.broadcast %cst_11 : f32 to vector<8x128xf32>
    %20 = arith.addf %19, %18 : vector<8x128xf32>
    %21 = tpu.reciprocal %20 {approx = true} : vector<8x128xf32> -> vector<8x128xf32>
    %c0_12 = arith.constant 0 : index
    %c0_13 = arith.constant 0 : index
    %22 = vector.load %arg6[%c0_12, %c0_13] : memref<8x128xf32, #tpu.memory_space<vmem>>, vector<8x128xf32>
    tpu.vector_store %arg6[%c0_12, %c0_13], %21 {strides = array<i32>} : memref<8x128xf32, #tpu.memory_space<vmem>>, vector<8x128xf32>,
    return
  }
  func.func @transform_0(%arg0: i32) -> (i32, i32) {
    %c0_i32 = arith.constant 0 : i32
    %c0_i32_0 = arith.constant 0 : i32
    return %arg0, %c0_i32 : i32, i32
  }
  func.func @transform_1(%arg0: i32) -> (i32, i32) {
    %c0_i32 = arith.constant 0 : i32
    %c0_i32_0 = arith.constant 0 : i32
    %c0_i32_1 = arith.constant 0 : i32
    return %c0_i32, %c0_i32_0 : i32, i32
  }
  func.func @transform_2(%arg0: i32) -> (i32, i32) {
    %c0_i32 = arith.constant 0 : i32
    %c0_i32_0 = arith.constant 0 : i32
    %c0_i32_1 = arith.constant 0 : i32
    return %c0_i32, %c0_i32_0 : i32, i32
  }
  func.func @transform_3(%arg0: i32) -> (i32, i32) {
    %c0_i32 = arith.constant 0 : i32
    %c0_i32_0 = arith.constant 0 : i32
    %c0_i32_1 = arith.constant 0 : i32
    return %c0_i32, %c0_i32_0 : i32, i32
  }
  func.func @transform_4(%arg0: i32) -> i32 {
    %c0_i32 = arith.constant 0 : i32
    %c0_i32_0 = arith.constant 0 : i32
    return %c0_i32 : i32
  }
  func.func @transform_5(%arg0: i32) -> (i32, i32) {
    %c0_i32 = arith.constant 0 : i32
    %c0_i32_0 = arith.constant 0 : i32
    return %arg0, %c0_i32 : i32, i32
  }
}

</mosaic_0001>

<llo_original>
// kernel: tpu_custom_call.1
$region0: #{tpu_custom_call.1}
  #allocation0 [shape = 'u32[]', space=smem, size = 0x4, offset = 0x4, fixed_abs, tag = 'smem constant byte address 0x4 - core index']
  #allocation1 [shape = 'u32[144,128]{1,0:T(1,128)}', space=vmem, size = 0x12000, scoped, tag = 'internal scratch']
  #allocation2 [shape = 'f32[1]{0:T(128)S(6)}', space=smem, size = 0x200, scoped, tag = 'scoped memory for tpu_custom_call.1']
  %s0 = inlined_call_operand.vmem [shape: f32[64,32], index: 0, kind: input, shape index: {}]
  %s1 = inlined_call_operand.vmem [shape: f32[32,128], index: 1, kind: input, shape index: {}]
  %s2 = inlined_call_operand.vmem [shape: f32[1,128], index: 2, kind: input, shape index: {}]
  %s3 = inlined_call_operand.vmem [shape: f32[128,1], index: 3, kind: input, shape index: {}]
  %s4 = inlined_call_operand.<no memory space> [shape: f32[1], index: 4, kind: input, shape index: {}]
  %s5 = inlined_call_operand.hbm [shape: f32[8,128], index: 5, kind: output, shape index: {}]
  %s6 = sld [smem:[#allocation0]]
  $region30: #{tpu_custom_call.1} parent=0
    _
  %s8 = ssub.s32 1, %s6
  %s9 = scalar_select 0, %s8, %s6
  %10 = sst [smem:[#allocation2]] %s4
  $region1: #{tpu_custom_call.1} parent=0
    #allocation3 [shape = 'u8[4096]{0}', space=vmem, size = 0x1000, scoped, tag = 'output window, operand 0, single buffered']
    #allocation4 [shape = 's32[1]{0}', space=sflag, size = 0x4, scoped, tag = 'scoped memory for tpu_custom_call.1']
    %11 = vsyncpa [#allocation4], 0
    // Predicated region
    $region2: #{tpu_custom_call.1} parent=1 // pred_check
      _
    $region3: #{tpu_custom_call.1} parent=1 // pred_check_branch
      %13 = sbr.rel (0) target = $region5
    $region4: #{tpu_custom_call.1} parent=1 // pred_region
      _
    $region5: #{tpu_custom_call.1} parent=1 // pred_fallthru
      _
    // Predicated region
    $region6: #{tpu_custom_call.1} parent=1 // pred_check
      _
    $region7: #{tpu_custom_call.1} parent=1 // pred_check_branch
      %15 = sbr.rel (0) target = $region9
    $region8: #{tpu_custom_call.1} parent=1 // pred_region
      _
    $region9: #{tpu_custom_call.1} parent=1 // pred_fallthru
      _
    // Predicated region
    $region10: #{tpu_custom_call.1} parent=1 // pred_check
      _
    $region11: #{tpu_custom_call.1} parent=1 // pred_check_branch
      %17 = sbr.rel (0) target = $region13
    $region12: #{tpu_custom_call.1} parent=1 // pred_region
      _
    $region13: #{tpu_custom_call.1} parent=1 // pred_fallthru
      _
    // Predicated region
    $region14: #{tpu_custom_call.1} parent=1 // pred_check
      _
    $region15: #{tpu_custom_call.1} parent=1 // pred_check_branch
      %19 = sbr.rel (0) target = $region17
    $region16: #{tpu_custom_call.1} parent=1 // pred_region
      _
    $region17: #{tpu_custom_call.1} parent=1 // pred_fallthru
      _
    // Predicated region
    $region18: #{tpu_custom_call.1} parent=1 // pred_check
      _
    $region19: #{tpu_custom_call.1} parent=1 // pred_check_branch
      %21 = sbr.rel (0) target = $region21
    $region20: #{tpu_custom_call.1} parent=1 // pred_region
      _
    $region21: #{tpu_custom_call.1} parent=1 // pred_fallthru
      _
    %v23 = vld [vmem:[%s0] sm:$0xff]
    %v24 = vld [vmem:[%s0 + $0x8] sm:$0xff]
    %v25 = vld [vmem:[%s0 + $0x10] sm:$0xff]
    %v26 = vld [vmem:[%s0 + $0x18] sm:$0xff]
    %v27 = vld [vmem:[%s0 + $0x20] sm:$0xff]
    %v28 = vld [vmem:[%s0 + $0x28] sm:$0xff]
    %v29 = vld [vmem:[%s0 + $0x30] sm:$0xff]
    %v30 = vld [vmem:[%s0 + $0x38] sm:$0xff]
    %v31 = vld [vmem:[%s0 + $0x40] sm:$0xff]
    %v32 = vld [vmem:[%s0 + $0x48] sm:$0xff]
    %v33 = vld [vmem:[%s0 + $0x50] sm:$0xff]
    %v34 = vld [vmem:[%s0 + $0x58] sm:$0xff]
    %v35 = vld [vmem:[%s0 + $0x60] sm:$0xff]
    %v36 = vld [vmem:[%s0 + $0x68] sm:$0xff]
    %v37 = vld [vmem:[%s0 + $0x70] sm:$0xff]
    %v38 = vld [vmem:[%s0 + $0x78] sm:$0xff]
    %v39 = vld [vmem:[%s0 + $0x80] sm:$0xff]
    %v40 = vld [vmem:[%s0 + $0x88] sm:$0xff]
    %v41 = vld [vmem:[%s0 + $0x90] sm:$0xff]
    %v42 = vld [vmem:[%s0 + $0x98] sm:$0xff]
    %v43 = vld [vmem:[%s0 + $0xa0] sm:$0xff]
    %v44 = vld [vmem:[%s0 + $0xa8] sm:$0xff]
    %v45 = vld [vmem:[%s0 + $0xb0] sm:$0xff]
    %v46 = vld [vmem:[%s0 + $0xb8] sm:$0xff]
    %v47 = vld [vmem:[%s0 + $0xc0] sm:$0xff]
    %v48 = vld [vmem:[%s0 + $0xc8] sm:$0xff]
    %v49 = vld [vmem:[%s0 + $0xd0] sm:$0xff]
    %v50 = vld [vmem:[%s0 + $0xd8] sm:$0xff]
    %v51 = vld [vmem:[%s0 + $0xe0] sm:$0xff]
    %v52 = vld [vmem:[%s0 + $0xe8] sm:$0xff]
    %v53 = vld [vmem:[%s0 + $0xf0] sm:$0xff]
    %v54 = vld [vmem:[%s0 + $0xf8] sm:$0xff]
    %v55 = vld [vmem:[%s0 + $0x100] sm:$0xff]
    %v56 = vld [vmem:[%s0 + $0x108] sm:$0xff]
    %v57 = vld [vmem:[%s0 + $0x110] sm:$0xff]
    %v58 = vld [vmem:[%s0 + $0x118] sm:$0xff]
    %v59 = vld [vmem:[%s0 + $0x120] sm:$0xff]
    %v60 = vld [vmem:[%s0 + $0x128] sm:$0xff]
    %v61 = vld [vmem:[%s0 + $0x130] sm:$0xff]
    %v62 = vld [vmem:[%s0 + $0x138] sm:$0xff]
    %v63 = vld [vmem:[%s0 + $0x140] sm:$0xff]
    %v64 = vld [vmem:[%s0 + $0x148] sm:$0xff]
    %v65 = vld [vmem:[%s0 + $0x150] sm:$0xff]
    %v66 = vld [vmem:[%s0 + $0x158] sm:$0xff]
    %v67 = vld [vmem:[%s0 + $0x160] sm:$0xff]
    %v68 = vld [vmem:[%s0 + $0x168] sm:$0xff]
    %v69 = vld [vmem:[%s0 + $0x170] sm:$0xff]
    %v70 = vld [vmem:[%s0 + $0x178] sm:$0xff]
    %v71 = vld [vmem:[%s0 + $0x180] sm:$0xff]
    %v72 = vld [vmem:[%s0 + $0x188] sm:$0xff]
    %v73 = vld [vmem:[%s0 + $0x190] sm:$0xff]
    %v74 = vld [vmem:[%s0 + $0x198] sm:$0xff]
    %v75 = vld [vmem:[%s0 + $0x1a0] sm:$0xff]
    %v76 = vld [vmem:[%s0 + $0x1a8] sm:$0xff]
    %v77 = vld [vmem:[%s0 + $0x1b0] sm:$0xff]
    %v78 = vld [vmem:[%s0 + $0x1b8] sm:$0xff]
    %v79 = vld [vmem:[%s0 + $0x1c0] sm:$0xff]
    %v80 = vld [vmem:[%s0 + $0x1c8] sm:$0xff]
    %v81 = vld [vmem:[%s0 + $0x1d0] sm:$0xff]
    %v82 = vld [vmem:[%s0 + $0x1d8] sm:$0xff]
    %v83 = vld [vmem:[%s0 + $0x1e0] sm:$0xff]
    %v84 = vld [vmem:[%s0 + $0x1e8] sm:$0xff]
    %v85 = vld [vmem:[%s0 + $0x1f0] sm:$0xff]
    %v86 = vld [vmem:[%s0 + $0x1f8] sm:$0xff]
    %v87 = vld [vmem:[%s0 + $0x200] sm:$0xff]
    %v88 = vld [vmem:[%s0 + $0x208] sm:$0xff]
    %v89 = vld [vmem:[%s0 + $0x210] sm:$0xff]
    %v90 = vld [vmem:[%s0 + $0x218] sm:$0xff]
    %v91 = vld [vmem:[%s0 + $0x220] sm:$0xff]
    %v92 = vld [vmem:[%s0 + $0x228] sm:$0xff]
    %v93 = vld [vmem:[%s0 + $0x230] sm:$0xff]
    %v94 = vld [vmem:[%s0 + $0x238] sm:$0xff]
    %v95 = vld [vmem:[%s0 + $0x240] sm:$0xff]
    %v96 = vld [vmem:[%s0 + $0x248] sm:$0xff]
    %v97 = vld [vmem:[%s0 + $0x250] sm:$0xff]
    %v98 = vld [vmem:[%s0 + $0x258] sm:$0xff]
    %v99 = vld [vmem:[%s0 + $0x260] sm:$0xff]
    %v100 = vld [vmem:[%s0 + $0x268] sm:$0xff]
    %v101 = vld [vmem:[%s0 + $0x270] sm:$0xff]
    %v102 = vld [vmem:[%s0 + $0x278] sm:$0xff]
    %v103 = vld [vmem:[%s0 + $0x280] sm:$0xff]
    %v104 = vld [vmem:[%s0 + $0x288] sm:$0xff]
    %v105 = vld [vmem:[%s0 + $0x290] sm:$0xff]
    %v106 = vld [vmem:[%s0 + $0x298] sm:$0xff]
    %v107 = vld [vmem:[%s0 + $0x2a0] sm:$0xff]
    %v108 = vld [vmem:[%s0 + $0x2a8] sm:$0xff]
    %v109 = vld [vmem:[%s0 + $0x2b0] sm:$0xff]
    %v110 = vld [vmem:[%s0 + $0x2b8] sm:$0xff]
    %v111 = vld [vmem:[%s0 + $0x2c0] sm:$0xff]
    %v112 = vld [vmem:[%s0 + $0x2c8] sm:$0xff]
    %v113 = vld [vmem:[%s0 + $0x2d0] sm:$0xff]
    %v114 = vld [vmem:[%s0 + $0x2d8] sm:$0xff]
    %v115 = vld [vmem:[%s0 + $0x2e0] sm:$0xff]
    %v116 = vld [vmem:[%s0 + $0x2e8] sm:$0xff]
    %v117 = vld [vmem:[%s0 + $0x2f0] sm:$0xff]
    %v118 = vld [vmem:[%s0 + $0x2f8] sm:$0xff]
    %v119 = vld [vmem:[%s0 + $0x300] sm:$0xff]
    %v120 = vld [vmem:[%s0 + $0x308] sm:$0xff]
    %v121 = vld [vmem:[%s0 + $0x310] sm:$0xff]
    %v122 = vld [vmem:[%s0 + $0x318] sm:$0xff]
    %v123 = vld [vmem:[%s0 + $0x320] sm:$0xff]
    %v124 = vld [vmem:[%s0 + $0x328] sm:$0xff]
    %v125 = vld [vmem:[%s0 + $0x330] sm:$0xff]
    %v126 = vld [vmem:[%s0 + $0x338] sm:$0xff]
    %v127 = vld [vmem:[%s0 + $0x340] sm:$0xff]
    %v128 = vld [vmem:[%s0 + $0x348] sm:$0xff]
    %v129 = vld [vmem:[%s0 + $0x350] sm:$0xff]
    %v130 = vld [vmem:[%s0 + $0x358] sm:$0xff]
    %v131 = vld [vmem:[%s0 + $0x360] sm:$0xff]
    %v132 = vld [vmem:[%s0 + $0x368] sm:$0xff]
    %v133 = vld [vmem:[%s0 + $0x370] sm:$0xff]
    %v134 = vld [vmem:[%s0 + $0x378] sm:$0xff]
    %v135 = vld [vmem:[%s0 + $0x380] sm:$0xff]
    %v136 = vld [vmem:[%s0 + $0x388] sm:$0xff]
    %v137 = vld [vmem:[%s0 + $0x390] sm:$0xff]
    %v138 = vld [vmem:[%s0 + $0x398] sm:$0xff]
    %v139 = vld [vmem:[%s0 + $0x3a0] sm:$0xff]
    %v140 = vld [vmem:[%s0 + $0x3a8] sm:$0xff]
    %v141 = vld [vmem:[%s0 + $0x3b0] sm:$0xff]
    %v142 = vld [vmem:[%s0 + $0x3b8] sm:$0xff]
    %v143 = vld [vmem:[%s0 + $0x3c0] sm:$0xff]
    %v144 = vld [vmem:[%s0 + $0x3c8] sm:$0xff]
    %v145 = vld [vmem:[%s0 + $0x3d0] sm:$0xff]
    %v146 = vld [vmem:[%s0 + $0x3d8] sm:$0xff]
    %v147 = vld [vmem:[%s0 + $0x3e0] sm:$0xff]
    %v148 = vld [vmem:[%s0 + $0x3e8] sm:$0xff]
    %v149 = vld [vmem:[%s0 + $0x3f0] sm:$0xff]
    %v150 = vld [vmem:[%s0 + $0x3f8] sm:$0xff]
    %v151 = vpack.c.bf16 %v24, %v23
    %v152 = vpack.c.bf16 %v26, %v25
    %v153 = vpack.c.bf16 %v28, %v27
    %v154 = vpack.c.bf16 %v30, %v29
    %v155 = vpack.c.bf16 %v32, %v31
    %v156 = vpack.c.bf16 %v34, %v33
    %v157 = vpack.c.bf16 %v36, %v35
    %v158 = vpack.c.bf16 %v38, %v37
    %v159 = vpack.c.bf16 %v40, %v39
    %v160 = vpack.c.bf16 %v42, %v41
    %v161 = vpack.c.bf16 %v44, %v43
    %v162 = vpack.c.bf16 %v46, %v45
    %v163 = vpack.c.bf16 %v48, %v47
    %v164 = vpack.c.bf16 %v50, %v49
    %v165 = vpack.c.bf16 %v52, %v51
    %v166 = vpack.c.bf16 %v54, %v53
    %v167 = vpack.c.bf16 %v56, %v55
    %v168 = vpack.c.bf16 %v58, %v57
    %v169 = vpack.c.bf16 %v60, %v59
    %v170 = vpack.c.bf16 %v62, %v61
    %v171 = vpack.c.bf16 %v64, %v63
    %v172 = vpack.c.bf16 %v66, %v65
    %v173 = vpack.c.bf16 %v68, %v67
    %v174 = vpack.c.bf16 %v70, %v69
    %v175 = vpack.c.bf16 %v72, %v71
    %v176 = vpack.c.bf16 %v74, %v73
    %v177 = vpack.c.bf16 %v76, %v75
    %v178 = vpack.c.bf16 %v78, %v77
    %v179 = vpack.c.bf16 %v80, %v79
    %v180 = vpack.c.bf16 %v82, %v81
    %v181 = vpack.c.bf16 %v84, %v83
    %v182 = vpack.c.bf16 %v86, %v85
    %v183 = vpack.c.bf16 %v88, %v87
    %v184 = vpack.c.bf16 %v90, %v89
    %v185 = vpack.c.bf16 %v92, %v91
    %v186 = vpack.c.bf16 %v94, %v93
    %v187 = vpack.c.bf16 %v96, %v95
    %v188 = vpack.c.bf16 %v98, %v97
    %v189 = vpack.c.bf16 %v100, %v99
    %v190 = vpack.c.bf16 %v102, %v101
    %v191 = vpack.c.bf16 %v104, %v103
    %v192 = vpack.c.bf16 %v106, %v105
    %v193 = vpack.c.bf16 %v108, %v107
    %v194 = vpack.c.bf16 %v110, %v109
    %v195 = vpack.c.bf16 %v112, %v111
    %v196 = vpack.c.bf16 %v114, %v113
    %v197 = vpack.c.bf16 %v116, %v115
    %v198 = vpack.c.bf16 %v118, %v117
    %v199 = vpack.c.bf16 %v120, %v119
    %v200 = vpack.c.bf16 %v122, %v121
    %v201 = vpack.c.bf16 %v124, %v123
    %v202 = vpack.c.bf16 %v126, %v125
    %v203 = vpack.c.bf16 %v128, %v127
    %v204 = vpack.c.bf16 %v130, %v129
    %v205 = vpack.c.bf16 %v132, %v131
    %v206 = vpack.c.bf16 %v134, %v133
    %v207 = vpack.c.bf16 %v136, %v135
    %v208 = vpack.c.bf16 %v138, %v137
    %v209 = vpack.c.bf16 %v140, %v139
    %v210 = vpack.c.bf16 %v142, %v141
    %v211 = vpack.c.bf16 %v144, %v143
    %v212 = vpack.c.bf16 %v146, %v145
    %v213 = vpack.c.bf16 %v148, %v147
    %v214 = vpack.c.bf16 %v150, %v149
    %v215 = vld [vmem:[%s1] sm:$0xff]
    %v216 = vld [vmem:[%s1 + $0x8] sm:$0xff]
    %v217 = vld [vmem:[%s1 + $0x10] sm:$0xff]
    %v218 = vld [vmem:[%s1 + $0x18] sm:$0xff]
    %v219 = vpack.c.bf16 %v216, %v215
    %v220 = vpack.c.bf16 %v218, %v217
    %v221 = vld [vmem:[%s2] sm:$0x1]
    %v223 = vlaneseq
    %v224 = vshrl.u32 %v223, 7
    %v225 = vsub.s32 0, %v224
    %v226 = vrot.slane %v221, %v225
    %vm228 = vcmask 261120
    %v230 = vsel %vm228, %v151, 0
    %v233 = vsel %vm228, %v152, 0
    %v236 = vsel %vm228, %v153, 0
    %v239 = vsel %vm228, %v154, 0
    %v242 = vsel %vm228, %v155, 0
    %v245 = vsel %vm228, %v156, 0
    %v248 = vsel %vm228, %v157, 0
    %v251 = vsel %vm228, %v158, 0
    %v254 = vsel %vm228, %v159, 0
    %v257 = vsel %vm228, %v160, 0
    %v260 = vsel %vm228, %v161, 0
    %v263 = vsel %vm228, %v162, 0
    %v266 = vsel %vm228, %v163, 0
    %v269 = vsel %vm228, %v164, 0
    %v272 = vsel %vm228, %v165, 0
    %v275 = vsel %vm228, %v166, 0
    %v278 = vsel %vm228, %v167, 0
    %v281 = vsel %vm228, %v168, 0
    %v284 = vsel %vm228, %v169, 0
    %v287 = vsel %vm228, %v170, 0
    %v290 = vsel %vm228, %v171, 0
    %v293 = vsel %vm228, %v172, 0
    %v296 = vsel %vm228, %v173, 0
    %v299 = vsel %vm228, %v174, 0
    %v302 = vsel %vm228, %v175, 0
    %v305 = vsel %vm228, %v176, 0
    %v308 = vsel %vm228, %v177, 0
    %v311 = vsel %vm228, %v178, 0
    %v314 = vsel %vm228, %v179, 0
    %v317 = vsel %vm228, %v180, 0
    %v320 = vsel %vm228, %v181, 0
    %v323 = vsel %vm228, %v182, 0
    %v326 = vsel %vm228, %v183, 0
    %v329 = vsel %vm228, %v184, 0
    %v332 = vsel %vm228, %v185, 0
    %v335 = vsel %vm228, %v186, 0
    %v338 = vsel %vm228, %v187, 0
    %v341 = vsel %vm228, %v188, 0
    %v344 = vsel %vm228, %v189, 0
    %v347 = vsel %vm228, %v190, 0
    %v350 = vsel %vm228, %v191, 0
    %v353 = vsel %vm228, %v192, 0
    %v356 = vsel %vm228, %v193, 0
    %v359 = vsel %vm228, %v194, 0
    %v362 = vsel %vm228, %v195, 0
    %v365 = vsel %vm228, %v196, 0
    %v368 = vsel %vm228, %v197, 0
    %v371 = vsel %vm228, %v198, 0
    %v374 = vsel %vm228, %v199, 0
    %v377 = vsel %vm228, %v200, 0
    %v380 = vsel %vm228, %v201, 0
    %v383 = vsel %vm228, %v202, 0
    %v386 = vsel %vm228, %v203, 0
    %v389 = vsel %vm228, %v204, 0
    %v392 = vsel %vm228, %v205, 0
    %v395 = vsel %vm228, %v206, 0
    %v398 = vsel %vm228, %v207, 0
    %v401 = vsel %vm228, %v208, 0
    %v404 = vsel %vm228, %v209, 0
    %v407 = vsel %vm228, %v210, 0
    %v410 = vsel %vm228, %v211, 0
    %v413 = vsel %vm228, %v212, 0
    %v416 = vsel %vm228, %v213, 0
    %v419 = vsel %vm228, %v214, 0
    %421 = vmatprep.subr.bf16.mxu0 0
    %422 = vmatpush1.bf16.msra.mxu0 %v219
    %423 = vmatprep.subr.bf16.mxu0 0
    %424 = vmatpush1.bf16.msra.mxu0 %v220
    %425 = vmatprep.subr.bf16.mxu0 0
    %426 = vmatpush1.bf16.msra.mxu0 0
    %427 = vmatprep.subr.bf16.mxu0 0
    %428 = vmatpush1.bf16.msra.mxu0 0
    %429 = vmatprep.subr.bf16.mxu0 0
    %430 = vmatpush1.bf16.msra.mxu0 0
    %431 = vmatprep.subr.bf16.mxu0 0
    %432 = vmatpush1.bf16.msra.mxu0 0
    %433 = vmatprep.subr.bf16.mxu0 0
    %434 = vmatpush1.bf16.msra.mxu0 0
    %435 = vmatprep.subr.bf16.mxu0 0
    %436 = vmatpush1.bf16.msra.mxu0 0
    %437 = vmatprep.subr.bf16.mxu0 0
    %438 = vmatpush1.bf16.msra.mxu0 0
    %439 = vmatprep.subr.bf16.mxu0 0
    %440 = vmatpush1.bf16.msra.mxu0 0
    %441 = vmatprep.subr.bf16.mxu0 0
    %442 = vmatpush1.bf16.msra.mxu0 0
    %443 = vmatprep.subr.bf16.mxu0 0
    %444 = vmatpush1.bf16.msra.mxu0 0
    %445 = vmatprep.subr.bf16.mxu0 0
    %446 = vmatpush1.bf16.msra.mxu0 0
    %447 = vmatprep.subr.bf16.mxu0 0
    %448 = vmatpush1.bf16.msra.mxu0 0
    %449 = vmatprep.subr.bf16.mxu0 0
    %450 = vmatpush1.bf16.msra.mxu0 0
    %451 = vmatprep.subr.bf16.mxu0 0
    %452 = vmatpush1.bf16.msra.mxu0 0
    %453 = vmatprep.mubr.bf16.mxu0 0
    %454 = vmatmul.mubr.bf16.gmra.mrb[0].mxu0 %v230
    %v455 = vpop.f32.mrb[0].mxu0
    %v456 = vadd.f32 %v226, %v455
    %v457 = vpop.f32.mrb[0].mxu0
    %v458 = vpop.f32.mrb[0].mxu0
    %v459 = vadd.f32 %v226, %v458
    %v460 = vpop.f32.mrb[0].mxu0
    %461 = vmatprep.mubr.bf16.mxu0 0
    %462 = vmatmul.mubr.bf16.gmra.mrb[0].mxu0 %v233
    %v463 = vpop.f32.mrb[0].mxu0
    %v464 = vadd.f32 %v226, %v463
    %v465 = vpop.f32.mrb[0].mxu0
    %v466 = vpop.f32.mrb[0].mxu0
    %v467 = vadd.f32 %v226, %v466
    %v468 = vpop.f32.mrb[0].mxu0
    %469 = vmatprep.mubr.bf16.mxu0 0
    %470 = vmatmul.mubr.bf16.gmra.mrb[0].mxu0 %v236
    %v471 = vpop.f32.mrb[0].mxu0
    %v472 = vadd.f32 %v226, %v471
    %v473 = vpop.f32.mrb[0].mxu0
    %v474 = vpop.f32.mrb[0].mxu0
    %v475 = vadd.f32 %v226, %v474
    %v476 = vpop.f32.mrb[0].mxu0
    %477 = vmatprep.mubr.bf16.mxu0 0
    %478 = vmatmul.mubr.bf16.gmra.mrb[0].mxu0 %v239
    %v479 = vpop.f32.mrb[0].mxu0
    %v480 = vadd.f32 %v226, %v479
    %v481 = vpop.f32.mrb[0].mxu0
    %v482 = vpop.f32.mrb[0].mxu0
    %v483 = vadd.f32 %v226, %v482
    %v484 = vpop.f32.mrb[0].mxu0
    %485 = vmatprep.mubr.bf16.mxu0 0
    %486 = vmatmul.mubr.bf16.gmra.mrb[0].mxu0 %v242
    %v487 = vpop.f32.mrb[0].mxu0
    %v488 = vadd.f32 %v226, %v487
    %v489 = vpop.f32.mrb[0].mxu0
    %v490 = vpop.f32.mrb[0].mxu0
    %v491 = vadd.f32 %v226, %v490
    %v492 = vpop.f32.mrb[0].mxu0
    %493 = vmatprep.mubr.bf16.mxu0 0
    %494 = vmatmul.mubr.bf16.gmra.mrb[0].mxu0 %v245
    %v495 = vpop.f32.mrb[0].mxu0
    %v496 = vadd.f32 %v226, %v495
    %v497 = vpop.f32.mrb[0].mxu0
    %v498 = vpop.f32.mrb[0].mxu0
    %v499 = vadd.f32 %v226, %v498
    %v500 = vpop.f32.mrb[0].mxu0
    %501 = vmatprep.mubr.bf16.mxu0 0
    %502 = vmatmul.mubr.bf16.gmra.mrb[0].mxu0 %v248
    %v503 = vpop.f32.mrb[0].mxu0
    %v504 = vadd.f32 %v226, %v503
    %v505 = vpop.f32.mrb[0].mxu0
    %v506 = vpop.f32.mrb[0].mxu0
    %v507 = vadd.f32 %v226, %v506
    %v508 = vpop.f32.mrb[0].mxu0
    %509 = vmatprep.mubr.bf16.mxu0 0
    %510 = vmatmul.mubr.bf16.gmra.mrb[0].mxu0 %v251
    %v511 = vpop.f32.mrb[0].mxu0
    %v512 = vadd.f32 %v226, %v511
    %v513 = vpop.f32.mrb[0].mxu0
    %v514 = vpop.f32.mrb[0].mxu0
    %v515 = vadd.f32 %v226, %v514
    %v516 = vpop.f32.mrb[0].mxu0
    %517 = vmatprep.mubr.bf16.mxu0 0
    %518 = vmatmul.mubr.bf16.gmra.mrb[0].mxu0 %v254
    %v519 = vpop.f32.mrb[0].mxu0
    %v520 = vadd.f32 %v226, %v519
    %v521 = vpop.f32.mrb[0].mxu0
    %v522 = vpop.f32.mrb[0].mxu0
    %v523 = vadd.f32 %v226, %v522
    %v524 = vpop.f32.mrb[0].mxu0
    %525 = vmatprep.mubr.bf16.mxu0 0
    %526 = vmatmul.mubr.bf16.gmra.mrb[0].mxu0 %v257
    %v527 = vpop.f32.mrb[0].mxu0
    %v528 = vadd.f32 %v226, %v527
    %v529 = vpop.f32.mrb[0].mxu0
    %v530 = vpop.f32.mrb[0].mxu0
    %v531 = vadd.f32 %v226, %v530
    %v532 = vpop.f32.mrb[0].mxu0
    %533 = vmatprep.mubr.bf16.mxu0 0
    %534 = vmatmul.mubr.bf16.gmra.mrb[0].mxu0 %v260
    %v535 = vpop.f32.mrb[0].mxu0
    %v536 = vadd.f32 %v226, %v535
    %v537 = vpop.f32.mrb[0].mxu0
    %v538 = vpop.f32.mrb[0].mxu0
    %v539 = vadd.f32 %v226, %v538
    %v540 = vpop.f32.mrb[0].mxu0
    %541 = vmatprep.mubr.bf16.mxu0 0
    %542 = vmatmul.mubr.bf16.gmra.mrb[0].mxu0 %v263
    %v543 = vpop.f32.mrb[0].mxu0
    %v544 = vadd.f32 %v226, %v543
    %v545 = vpop.f32.mrb[0].mxu0
    %v546 = vpop.f32.mrb[0].mxu0
    %v547 = vadd.f32 %v226, %v546
    %v548 = vpop.f32.mrb[0].mxu0
    %549 = vmatprep.mubr.bf16.mxu0 0
    %550 = vmatmul.mubr.bf16.gmra.mrb[0].mxu0 %v266
    %v551 = vpop.f32.mrb[0].mxu0
    %v552 = vadd.f32 %v226, %v551
    %v553 = vpop.f32.mrb[0].mxu0
    %v554 = vpop.f32.mrb[0].mxu0
    %v555 = vadd.f32 %v226, %v554
    %v556 = vpop.f32.mrb[0].mxu0
    %557 = vmatprep.mubr.bf16.mxu0 0
    %558 = vmatmul.mubr.bf16.gmra.mrb[0].mxu0 %v269
    %v559 = vpop.f32.mrb[0].mxu0
    %v560 = vadd.f32 %v226, %v559
    %v561 = vpop.f32.mrb[0].mxu0
    %v562 = vpop.f32.mrb[0].mxu0
    %v563 = vadd.f32 %v226, %v562
    %v564 = vpop.f32.mrb[0].mxu0
    %565 = vmatprep.mubr.bf16.mxu0 0
    %566 = vmatmul.mubr.bf16.gmra.mrb[0].mxu0 %v272
    %v567 = vpop.f32.mrb[0].mxu0
    %v568 = vadd.f32 %v226, %v567
    %v569 = vpop.f32.mrb[0].mxu0
    %v570 = vpop.f32.mrb[0].mxu0
    %v571 = vadd.f32 %v226, %v570
    %v572 = vpop.f32.mrb[0].mxu0
    %573 = vmatprep.mubr.bf16.mxu0 0
    %574 = vmatmul.mubr.bf16.gmra.mrb[0].mxu0 %v275
    %v575 = vpop.f32.mrb[0].mxu0
    %v576 = vadd.f32 %v226, %v575
    %v577 = vpop.f32.mrb[0].mxu0
    %v578 = vpop.f32.mrb[0].mxu0
    %v579 = vadd.f32 %v226, %v578
    %v580 = vpop.f32.mrb[0].mxu0
    %581 = vmatprep.mubr.bf16.mxu0 0
    %582 = vmatmul.mubr.bf16.gmra.mrb[0].mxu0 %v278
    %v583 = vpop.f32.mrb[0].mxu0
    %v584 = vadd.f32 %v226, %v583
    %v585 = vpop.f32.mrb[0].mxu0
    %v586 = vpop.f32.mrb[0].mxu0
    %v587 = vadd.f32 %v226, %v586
    %v588 = vpop.f32.mrb[0].mxu0
    %589 = vmatprep.mubr.bf16.mxu0 0
    %590 = vmatmul.mubr.bf16.gmra.mrb[0].mxu0 %v281
    %v591 = vpop.f32.mrb[0].mxu0
    %v592 = vadd.f32 %v226, %v591
    %v593 = vpop.f32.mrb[0].mxu0
    %v594 = vpop.f32.mrb[0].mxu0
    %v595 = vadd.f32 %v226, %v594
    %v596 = vpop.f32.mrb[0].mxu0
    %597 = vmatprep.mubr.bf16.mxu0 0
    %598 = vmatmul.mubr.bf16.gmra.mrb[0].mxu0 %v284
    %v599 = vpop.f32.mrb[0].mxu0
    %v600 = vadd.f32 %v226, %v599
    %v601 = vpop.f32.mrb[0].mxu0
    %v602 = vpop.f32.mrb[0].mxu0
    %v603 = vadd.f32 %v226, %v602
    %v604 = vpop.f32.mrb[0].mxu0
    %605 = vmatprep.mubr.bf16.mxu0 0
    %606 = vmatmul.mubr.bf16.gmra.mrb[0].mxu0 %v287
    %v607 = vpop.f32.mrb[0].mxu0
    %v608 = vadd.f32 %v226, %v607
    %v609 = vpop.f32.mrb[0].mxu0
    %v610 = vpop.f32.mrb[0].mxu0
    %v611 = vadd.f32 %v226, %v610
    %v612 = vpop.f32.mrb[0].mxu0
    %613 = vmatprep.mubr.bf16.mxu0 0
    %614 = vmatmul.mubr.bf16.gmra.mrb[0].mxu0 %v290
    %v615 = vpop.f32.mrb[0].mxu0
    %v616 = vadd.f32 %v226, %v615
    %v617 = vpop.f32.mrb[0].mxu0
    %v618 = vpop.f32.mrb[0].mxu0
    %v619 = vadd.f32 %v226, %v618
    %v620 = vpop.f32.mrb[0].mxu0
    %621 = vmatprep.mubr.bf16.mxu0 0
    %622 = vmatmul.mubr.bf16.gmra.mrb[0].mxu0 %v293
    %v623 = vpop.f32.mrb[0].mxu0
    %v624 = vadd.f32 %v226, %v623
    %v625 = vpop.f32.mrb[0].mxu0
    %v626 = vpop.f32.mrb[0].mxu0
    %v627 = vadd.f32 %v226, %v626
    %v628 = vpop.f32.mrb[0].mxu0
    %629 = vmatprep.mubr.bf16.mxu0 0
    %630 = vmatmul.mubr.bf16.gmra.mrb[0].mxu0 %v296
    %v631 = vpop.f32.mrb[0].mxu0
    %v632 = vadd.f32 %v226, %v631
    %v633 = vpop.f32.mrb[0].mxu0
    %v634 = vpop.f32.mrb[0].mxu0
    %v635 = vadd.f32 %v226, %v634
    %v636 = vpop.f32.mrb[0].mxu0
    %637 = vmatprep.mubr.bf16.mxu0 0
    %638 = vmatmul.mubr.bf16.gmra.mrb[0].mxu0 %v299
    %v639 = vpop.f32.mrb[0].mxu0
    %v640 = vadd.f32 %v226, %v639
    %v641 = vpop.f32.mrb[0].mxu0
    %v642 = vpop.f32.mrb[0].mxu0
    %v643 = vadd.f32 %v226, %v642
    %v644 = vpop.f32.mrb[0].mxu0
    %645 = vmatprep.mubr.bf16.mxu0 0
    %646 = vmatmul.mubr.bf16.gmra.mrb[0].mxu0 %v302
    %v647 = vpop.f32.mrb[0].mxu0
    %v648 = vadd.f32 %v226, %v647
    %v649 = vpop.f32.mrb[0].mxu0
    %v650 = vpop.f32.mrb[0].mxu0
    %v651 = vadd.f32 %v226, %v650
    %v652 = vpop.f32.mrb[0].mxu0
    %653 = vmatprep.mubr.bf16.mxu0 0
    %654 = vmatmul.mubr.bf16.gmra.mrb[0].mxu0 %v305
    %v655 = vpop.f32.mrb[0].mxu0
    %v656 = vadd.f32 %v226, %v655
    %v657 = vpop.f32.mrb[0].mxu0
    %v658 = vpop.f32.mrb[0].mxu0
    %v659 = vadd.f32 %v226, %v658
    %v660 = vpop.f32.mrb[0].mxu0
    %661 = vmatprep.mubr.bf16.mxu0 0
    %662 = vmatmul.mubr.bf16.gmra.mrb[0].mxu0 %v308
    %v663 = vpop.f32.mrb[0].mxu0
    %v664 = vadd.f32 %v226, %v663
    %v665 = vpop.f32.mrb[0].mxu0
    %v666 = vpop.f32.mrb[0].mxu0
    %v667 = vadd.f32 %v226, %v666
    %v668 = vpop.f32.mrb[0].mxu0
    %669 = vmatprep.mubr.bf16.mxu0 0
    %670 = vmatmul.mubr.bf16.gmra.mrb[0].mxu0 %v311
    %v671 = vpop.f32.mrb[0].mxu0
    %v672 = vadd.f32 %v226, %v671
    %v673 = vpop.f32.mrb[0].mxu0
    %v674 = vpop.f32.mrb[0].mxu0
    %v675 = vadd.f32 %v226, %v674
    %v676 = vpop.f32.mrb[0].mxu0
    %677 = vmatprep.mubr.bf16.mxu0 0
    %678 = vmatmul.mubr.bf16.gmra.mrb[0].mxu0 %v314
    %v679 = vpop.f32.mrb[0].mxu0
    %v680 = vadd.f32 %v226, %v679
    %v681 = vpop.f32.mrb[0].mxu0
    %v682 = vpop.f32.mrb[0].mxu0
    %v683 = vadd.f32 %v226, %v682
    %v684 = vpop.f32.mrb[0].mxu0
    %685 = vmatprep.mubr.bf16.mxu0 0
    %686 = vmatmul.mubr.bf16.gmra.mrb[0].mxu0 %v317
    %v687 = vpop.f32.mrb[0].mxu0
    %v688 = vadd.f32 %v226, %v687
    %v689 = vpop.f32.mrb[0].mxu0
    %v690 = vpop.f32.mrb[0].mxu0
    %v691 = vadd.f32 %v226, %v690
    %v692 = vpop.f32.mrb[0].mxu0
    %693 = vmatprep.mubr.bf16.mxu0 0
    %694 = vmatmul.mubr.bf16.gmra.mrb[0].mxu0 %v320
    %v695 = vpop.f32.mrb[0].mxu0
    %v696 = vadd.f32 %v226, %v695
    %v697 = vpop.f32.mrb[0].mxu0
    %v698 = vpop.f32.mrb[0].mxu0
    %v699 = vadd.f32 %v226, %v698
    %v700 = vpop.f32.mrb[0].mxu0
    %701 = vmatprep.mubr.bf16.mxu0 0
    %702 = vmatmul.mubr.bf16.gmra.mrb[0].mxu0 %v323
    %v703 = vpop.f32.mrb[0].mxu0
    %v704 = vadd.f32 %v226, %v703
    %v705 = vpop.f32.mrb[0].mxu0
    %v706 = vpop.f32.mrb[0].mxu0
    %v707 = vadd.f32 %v226, %v706
    %v708 = vpop.f32.mrb[0].mxu0
    %709 = vmatprep.mubr.bf16.mxu0 0
    %710 = vmatmul.mubr.bf16.gmra.mrb[0].mxu0 %v326
    %v711 = vpop.f32.mrb[0].mxu0
    %v712 = vadd.f32 %v226, %v711
    %v713 = vpop.f32.mrb[0].mxu0
    %v714 = vpop.f32.mrb[0].mxu0
    %v715 = vadd.f32 %v226, %v714
    %v716 = vpop.f32.mrb[0].mxu0
    %717 = vmatprep.mubr.bf16.mxu0 0
    %718 = vmatmul.mubr.bf16.gmra.mrb[0].mxu0 %v329
    %v719 = vpop.f32.mrb[0].mxu0
    %v720 = vadd.f32 %v226, %v719
    %v721 = vpop.f32.mrb[0].mxu0
    %v722 = vpop.f32.mrb[0].mxu0
    %v723 = vadd.f32 %v226, %v722
    %v724 = vpop.f32.mrb[0].mxu0
    %725 = vmatprep.mubr.bf16.mxu0 0
    %726 = vmatmul.mubr.bf16.gmra.mrb[0].mxu0 %v332
    %v727 = vpop.f32.mrb[0].mxu0
    %v728 = vadd.f32 %v226, %v727
    %v729 = vpop.f32.mrb[0].mxu0
    %v730 = vpop.f32.mrb[0].mxu0
    %v731 = vadd.f32 %v226, %v730
    %v732 = vpop.f32.mrb[0].mxu0
    %733 = vmatprep.mubr.bf16.mxu0 0
    %734 = vmatmul.mubr.bf16.gmra.mrb[0].mxu0 %v335
    %v735 = vpop.f32.mrb[0].mxu0
    %v736 = vadd.f32 %v226, %v735
    %v737 = vpop.f32.mrb[0].mxu0
    %v738 = vpop.f32.mrb[0].mxu0
    %v739 = vadd.f32 %v226, %v738
    %v740 = vpop.f32.mrb[0].mxu0
    %741 = vmatprep.mubr.bf16.mxu0 0
    %742 = vmatmul.mubr.bf16.gmra.mrb[0].mxu0 %v338
    %v743 = vpop.f32.mrb[0].mxu0
    %v744 = vadd.f32 %v226, %v743
    %v745 = vpop.f32.mrb[0].mxu0
    %v746 = vpop.f32.mrb[0].mxu0
    %v747 = vadd.f32 %v226, %v746
    %v748 = vpop.f32.mrb[0].mxu0
    %749 = vmatprep.mubr.bf16.mxu0 0
    %750 = vmatmul.mubr.bf16.gmra.mrb[0].mxu0 %v341
    %v751 = vpop.f32.mrb[0].mxu0
    %v752 = vadd.f32 %v226, %v751
    %v753 = vpop.f32.mrb[0].mxu0
    %v754 = vpop.f32.mrb[0].mxu0
    %v755 = vadd.f32 %v226, %v754
    %v756 = vpop.f32.mrb[0].mxu0
    %757 = vmatprep.mubr.bf16.mxu0 0
    %758 = vmatmul.mubr.bf16.gmra.mrb[0].mxu0 %v344
    %v759 = vpop.f32.mrb[0].mxu0
    %v760 = vadd.f32 %v226, %v759
    %v761 = vpop.f32.mrb[0].mxu0
    %v762 = vpop.f32.mrb[0].mxu0
    %v763 = vadd.f32 %v226, %v762
    %v764 = vpop.f32.mrb[0].mxu0
    %765 = vmatprep.mubr.bf16.mxu0 0
    %766 = vmatmul.mubr.bf16.gmra.mrb[0].mxu0 %v347
    %v767 = vpop.f32.mrb[0].mxu0
    %v768 = vadd.f32 %v226, %v767
    %v769 = vpop.f32.mrb[0].mxu0
    %v770 = vpop.f32.mrb[0].mxu0
    %v771 = vadd.f32 %v226, %v770
    %v772 = vpop.f32.mrb[0].mxu0
    %773 = vmatprep.mubr.bf16.mxu0 0
    %774 = vmatmul.mubr.bf16.gmra.mrb[0].mxu0 %v350
    %v775 = vpop.f32.mrb[0].mxu0
    %v776 = vadd.f32 %v226, %v775
    %v777 = vpop.f32.mrb[0].mxu0
    %v778 = vpop.f32.mrb[0].mxu0
    %v779 = vadd.f32 %v226, %v778
    %v780 = vpop.f32.mrb[0].mxu0
    %781 = vmatprep.mubr.bf16.mxu0 0
    %782 = vmatmul.mubr.bf16.gmra.mrb[0].mxu0 %v353
    %v783 = vpop.f32.mrb[0].mxu0
    %v784 = vadd.f32 %v226, %v783
    %v785 = vpop.f32.mrb[0].mxu0
    %v786 = vpop.f32.mrb[0].mxu0
    %v787 = vadd.f32 %v226, %v786
    %v788 = vpop.f32.mrb[0].mxu0
    %789 = vmatprep.mubr.bf16.mxu0 0
    %790 = vmatmul.mubr.bf16.gmra.mrb[0].mxu0 %v356
    %v791 = vpop.f32.mrb[0].mxu0
    %v792 = vadd.f32 %v226, %v791
    %v793 = vpop.f32.mrb[0].mxu0
    %v794 = vpop.f32.mrb[0].mxu0
    %v795 = vadd.f32 %v226, %v794
    %v796 = vpop.f32.mrb[0].mxu0
    %797 = vmatprep.mubr.bf16.mxu0 0
    %798 = vmatmul.mubr.bf16.gmra.mrb[0].mxu0 %v359
    %v799 = vpop.f32.mrb[0].mxu0
    %v800 = vadd.f32 %v226, %v799
    %v801 = vpop.f32.mrb[0].mxu0
    %v802 = vpop.f32.mrb[0].mxu0
    %v803 = vadd.f32 %v226, %v802
    %v804 = vpop.f32.mrb[0].mxu0
    %805 = vmatprep.mubr.bf16.mxu0 0
    %806 = vmatmul.mubr.bf16.gmra.mrb[0].mxu0 %v362
    %v807 = vpop.f32.mrb[0].mxu0
    %v808 = vadd.f32 %v226, %v807
    %v809 = vpop.f32.mrb[0].mxu0
    %v810 = vpop.f32.mrb[0].mxu0
    %v811 = vadd.f32 %v226, %v810
    %v812 = vpop.f32.mrb[0].mxu0
    %813 = vmatprep.mubr.bf16.mxu0 0
    %814 = vmatmul.mubr.bf16.gmra.mrb[0].mxu0 %v365
    %v815 = vpop.f32.mrb[0].mxu0
    %v816 = vadd.f32 %v226, %v815
    %v817 = vpop.f32.mrb[0].mxu0
    %v818 = vpop.f32.mrb[0].mxu0
    %v819 = vadd.f32 %v226, %v818
    %v820 = vpop.f32.mrb[0].mxu0
    %821 = vmatprep.mubr.bf16.mxu0 0
    %822 = vmatmul.mubr.bf16.gmra.mrb[0].mxu0 %v368
    %v823 = vpop.f32.mrb[0].mxu0
    %v824 = vadd.f32 %v226, %v823
    %v825 = vpop.f32.mrb[0].mxu0
    %v826 = vpop.f32.mrb[0].mxu0
    %v827 = vadd.f32 %v226, %v826
    %v828 = vpop.f32.mrb[0].mxu0
    %829 = vmatprep.mubr.bf16.mxu0 0
    %830 = vmatmul.mubr.bf16.gmra.mrb[0].mxu0 %v371
    %v831 = vpop.f32.mrb[0].mxu0
    %v832 = vadd.f32 %v226, %v831
    %v833 = vpop.f32.mrb[0].mxu0
    %v834 = vpop.f32.mrb[0].mxu0
    %v835 = vadd.f32 %v226, %v834
    %v836 = vpop.f32.mrb[0].mxu0
    %837 = vmatprep.mubr.bf16.mxu0 0
    %838 = vmatmul.mubr.bf16.gmra.mrb[0].mxu0 %v374
    %v839 = vpop.f32.mrb[0].mxu0
    %v840 = vadd.f32 %v226, %v839
    %v841 = vpop.f32.mrb[0].mxu0
    %v842 = vpop.f32.mrb[0].mxu0
    %v843 = vadd.f32 %v226, %v842
    %v844 = vpop.f32.mrb[0].mxu0
    %845 = vmatprep.mubr.bf16.mxu0 0
    %846 = vmatmul.mubr.bf16.gmra.mrb[0].mxu0 %v377
    %v847 = vpop.f32.mrb[0].mxu0
    %v848 = vadd.f32 %v226, %v847
    %v849 = vpop.f32.mrb[0].mxu0
    %v850 = vpop.f32.mrb[0].mxu0
    %v851 = vadd.f32 %v226, %v850
    %v852 = vpop.f32.mrb[0].mxu0
    %853 = vmatprep.mubr.bf16.mxu0 0
    %854 = vmatmul.mubr.bf16.gmra.mrb[0].mxu0 %v380
    %v855 = vpop.f32.mrb[0].mxu0
    %v856 = vadd.f32 %v226, %v855
    %v857 = vpop.f32.mrb[0].mxu0
    %v858 = vpop.f32.mrb[0].mxu0
    %v859 = vadd.f32 %v226, %v858
    %v860 = vpop.f32.mrb[0].mxu0
    %861 = vmatprep.mubr.bf16.mxu0 0
    %862 = vmatmul.mubr.bf16.gmra.mrb[0].mxu0 %v383
    %v863 = vpop.f32.mrb[0].mxu0
    %v864 = vadd.f32 %v226, %v863
    %v865 = vpop.f32.mrb[0].mxu0
    %v866 = vpop.f32.mrb[0].mxu0
    %v867 = vadd.f32 %v226, %v866
    %v868 = vpop.f32.mrb[0].mxu0
    %869 = vmatprep.mubr.bf16.mxu0 0
    %870 = vmatmul.mubr.bf16.gmra.mrb[0].mxu0 %v386
    %v871 = vpop.f32.mrb[0].mxu0
    %v872 = vadd.f32 %v226, %v871
    %v873 = vpop.f32.mrb[0].mxu0
    %v874 = vpop.f32.mrb[0].mxu0
    %v875 = vadd.f32 %v226, %v874
    %v876 = vpop.f32.mrb[0].mxu0
    %877 = vmatprep.mubr.bf16.mxu0 0
    %878 = vmatmul.mubr.bf16.gmra.mrb[0].mxu0 %v389
    %v879 = vpop.f32.mrb[0].mxu0
    %v880 = vadd.f32 %v226, %v879
    %v881 = vpop.f32.mrb[0].mxu0
    %v882 = vpop.f32.mrb[0].mxu0
    %v883 = vadd.f32 %v226, %v882
    %v884 = vpop.f32.mrb[0].mxu0
    %885 = vmatprep.mubr.bf16.mxu0 0
    %886 = vmatmul.mubr.bf16.gmra.mrb[0].mxu0 %v392
    %v887 = vpop.f32.mrb[0].mxu0
    %v888 = vadd.f32 %v226, %v887
    %v889 = vpop.f32.mrb[0].mxu0
    %v890 = vpop.f32.mrb[0].mxu0
    %v891 = vadd.f32 %v226, %v890
    %v892 = vpop.f32.mrb[0].mxu0
    %893 = vmatprep.mubr.bf16.mxu0 0
    %894 = vmatmul.mubr.bf16.gmra.mrb[0].mxu0 %v395
    %v895 = vpop.f32.mrb[0].mxu0
    %v896 = vadd.f32 %v226, %v895
    %v897 = vpop.f32.mrb[0].mxu0
    %v898 = vpop.f32.mrb[0].mxu0
    %v899 = vadd.f32 %v226, %v898
    %v900 = vpop.f32.mrb[0].mxu0
    %901 = vmatprep.mubr.bf16.mxu0 0
    %902 = vmatmul.mubr.bf16.gmra.mrb[0].mxu0 %v398
    %v903 = vpop.f32.mrb[0].mxu0
    %v904 = vadd.f32 %v226, %v903
    %v905 = vpop.f32.mrb[0].mxu0
    %v906 = vpop.f32.mrb[0].mxu0
    %v907 = vadd.f32 %v226, %v906
    %v908 = vpop.f32.mrb[0].mxu0
    %909 = vmatprep.mubr.bf16.mxu0 0
    %910 = vmatmul.mubr.bf16.gmra.mrb[0].mxu0 %v401
    %v911 = vpop.f32.mrb[0].mxu0
    %v912 = vadd.f32 %v226, %v911
    %v913 = vpop.f32.mrb[0].mxu0
    %v914 = vpop.f32.mrb[0].mxu0
    %v915 = vadd.f32 %v226, %v914
    %v916 = vpop.f32.mrb[0].mxu0
    %917 = vmatprep.mubr.bf16.mxu0 0
    %918 = vmatmul.mubr.bf16.gmra.mrb[0].mxu0 %v404
    %v919 = vpop.f32.mrb[0].mxu0
    %v920 = vadd.f32 %v226, %v919
    %v921 = vpop.f32.mrb[0].mxu0
    %v922 = vpop.f32.mrb[0].mxu0
    %v923 = vadd.f32 %v226, %v922
    %v924 = vpop.f32.mrb[0].mxu0
    %925 = vmatprep.mubr.bf16.mxu0 0
    %926 = vmatmul.mubr.bf16.gmra.mrb[0].mxu0 %v407
    %v927 = vpop.f32.mrb[0].mxu0
    %v928 = vadd.f32 %v226, %v927
    %v929 = vpop.f32.mrb[0].mxu0
    %v930 = vpop.f32.mrb[0].mxu0
    %v931 = vadd.f32 %v226, %v930
    %v932 = vpop.f32.mrb[0].mxu0
    %933 = vmatprep.mubr.bf16.mxu0 0
    %934 = vmatmul.mubr.bf16.gmra.mrb[0].mxu0 %v410
    %v935 = vpop.f32.mrb[0].mxu0
    %v936 = vadd.f32 %v226, %v935
    %v937 = vpop.f32.mrb[0].mxu0
    %v938 = vpop.f32.mrb[0].mxu0
    %v939 = vadd.f32 %v226, %v938
    %v940 = vpop.f32.mrb[0].mxu0
    %941 = vmatprep.mubr.bf16.mxu0 0
    %942 = vmatmul.mubr.bf16.gmra.mrb[0].mxu0 %v413
    %v943 = vpop.f32.mrb[0].mxu0
    %v944 = vadd.f32 %v226, %v943
    %v945 = vpop.f32.mrb[0].mxu0
    %v946 = vpop.f32.mrb[0].mxu0
    %v947 = vadd.f32 %v226, %v946
    %v948 = vpop.f32.mrb[0].mxu0
    %949 = vmatprep.mubr.bf16.mxu0 0
    %950 = vmatmul.mubr.bf16.gmra.mrb[0].mxu0 %v416
    %v951 = vpop.f32.mrb[0].mxu0
    %v952 = vadd.f32 %v226, %v951
    %v953 = vpop.f32.mrb[0].mxu0
    %v954 = vpop.f32.mrb[0].mxu0
    %v955 = vadd.f32 %v226, %v954
    %v956 = vpop.f32.mrb[0].mxu0
    %957 = vmatprep.mubr.bf16.mxu0 0
    %958 = vmatmul.mubr.bf16.gmra.mrb[0].mxu0 %v419
    %v959 = vpop.f32.mrb[0].mxu0
    %v960 = vadd.f32 %v226, %v959
    %v961 = vpop.f32.mrb[0].mxu0
    %v962 = vpop.f32.mrb[0].mxu0
    %v963 = vadd.f32 %v226, %v962
    %v964 = vpop.f32.mrb[0].mxu0
    %965 = vdwg.mxu0
    %v966 = vmax.f32 %v456, 0.0
    %v967 = vmax.f32 %v459, 0.0
    %v968 = vmax.f32 %v464, 0.0
    %v969 = vmax.f32 %v467, 0.0
    %v970 = vmax.f32 %v472, 0.0
    %v971 = vmax.f32 %v475, 0.0
    %v972 = vmax.f32 %v480, 0.0
    %v973 = vmax.f32 %v483, 0.0
    %v974 = vmax.f32 %v488, 0.0
    %v975 = vmax.f32 %v491, 0.0
    %v976 = vmax.f32 %v496, 0.0
    %v977 = vmax.f32 %v499, 0.0
    %v978 = vmax.f32 %v504, 0.0
    %v979 = vmax.f32 %v507, 0.0
    %v980 = vmax.f32 %v512, 0.0
    %v981 = vmax.f32 %v515, 0.0
    %v982 = vmax.f32 %v520, 0.0
    %v983 = vmax.f32 %v523, 0.0
    %v984 = vmax.f32 %v528, 0.0
    %v985 = vmax.f32 %v531, 0.0
    %v986 = vmax.f32 %v536, 0.0
    %v987 = vmax.f32 %v539, 0.0
    %v988 = vmax.f32 %v544, 0.0
    %v989 = vmax.f32 %v547, 0.0
    %v990 = vmax.f32 %v552, 0.0
    %v991 = vmax.f32 %v555, 0.0
    %v992 = vmax.f32 %v560, 0.0
    %v993 = vmax.f32 %v563, 0.0
    %v994 = vmax.f32 %v568, 0.0
    %v995 = vmax.f32 %v571, 0.0
    %v996 = vmax.f32 %v576, 0.0
    %v997 = vmax.f32 %v579, 0.0
    %v998 = vmax.f32 %v584, 0.0
    %v999 = vmax.f32 %v587, 0.0
    %v1000 = vmax.f32 %v592, 0.0
    %v1001 = vmax.f32 %v595, 0.0
    %v1002 = vmax.f32 %v600, 0.0
    %v1003 = vmax.f32 %v603, 0.0
    %v1004 = vmax.f32 %v608, 0.0
    %v1005 = vmax.f32 %v611, 0.0
    %v1006 = vmax.f32 %v616, 0.0
    %v1007 = vmax.f32 %v619, 0.0
    %v1008 = vmax.f32 %v624, 0.0
    %v1009 = vmax.f32 %v627, 0.0
    %v1010 = vmax.f32 %v632, 0.0
    %v1011 = vmax.f32 %v635, 0.0
    %v1012 = vmax.f32 %v640, 0.0
    %v1013 = vmax.f32 %v643, 0.0
    %v1014 = vmax.f32 %v648, 0.0
    %v1015 = vmax.f32 %v651, 0.0
    %v1016 = vmax.f32 %v656, 0.0
    %v1017 = vmax.f32 %v659, 0.0
    %v1018 = vmax.f32 %v664, 0.0
    %v1019 = vmax.f32 %v667, 0.0
    %v1020 = vmax.f32 %v672, 0.0
    %v1021 = vmax.f32 %v675, 0.0
    %v1022 = vmax.f32 %v680, 0.0
    %v1023 = vmax.f32 %v683, 0.0
    %v1024 = vmax.f32 %v688, 0.0
    %v1025 = vmax.f32 %v691, 0.0
    %v1026 = vmax.f32 %v696, 0.0
    %v1027 = vmax.f32 %v699, 0.0
    %v1028 = vmax.f32 %v704, 0.0
    %v1029 = vmax.f32 %v707, 0.0
    %v1030 = vmax.f32 %v712, 0.0
    %v1031 = vmax.f32 %v715, 0.0
    %v1032 = vmax.f32 %v720, 0.0
    %v1033 = vmax.f32 %v723, 0.0
    %v1034 = vmax.f32 %v728, 0.0
    %v1035 = vmax.f32 %v731, 0.0
    %v1036 = vmax.f32 %v736, 0.0
    %v1037 = vmax.f32 %v739, 0.0
    %v1038 = vmax.f32 %v744, 0.0
    %v1039 = vmax.f32 %v747, 0.0
    %v1040 = vmax.f32 %v752, 0.0
    %v1041 = vmax.f32 %v755, 0.0
    %v1042 = vmax.f32 %v760, 0.0
    %v1043 = vmax.f32 %v763, 0.0
    %v1044 = vmax.f32 %v768, 0.0
    %v1045 = vmax.f32 %v771, 0.0
    %v1046 = vmax.f32 %v776, 0.0
    %v1047 = vmax.f32 %v779, 0.0
    %v1048 = vmax.f32 %v784, 0.0
    %v1049 = vmax.f32 %v787, 0.0
    %v1050 = vmax.f32 %v792, 0.0
    %v1051 = vmax.f32 %v795, 0.0
    %v1052 = vmax.f32 %v800, 0.0
    %v1053 = vmax.f32 %v803, 0.0
    %v1054 = vmax.f32 %v808, 0.0
    %v1055 = vmax.f32 %v811, 0.0
    %v1056 = vmax.f32 %v816, 0.0
    %v1057 = vmax.f32 %v819, 0.0
    %v1058 = vmax.f32 %v824, 0.0
    %v1059 = vmax.f32 %v827, 0.0
    %v1060 = vmax.f32 %v832, 0.0
    %v1061 = vmax.f32 %v835, 0.0
    %v1062 = vmax.f32 %v840, 0.0
    %v1063 = vmax.f32 %v843, 0.0
    %v1064 = vmax.f32 %v848, 0.0
    %v1065 = vmax.f32 %v851, 0.0
    %v1066 = vmax.f32 %v856, 0.0
    %v1067 = vmax.f32 %v859, 0.0
    %v1068 = vmax.f32 %v864, 0.0
    %v1069 = vmax.f32 %v867, 0.0
    %v1070 = vmax.f32 %v872, 0.0
    %v1071 = vmax.f32 %v875, 0.0
    %v1072 = vmax.f32 %v880, 0.0
    %v1073 = vmax.f32 %v883, 0.0
    %v1074 = vmax.f32 %v888, 0.0
    %v1075 = vmax.f32 %v891, 0.0
    %v1076 = vmax.f32 %v896, 0.0
    %v1077 = vmax.f32 %v899, 0.0
    %v1078 = vmax.f32 %v904, 0.0
    %v1079 = vmax.f32 %v907, 0.0
    %v1080 = vmax.f32 %v912, 0.0
    %v1081 = vmax.f32 %v915, 0.0
    %v1082 = vmax.f32 %v920, 0.0
    %v1083 = vmax.f32 %v923, 0.0
    %v1084 = vmax.f32 %v928, 0.0
    %v1085 = vmax.f32 %v931, 0.0
    %v1086 = vmax.f32 %v936, 0.0
    %v1087 = vmax.f32 %v939, 0.0
    %v1088 = vmax.f32 %v944, 0.0
    %v1089 = vmax.f32 %v947, 0.0
    %v1090 = vmax.f32 %v952, 0.0
    %v1091 = vmax.f32 %v955, 0.0
    %v1092 = vmax.f32 %v960, 0.0
    %v1093 = vmax.f32 %v963, 0.0
    %v1094 = vld [vmem:[%s3] sm:$0xff]
    %v1095 = vld [vmem:[%s3 + $0x8] sm:$0xff]
    %v1096 = vld [vmem:[%s3 + $0x10] sm:$0xff]
    %v1097 = vld [vmem:[%s3 + $0x18] sm:$0xff]
    %v1098 = vld [vmem:[%s3 + $0x20] sm:$0xff]
    %v1099 = vld [vmem:[%s3 + $0x28] sm:$0xff]
    %v1100 = vld [vmem:[%s3 + $0x30] sm:$0xff]
    %v1101 = vld [vmem:[%s3 + $0x38] sm:$0xff]
    %v1102 = vld [vmem:[%s3 + $0x40] sm:$0xff]
    %v1103 = vld [vmem:[%s3 + $0x48] sm:$0xff]
    %v1104 = vld [vmem:[%s3 + $0x50] sm:$0xff]
    %v1105 = vld [vmem:[%s3 + $0x58] sm:$0xff]
    %v1106 = vld [vmem:[%s3 + $0x60] sm:$0xff]
    %v1107 = vld [vmem:[%s3 + $0x68] sm:$0xff]
    %v1108 = vld [vmem:[%s3 + $0x70] sm:$0xff]
    %v1109 = vld [vmem:[%s3 + $0x78] sm:$0xff]
    %1110 = vmatprep.subr.mxu0 0.0
    %1111 = vmatpush1.msra.mxu0 %v1094
    %1112 = vmatprep.subr.mxu0 0.0
    %1113 = vmatpush1.msra.mxu0 %v1095
    %1114 = vmatprep.subr.mxu0 0.0
    %1115 = vmatpush1.msra.mxu0 %v1096
    %1116 = vmatprep.subr.mxu0 0.0
    %1117 = vmatpush1.msra.mxu0 %v1097
    %1118 = vmatprep.subr.mxu0 0.0
    %1119 = vmatpush1.msra.mxu0 %v1098
    %1120 = vmatprep.subr.mxu0 0.0
    %1121 = vmatpush1.msra.mxu0 %v1099
    %1122 = vmatprep.subr.mxu0 0.0
    %1123 = vmatpush1.msra.mxu0 %v1100
    %1124 = vmatprep.subr.mxu0 0.0
    %1125 = vmatpush1.msra.mxu0 %v1101
    %1126 = vmatprep.subr.mxu0 0.0
    %1127 = vmatpush1.msra.mxu0 %v1102
    %1128 = vmatprep.subr.mxu0 0.0
    %1129 = vmatpush1.msra.mxu0 %v1103
    %1130 = vmatprep.subr.mxu0 0.0
    %1131 = vmatpush1.msra.mxu0 %v1104
    %1132 = vmatprep.subr.mxu0 0.0
    %1133 = vmatpush1.msra.mxu0 %v1105
    %1134 = vmatprep.subr.mxu0 0.0
    %1135 = vmatpush1.msra.mxu0 %v1106
    %1136 = vmatprep.subr.mxu0 0.0
    %1137 = vmatpush1.msra.mxu0 %v1107
    %1138 = vmatprep.subr.mxu0 0.0
    %1139 = vmatpush1.msra.mxu0 %v1108
    %1140 = vmatprep.subr.mxu0 0.0
    %1141 = vmatpush1.msra.mxu0 %v1109
    %1142 = vmatprep.subr.mxu0 0.0
    %1143 = vmatpush1.msra.mxu0 0.0
    %1144 = vmatprep.subr.mxu0 0.0
    %1145 = vmatpush1.msra.mxu0 0.0
    %1146 = vmatprep.subr.mxu0 0.0
    %1147 = vmatpush1.msra.mxu0 0.0
    %1148 = vmatprep.subr.mxu0 0.0
    %1149 = vmatpush1.msra.mxu0 0.0
    %1150 = vmatprep.subr.mxu0 0.0
    %1151 = vmatpush1.msra.mxu0 0.0
    %1152 = vmatprep.subr.mxu0 0.0
    %1153 = vmatpush1.msra.mxu0 0.0
    %1154 = vmatprep.subr.mxu0 0.0
    %1155 = vmatpush1.msra.mxu0 0.0
    %1156 = vmatprep.subr.mxu0 0.0
    %1157 = vmatpush1.msra.mxu0 0.0
    %1158 = vmatprep.subr.mxu0 0.0
    %1159 = vmatpush1.msra.mxu0 0.0
    %1160 = vmatprep.subr.mxu0 0.0
    %1161 = vmatpush1.msra.mxu0 0.0
    %1162 = vmatprep.subr.mxu0 0.0
    %1163 = vmatpush1.msra.mxu0 0.0
    %1164 = vmatprep.subr.mxu0 0.0
    %1165 = vmatpush1.msra.mxu0 0.0
    %1166 = vmatprep.subr.mxu0 0.0
    %1167 = vmatpush1.msra.mxu0 0.0
    %1168 = vmatprep.subr.mxu0 0.0
    %1169 = vmatpush1.msra.mxu0 0.0
    %1170 = vmatprep.subr.mxu0 0.0
    %1171 = vmatpush1.msra.mxu0 0.0
    %1172 = vmatprep.subr.mxu0 0.0
    %1173 = vmatpush1.msra.mxu0 0.0
    %1174 = vmatprep.mubr.f32.mxu0 0.0
    %1175 = vmatmul.mubr.f32.gmra.mrb[0].mxu0 %v966
    %v1176 = vpop.f32.mrb[0].mxu0
    %v1177 = vadd.f32 0.0, %v1176
    %v1178 = vpop.f32.mrb[0].mxu0
    %1179 = vmatprep.mubr.f32.mxu0 0.0
    %1180 = vmatmul.mubr.f32.gmra.mrb[0].mxu0 %v967
    %v1181 = vpop.f32.mrb[0].mxu0
    %v1182 = vadd.f32 0.0, %v1181
    %v1183 = vpop.f32.mrb[0].mxu0
    %1184 = vmatprep.mubr.f32.mxu0 0.0
    %1185 = vmatmul.mubr.f32.gmra.mrb[0].mxu0 %v968
    %v1186 = vpop.f32.mrb[0].mxu0
    %v1187 = vadd.f32 0.0, %v1186
    %v1188 = vpop.f32.mrb[0].mxu0
    %1189 = vmatprep.mubr.f32.mxu0 0.0
    %1190 = vmatmul.mubr.f32.gmra.mrb[0].mxu0 %v969
    %v1191 = vpop.f32.mrb[0].mxu0
    %v1192 = vadd.f32 0.0, %v1191
    %v1193 = vpop.f32.mrb[0].mxu0
    %1194 = vmatprep.mubr.f32.mxu0 0.0
    %1195 = vmatmul.mubr.f32.gmra.mrb[0].mxu0 %v970
    %v1196 = vpop.f32.mrb[0].mxu0
    %v1197 = vadd.f32 0.0, %v1196
    %v1198 = vpop.f32.mrb[0].mxu0
    %1199 = vmatprep.mubr.f32.mxu0 0.0
    %1200 = vmatmul.mubr.f32.gmra.mrb[0].mxu0 %v971
    %v1201 = vpop.f32.mrb[0].mxu0
    %v1202 = vadd.f32 0.0, %v1201
    %v1203 = vpop.f32.mrb[0].mxu0
    %1204 = vmatprep.mubr.f32.mxu0 0.0
    %1205 = vmatmul.mubr.f32.gmra.mrb[0].mxu0 %v972
    %v1206 = vpop.f32.mrb[0].mxu0
    %v1207 = vadd.f32 0.0, %v1206
    %v1208 = vpop.f32.mrb[0].mxu0
    %1209 = vmatprep.mubr.f32.mxu0 0.0
    %1210 = vmatmul.mubr.f32.gmra.mrb[0].mxu0 %v973
    %v1211 = vpop.f32.mrb[0].mxu0
    %v1212 = vadd.f32 0.0, %v1211
    %v1213 = vpop.f32.mrb[0].mxu0
    %1214 = vmatprep.mubr.f32.mxu0 0.0
    %1215 = vmatmul.mubr.f32.gmra.mrb[0].mxu0 %v974
    %v1216 = vpop.f32.mrb[0].mxu0
    %v1217 = vadd.f32 0.0, %v1216
    %v1218 = vpop.f32.mrb[0].mxu0
    %1219 = vmatprep.mubr.f32.mxu0 0.0
    %1220 = vmatmul.mubr.f32.gmra.mrb[0].mxu0 %v975
    %v1221 = vpop.f32.mrb[0].mxu0
    %v1222 = vadd.f32 0.0, %v1221
    %v1223 = vpop.f32.mrb[0].mxu0
    %1224 = vmatprep.mubr.f32.mxu0 0.0
    %1225 = vmatmul.mubr.f32.gmra.mrb[0].mxu0 %v976
    %v1226 = vpop.f32.mrb[0].mxu0
    %v1227 = vadd.f32 0.0, %v1226
    %v1228 = vpop.f32.mrb[0].mxu0
    %1229 = vmatprep.mubr.f32.mxu0 0.0
    %1230 = vmatmul.mubr.f32.gmra.mrb[0].mxu0 %v977
    %v1231 = vpop.f32.mrb[0].mxu0
    %v1232 = vadd.f32 0.0, %v1231
    %v1233 = vpop.f32.mrb[0].mxu0
    %1234 = vmatprep.mubr.f32.mxu0 0.0
    %1235 = vmatmul.mubr.f32.gmra.mrb[0].mxu0 %v978
    %v1236 = vpop.f32.mrb[0].mxu0
    %v1237 = vadd.f32 0.0, %v1236
    %v1238 = vpop.f32.mrb[0].mxu0
    %1239 = vmatprep.mubr.f32.mxu0 0.0
    %1240 = vmatmul.mubr.f32.gmra.mrb[0].mxu0 %v979
    %v1241 = vpop.f32.mrb[0].mxu0
    %v1242 = vadd.f32 0.0, %v1241
    %v1243 = vpop.f32.mrb[0].mxu0
    %1244 = vmatprep.mubr.f32.mxu0 0.0
    %1245 = vmatmul.mubr.f32.gmra.mrb[0].mxu0 %v980
    %v1246 = vpop.f32.mrb[0].mxu0
    %v1247 = vadd.f32 0.0, %v1246
    %v1248 = vpop.f32.mrb[0].mxu0
    %1249 = vmatprep.mubr.f32.mxu0 0.0
    %1250 = vmatmul.mubr.f32.gmra.mrb[0].mxu0 %v981
    %v1251 = vpop.f32.mrb[0].mxu0
    %v1252 = vadd.f32 0.0, %v1251
    %v1253 = vpop.f32.mrb[0].mxu0
    %1254 = vmatprep.mubr.f32.mxu0 0.0
    %1255 = vmatmul.mubr.f32.gmra.mrb[0].mxu0 %v982
    %v1256 = vpop.f32.mrb[0].mxu0
    %v1257 = vadd.f32 0.0, %v1256
    %v1258 = vpop.f32.mrb[0].mxu0
    %1259 = vmatprep.mubr.f32.mxu0 0.0
    %1260 = vmatmul.mubr.f32.gmra.mrb[0].mxu0 %v983
    %v1261 = vpop.f32.mrb[0].mxu0
    %v1262 = vadd.f32 0.0, %v1261
    %v1263 = vpop.f32.mrb[0].mxu0
    %1264 = vmatprep.mubr.f32.mxu0 0.0
    %1265 = vmatmul.mubr.f32.gmra.mrb[0].mxu0 %v984
    %v1266 = vpop.f32.mrb[0].mxu0
    %v1267 = vadd.f32 0.0, %v1266
    %v1268 = vpop.f32.mrb[0].mxu0
    %1269 = vmatprep.mubr.f32.mxu0 0.0
    %1270 = vmatmul.mubr.f32.gmra.mrb[0].mxu0 %v985
    %v1271 = vpop.f32.mrb[0].mxu0
    %v1272 = vadd.f32 0.0, %v1271
    %v1273 = vpop.f32.mrb[0].mxu0
    %1274 = vmatprep.mubr.f32.mxu0 0.0
    %1275 = vmatmul.mubr.f32.gmra.mrb[0].mxu0 %v986
    %v1276 = vpop.f32.mrb[0].mxu0
    %v1277 = vadd.f32 0.0, %v1276
    %v1278 = vpop.f32.mrb[0].mxu0
    %1279 = vmatprep.mubr.f32.mxu0 0.0
    %1280 = vmatmul.mubr.f32.gmra.mrb[0].mxu0 %v987
    %v1281 = vpop.f32.mrb[0].mxu0
    %v1282 = vadd.f32 0.0, %v1281
    %v1283 = vpop.f32.mrb[0].mxu0
    %1284 = vmatprep.mubr.f32.mxu0 0.0
    %1285 = vmatmul.mubr.f32.gmra.mrb[0].mxu0 %v988
    %v1286 = vpop.f32.mrb[0].mxu0
    %v1287 = vadd.f32 0.0, %v1286
    %v1288 = vpop.f32.mrb[0].mxu0
    %1289 = vmatprep.mubr.f32.mxu0 0.0
    %1290 = vmatmul.mubr.f32.gmra.mrb[0].mxu0 %v989
    %v1291 = vpop.f32.mrb[0].mxu0
    %v1292 = vadd.f32 0.0, %v1291
    %v1293 = vpop.f32.mrb[0].mxu0
    %1294 = vmatprep.mubr.f32.mxu0 0.0
    %1295 = vmatmul.mubr.f32.gmra.mrb[0].mxu0 %v990
    %v1296 = vpop.f32.mrb[0].mxu0
    %v1297 = vadd.f32 0.0, %v1296
    %v1298 = vpop.f32.mrb[0].mxu0
    %1299 = vmatprep.mubr.f32.mxu0 0.0
    %1300 = vmatmul.mubr.f32.gmra.mrb[0].mxu0 %v991
    %v1301 = vpop.f32.mrb[0].mxu0
    %v1302 = vadd.f32 0.0, %v1301
    %v1303 = vpop.f32.mrb[0].mxu0
    %1304 = vmatprep.mubr.f32.mxu0 0.0
    %1305 = vmatmul.mubr.f32.gmra.mrb[0].mxu0 %v992
    %v1306 = vpop.f32.mrb[0].mxu0
    %v1307 = vadd.f32 0.0, %v1306
    %v1308 = vpop.f32.mrb[0].mxu0
    %1309 = vmatprep.mubr.f32.mxu0 0.0
    %1310 = vmatmul.mubr.f32.gmra.mrb[0].mxu0 %v993
    %v1311 = vpop.f32.mrb[0].mxu0
    %v1312 = vadd.f32 0.0, %v1311
    %v1313 = vpop.f32.mrb[0].mxu0
    %1314 = vmatprep.mubr.f32.mxu0 0.0
    %1315 = vmatmul.mubr.f32.gmra.mrb[0].mxu0 %v994
    %v1316 = vpop.f32.mrb[0].mxu0
    %v1317 = vadd.f32 0.0, %v1316
    %v1318 = vpop.f32.mrb[0].mxu0
    %1319 = vmatprep.mubr.f32.mxu0 0.0
    %1320 = vmatmul.mubr.f32.gmra.mrb[0].mxu0 %v995
    %v1321 = vpop.f32.mrb[0].mxu0
    %v1322 = vadd.f32 0.0, %v1321
    %v1323 = vpop.f32.mrb[0].mxu0
    %1324 = vmatprep.mubr.f32.mxu0 0.0
    %1325 = vmatmul.mubr.f32.gmra.mrb[0].mxu0 %v996
    %v1326 = vpop.f32.mrb[0].mxu0
    %v1327 = vadd.f32 0.0, %v1326
    %v1328 = vpop.f32.mrb[0].mxu0
    %1329 = vmatprep.mubr.f32.mxu0 0.0
    %1330 = vmatmul.mubr.f32.gmra.mrb[0].mxu0 %v997
    %v1331 = vpop.f32.mrb[0].mxu0
    %v1332 = vadd.f32 0.0, %v1331
    %v1333 = vpop.f32.mrb[0].mxu0
    %1334 = vmatprep.mubr.f32.mxu0 0.0
    %1335 = vmatmul.mubr.f32.gmra.mrb[0].mxu0 %v998
    %v1336 = vpop.f32.mrb[0].mxu0
    %v1337 = vadd.f32 0.0, %v1336
    %v1338 = vpop.f32.mrb[0].mxu0
    %1339 = vmatprep.mubr.f32.mxu0 0.0
    %1340 = vmatmul.mubr.f32.gmra.mrb[0].mxu0 %v999
    %v1341 = vpop.f32.mrb[0].mxu0
    %v1342 = vadd.f32 0.0, %v1341
    %v1343 = vpop.f32.mrb[0].mxu0
    %1344 = vmatprep.mubr.f32.mxu0 0.0
    %1345 = vmatmul.mubr.f32.gmra.mrb[0].mxu0 %v1000
    %v1346 = vpop.f32.mrb[0].mxu0
    %v1347 = vadd.f32 0.0, %v1346
    %v1348 = vpop.f32.mrb[0].mxu0
    %1349 = vmatprep.mubr.f32.mxu0 0.0
    %1350 = vmatmul.mubr.f32.gmra.mrb[0].mxu0 %v1001
    %v1351 = vpop.f32.mrb[0].mxu0
    %v1352 = vadd.f32 0.0, %v1351
    %v1353 = vpop.f32.mrb[0].mxu0
    %1354 = vmatprep.mubr.f32.mxu0 0.0
    %1355 = vmatmul.mubr.f32.gmra.mrb[0].mxu0 %v1002
    %v1356 = vpop.f32.mrb[0].mxu0
    %v1357 = vadd.f32 0.0, %v1356
    %v1358 = vpop.f32.mrb[0].mxu0
    %1359 = vmatprep.mubr.f32.mxu0 0.0
    %1360 = vmatmul.mubr.f32.gmra.mrb[0].mxu0 %v1003
    %v1361 = vpop.f32.mrb[0].mxu0
    %v1362 = vadd.f32 0.0, %v1361
    %v1363 = vpop.f32.mrb[0].mxu0
    %1364 = vmatprep.mubr.f32.mxu0 0.0
    %1365 = vmatmul.mubr.f32.gmra.mrb[0].mxu0 %v1004
    %v1366 = vpop.f32.mrb[0].mxu0
    %v1367 = vadd.f32 0.0, %v1366
    %v1368 = vpop.f32.mrb[0].mxu0
    %1369 = vmatprep.mubr.f32.mxu0 0.0
    %1370 = vmatmul.mubr.f32.gmra.mrb[0].mxu0 %v1005
    %v1371 = vpop.f32.mrb[0].mxu0
    %v1372 = vadd.f32 0.0, %v1371
    %v1373 = vpop.f32.mrb[0].mxu0
    %1374 = vmatprep.mubr.f32.mxu0 0.0
    %1375 = vmatmul.mubr.f32.gmra.mrb[0].mxu0 %v1006
    %v1376 = vpop.f32.mrb[0].mxu0
    %v1377 = vadd.f32 0.0, %v1376
    %v1378 = vpop.f32.mrb[0].mxu0
    %1379 = vmatprep.mubr.f32.mxu0 0.0
    %1380 = vmatmul.mubr.f32.gmra.mrb[0].mxu0 %v1007
    %v1381 = vpop.f32.mrb[0].mxu0
    %v1382 = vadd.f32 0.0, %v1381
    %v1383 = vpop.f32.mrb[0].mxu0
    %1384 = vmatprep.mubr.f32.mxu0 0.0
    %1385 = vmatmul.mubr.f32.gmra.mrb[0].mxu0 %v1008
    %v1386 = vpop.f32.mrb[0].mxu0
    %v1387 = vadd.f32 0.0, %v1386
    %v1388 = vpop.f32.mrb[0].mxu0
    %1389 = vmatprep.mubr.f32.mxu0 0.0
    %1390 = vmatmul.mubr.f32.gmra.mrb[0].mxu0 %v1009
    %v1391 = vpop.f32.mrb[0].mxu0
    %v1392 = vadd.f32 0.0, %v1391
    %v1393 = vpop.f32.mrb[0].mxu0
    %1394 = vmatprep.mubr.f32.mxu0 0.0
    %1395 = vmatmul.mubr.f32.gmra.mrb[0].mxu0 %v1010
    %v1396 = vpop.f32.mrb[0].mxu0
    %v1397 = vadd.f32 0.0, %v1396
    %v1398 = vpop.f32.mrb[0].mxu0
    %1399 = vmatprep.mubr.f32.mxu0 0.0
    %1400 = vmatmul.mubr.f32.gmra.mrb[0].mxu0 %v1011
    %v1401 = vpop.f32.mrb[0].mxu0
    %v1402 = vadd.f32 0.0, %v1401
    %v1403 = vpop.f32.mrb[0].mxu0
    %1404 = vmatprep.mubr.f32.mxu0 0.0
    %1405 = vmatmul.mubr.f32.gmra.mrb[0].mxu0 %v1012
    %v1406 = vpop.f32.mrb[0].mxu0
    %v1407 = vadd.f32 0.0, %v1406
    %v1408 = vpop.f32.mrb[0].mxu0
    %1409 = vmatprep.mubr.f32.mxu0 0.0
    %1410 = vmatmul.mubr.f32.gmra.mrb[0].mxu0 %v1013
    %v1411 = vpop.f32.mrb[0].mxu0
    %v1412 = vadd.f32 0.0, %v1411
    %v1413 = vpop.f32.mrb[0].mxu0
    %1414 = vmatprep.mubr.f32.mxu0 0.0
    %1415 = vmatmul.mubr.f32.gmra.mrb[0].mxu0 %v1014
    %v1416 = vpop.f32.mrb[0].mxu0
    %v1417 = vadd.f32 0.0, %v1416
    %v1418 = vpop.f32.mrb[0].mxu0
    %1419 = vmatprep.mubr.f32.mxu0 0.0
    %1420 = vmatmul.mubr.f32.gmra.mrb[0].mxu0 %v1015
    %v1421 = vpop.f32.mrb[0].mxu0
    %v1422 = vadd.f32 0.0, %v1421
    %v1423 = vpop.f32.mrb[0].mxu0
    %1424 = vmatprep.mubr.f32.mxu0 0.0
    %1425 = vmatmul.mubr.f32.gmra.mrb[0].mxu0 %v1016
    %v1426 = vpop.f32.mrb[0].mxu0
    %v1427 = vadd.f32 0.0, %v1426
    %v1428 = vpop.f32.mrb[0].mxu0
    %1429 = vmatprep.mubr.f32.mxu0 0.0
    %1430 = vmatmul.mubr.f32.gmra.mrb[0].mxu0 %v1017
    %v1431 = vpop.f32.mrb[0].mxu0
    %v1432 = vadd.f32 0.0, %v1431
    %v1433 = vpop.f32.mrb[0].mxu0
    %1434 = vmatprep.mubr.f32.mxu0 0.0
    %1435 = vmatmul.mubr.f32.gmra.mrb[0].mxu0 %v1018
    %v1436 = vpop.f32.mrb[0].mxu0
    %v1437 = vadd.f32 0.0, %v1436
    %v1438 = vpop.f32.mrb[0].mxu0
    %1439 = vmatprep.mubr.f32.mxu0 0.0
    %1440 = vmatmul.mubr.f32.gmra.mrb[0].mxu0 %v1019
    %v1441 = vpop.f32.mrb[0].mxu0
    %v1442 = vadd.f32 0.0, %v1441
    %v1443 = vpop.f32.mrb[0].mxu0
    %1444 = vmatprep.mubr.f32.mxu0 0.0
    %1445 = vmatmul.mubr.f32.gmra.mrb[0].mxu0 %v1020
    %v1446 = vpop.f32.mrb[0].mxu0
    %v1447 = vadd.f32 0.0, %v1446
    %v1448 = vpop.f32.mrb[0].mxu0
    %1449 = vmatprep.mubr.f32.mxu0 0.0
    %1450 = vmatmul.mubr.f32.gmra.mrb[0].mxu0 %v1021
    %v1451 = vpop.f32.mrb[0].mxu0
    %v1452 = vadd.f32 0.0, %v1451
    %v1453 = vpop.f32.mrb[0].mxu0
    %1454 = vmatprep.mubr.f32.mxu0 0.0
    %1455 = vmatmul.mubr.f32.gmra.mrb[0].mxu0 %v1022
    %v1456 = vpop.f32.mrb[0].mxu0
    %v1457 = vadd.f32 0.0, %v1456
    %v1458 = vpop.f32.mrb[0].mxu0
    %1459 = vmatprep.mubr.f32.mxu0 0.0
    %1460 = vmatmul.mubr.f32.gmra.mrb[0].mxu0 %v1023
    %v1461 = vpop.f32.mrb[0].mxu0
    %v1462 = vadd.f32 0.0, %v1461
    %v1463 = vpop.f32.mrb[0].mxu0
    %1464 = vmatprep.mubr.f32.mxu0 0.0
    %1465 = vmatmul.mubr.f32.gmra.mrb[0].mxu0 %v1024
    %v1466 = vpop.f32.mrb[0].mxu0
    %v1467 = vadd.f32 0.0, %v1466
    %v1468 = vpop.f32.mrb[0].mxu0
    %1469 = vmatprep.mubr.f32.mxu0 0.0
    %1470 = vmatmul.mubr.f32.gmra.mrb[0].mxu0 %v1025
    %v1471 = vpop.f32.mrb[0].mxu0
    %v1472 = vadd.f32 0.0, %v1471
    %v1473 = vpop.f32.mrb[0].mxu0
    %1474 = vmatprep.mubr.f32.mxu0 0.0
    %1475 = vmatmul.mubr.f32.gmra.mrb[0].mxu0 %v1026
    %v1476 = vpop.f32.mrb[0].mxu0
    %v1477 = vadd.f32 0.0, %v1476
    %v1478 = vpop.f32.mrb[0].mxu0
    %1479 = vmatprep.mubr.f32.mxu0 0.0
    %1480 = vmatmul.mubr.f32.gmra.mrb[0].mxu0 %v1027
    %v1481 = vpop.f32.mrb[0].mxu0
    %v1482 = vadd.f32 0.0, %v1481
    %v1483 = vpop.f32.mrb[0].mxu0
    %1484 = vmatprep.mubr.f32.mxu0 0.0
    %1485 = vmatmul.mubr.f32.gmra.mrb[0].mxu0 %v1028
    %v1486 = vpop.f32.mrb[0].mxu0
    %v1487 = vadd.f32 0.0, %v1486
    %v1488 = vpop.f32.mrb[0].mxu0
    %1489 = vmatprep.mubr.f32.mxu0 0.0
    %1490 = vmatmul.mubr.f32.gmra.mrb[0].mxu0 %v1029
    %v1491 = vpop.f32.mrb[0].mxu0
    %v1492 = vadd.f32 0.0, %v1491
    %v1493 = vpop.f32.mrb[0].mxu0
    %1494 = vmatprep.mubr.f32.mxu0 0.0
    %1495 = vmatmul.mubr.f32.gmra.mrb[0].mxu0 %v1030
    %v1496 = vpop.f32.mrb[0].mxu0
    %v1497 = vadd.f32 0.0, %v1496
    %v1498 = vpop.f32.mrb[0].mxu0
    %1499 = vmatprep.mubr.f32.mxu0 0.0
    %1500 = vmatmul.mubr.f32.gmra.mrb[0].mxu0 %v1031
    %v1501 = vpop.f32.mrb[0].mxu0
    %v1502 = vadd.f32 0.0, %v1501
    %v1503 = vpop.f32.mrb[0].mxu0
    %1504 = vmatprep.mubr.f32.mxu0 0.0
    %1505 = vmatmul.mubr.f32.gmra.mrb[0].mxu0 %v1032
    %v1506 = vpop.f32.mrb[0].mxu0
    %v1507 = vadd.f32 0.0, %v1506
    %v1508 = vpop.f32.mrb[0].mxu0
    %1509 = vmatprep.mubr.f32.mxu0 0.0
    %1510 = vmatmul.mubr.f32.gmra.mrb[0].mxu0 %v1033
    %v1511 = vpop.f32.mrb[0].mxu0
    %v1512 = vadd.f32 0.0, %v1511
    %v1513 = vpop.f32.mrb[0].mxu0
    %1514 = vmatprep.mubr.f32.mxu0 0.0
    %1515 = vmatmul.mubr.f32.gmra.mrb[0].mxu0 %v1034
    %v1516 = vpop.f32.mrb[0].mxu0
    %v1517 = vadd.f32 0.0, %v1516
    %v1518 = vpop.f32.mrb[0].mxu0
    %1519 = vmatprep.mubr.f32.mxu0 0.0
    %1520 = vmatmul.mubr.f32.gmra.mrb[0].mxu0 %v1035
    %v1521 = vpop.f32.mrb[0].mxu0
    %v1522 = vadd.f32 0.0, %v1521
    %v1523 = vpop.f32.mrb[0].mxu0
    %1524 = vmatprep.mubr.f32.mxu0 0.0
    %1525 = vmatmul.mubr.f32.gmra.mrb[0].mxu0 %v1036
    %v1526 = vpop.f32.mrb[0].mxu0
    %v1527 = vadd.f32 0.0, %v1526
    %v1528 = vpop.f32.mrb[0].mxu0
    %1529 = vmatprep.mubr.f32.mxu0 0.0
    %1530 = vmatmul.mubr.f32.gmra.mrb[0].mxu0 %v1037
    %v1531 = vpop.f32.mrb[0].mxu0
    %v1532 = vadd.f32 0.0, %v1531
    %v1533 = vpop.f32.mrb[0].mxu0
    %1534 = vmatprep.mubr.f32.mxu0 0.0
    %1535 = vmatmul.mubr.f32.gmra.mrb[0].mxu0 %v1038
    %v1536 = vpop.f32.mrb[0].mxu0
    %v1537 = vadd.f32 0.0, %v1536
    %v1538 = vpop.f32.mrb[0].mxu0
    %1539 = vmatprep.mubr.f32.mxu0 0.0
    %1540 = vmatmul.mubr.f32.gmra.mrb[0].mxu0 %v1039
    %v1541 = vpop.f32.mrb[0].mxu0
    %v1542 = vadd.f32 0.0, %v1541
    %v1543 = vpop.f32.mrb[0].mxu0
    %1544 = vmatprep.mubr.f32.mxu0 0.0
    %1545 = vmatmul.mubr.f32.gmra.mrb[0].mxu0 %v1040
    %v1546 = vpop.f32.mrb[0].mxu0
    %v1547 = vadd.f32 0.0, %v1546
    %v1548 = vpop.f32.mrb[0].mxu0
    %1549 = vmatprep.mubr.f32.mxu0 0.0
    %1550 = vmatmul.mubr.f32.gmra.mrb[0].mxu0 %v1041
    %v1551 = vpop.f32.mrb[0].mxu0
    %v1552 = vadd.f32 0.0, %v1551
    %v1553 = vpop.f32.mrb[0].mxu0
    %1554 = vmatprep.mubr.f32.mxu0 0.0
    %1555 = vmatmul.mubr.f32.gmra.mrb[0].mxu0 %v1042
    %v1556 = vpop.f32.mrb[0].mxu0
    %v1557 = vadd.f32 0.0, %v1556
    %v1558 = vpop.f32.mrb[0].mxu0
    %1559 = vmatprep.mubr.f32.mxu0 0.0
    %1560 = vmatmul.mubr.f32.gmra.mrb[0].mxu0 %v1043
    %v1561 = vpop.f32.mrb[0].mxu0
    %v1562 = vadd.f32 0.0, %v1561
    %v1563 = vpop.f32.mrb[0].mxu0
    %1564 = vmatprep.mubr.f32.mxu0 0.0
    %1565 = vmatmul.mubr.f32.gmra.mrb[0].mxu0 %v1044
    %v1566 = vpop.f32.mrb[0].mxu0
    %v1567 = vadd.f32 0.0, %v1566
    %v1568 = vpop.f32.mrb[0].mxu0
    %1569 = vmatprep.mubr.f32.mxu0 0.0
    %1570 = vmatmul.mubr.f32.gmra.mrb[0].mxu0 %v1045
    %v1571 = vpop.f32.mrb[0].mxu0
    %v1572 = vadd.f32 0.0, %v1571
    %v1573 = vpop.f32.mrb[0].mxu0
    %1574 = vmatprep.mubr.f32.mxu0 0.0
    %1575 = vmatmul.mubr.f32.gmra.mrb[0].mxu0 %v1046
    %v1576 = vpop.f32.mrb[0].mxu0
    %v1577 = vadd.f32 0.0, %v1576
    %v1578 = vpop.f32.mrb[0].mxu0
    %1579 = vmatprep.mubr.f32.mxu0 0.0
    %1580 = vmatmul.mubr.f32.gmra.mrb[0].mxu0 %v1047
    %v1581 = vpop.f32.mrb[0].mxu0
    %v1582 = vadd.f32 0.0, %v1581
    %v1583 = vpop.f32.mrb[0].mxu0
    %1584 = vmatprep.mubr.f32.mxu0 0.0
    %1585 = vmatmul.mubr.f32.gmra.mrb[0].mxu0 %v1048
    %v1586 = vpop.f32.mrb[0].mxu0
    %v1587 = vadd.f32 0.0, %v1586
    %v1588 = vpop.f32.mrb[0].mxu0
    %1589 = vmatprep.mubr.f32.mxu0 0.0
    %1590 = vmatmul.mubr.f32.gmra.mrb[0].mxu0 %v1049
    %v1591 = vpop.f32.mrb[0].mxu0
    %v1592 = vadd.f32 0.0, %v1591
    %v1593 = vpop.f32.mrb[0].mxu0
    %1594 = vmatprep.mubr.f32.mxu0 0.0
    %1595 = vmatmul.mubr.f32.gmra.mrb[0].mxu0 %v1050
    %v1596 = vpop.f32.mrb[0].mxu0
    %v1597 = vadd.f32 0.0, %v1596
    %v1598 = vpop.f32.mrb[0].mxu0
    %1599 = vmatprep.mubr.f32.mxu0 0.0
    %1600 = vmatmul.mubr.f32.gmra.mrb[0].mxu0 %v1051
    %v1601 = vpop.f32.mrb[0].mxu0
    %v1602 = vadd.f32 0.0, %v1601
    %v1603 = vpop.f32.mrb[0].mxu0
    %1604 = vmatprep.mubr.f32.mxu0 0.0
    %1605 = vmatmul.mubr.f32.gmra.mrb[0].mxu0 %v1052
    %v1606 = vpop.f32.mrb[0].mxu0
    %v1607 = vadd.f32 0.0, %v1606
    %v1608 = vpop.f32.mrb[0].mxu0
    %1609 = vmatprep.mubr.f32.mxu0 0.0
    %1610 = vmatmul.mubr.f32.gmra.mrb[0].mxu0 %v1053
    %v1611 = vpop.f32.mrb[0].mxu0
    %v1612 = vadd.f32 0.0, %v1611
    %v1613 = vpop.f32.mrb[0].mxu0
    %1614 = vmatprep.mubr.f32.mxu0 0.0
    %1615 = vmatmul.mubr.f32.gmra.mrb[0].mxu0 %v1054
    %v1616 = vpop.f32.mrb[0].mxu0
    %v1617 = vadd.f32 0.0, %v1616
    %v1618 = vpop.f32.mrb[0].mxu0
    %1619 = vmatprep.mubr.f32.mxu0 0.0
    %1620 = vmatmul.mubr.f32.gmra.mrb[0].mxu0 %v1055
    %v1621 = vpop.f32.mrb[0].mxu0
    %v1622 = vadd.f32 0.0, %v1621
    %v1623 = vpop.f32.mrb[0].mxu0
    %1624 = vmatprep.mubr.f32.mxu0 0.0
    %1625 = vmatmul.mubr.f32.gmra.mrb[0].mxu0 %v1056
    %v1626 = vpop.f32.mrb[0].mxu0
    %v1627 = vadd.f32 0.0, %v1626
    %v1628 = vpop.f32.mrb[0].mxu0
    %1629 = vmatprep.mubr.f32.mxu0 0.0
    %1630 = vmatmul.mubr.f32.gmra.mrb[0].mxu0 %v1057
    %v1631 = vpop.f32.mrb[0].mxu0
    %v1632 = vadd.f32 0.0, %v1631
    %v1633 = vpop.f32.mrb[0].mxu0
    %1634 = vmatprep.mubr.f32.mxu0 0.0
    %1635 = vmatmul.mubr.f32.gmra.mrb[0].mxu0 %v1058
    %v1636 = vpop.f32.mrb[0].mxu0
    %v1637 = vadd.f32 0.0, %v1636
    %v1638 = vpop.f32.mrb[0].mxu0
    %1639 = vmatprep.mubr.f32.mxu0 0.0
    %1640 = vmatmul.mubr.f32.gmra.mrb[0].mxu0 %v1059
    %v1641 = vpop.f32.mrb[0].mxu0
    %v1642 = vadd.f32 0.0, %v1641
    %v1643 = vpop.f32.mrb[0].mxu0
    %1644 = vmatprep.mubr.f32.mxu0 0.0
    %1645 = vmatmul.mubr.f32.gmra.mrb[0].mxu0 %v1060
    %v1646 = vpop.f32.mrb[0].mxu0
    %v1647 = vadd.f32 0.0, %v1646
    %v1648 = vpop.f32.mrb[0].mxu0
    %1649 = vmatprep.mubr.f32.mxu0 0.0
    %1650 = vmatmul.mubr.f32.gmra.mrb[0].mxu0 %v1061
    %v1651 = vpop.f32.mrb[0].mxu0
    %v1652 = vadd.f32 0.0, %v1651
    %v1653 = vpop.f32.mrb[0].mxu0
    %1654 = vmatprep.mubr.f32.mxu0 0.0
    %1655 = vmatmul.mubr.f32.gmra.mrb[0].mxu0 %v1062
    %v1656 = vpop.f32.mrb[0].mxu0
    %v1657 = vadd.f32 0.0, %v1656
    %v1658 = vpop.f32.mrb[0].mxu0
    %1659 = vmatprep.mubr.f32.mxu0 0.0
    %1660 = vmatmul.mubr.f32.gmra.mrb[0].mxu0 %v1063
    %v1661 = vpop.f32.mrb[0].mxu0
    %v1662 = vadd.f32 0.0, %v1661
    %v1663 = vpop.f32.mrb[0].mxu0
    %1664 = vmatprep.mubr.f32.mxu0 0.0
    %1665 = vmatmul.mubr.f32.gmra.mrb[0].mxu0 %v1064
    %v1666 = vpop.f32.mrb[0].mxu0
    %v1667 = vadd.f32 0.0, %v1666
    %v1668 = vpop.f32.mrb[0].mxu0
    %1669 = vmatprep.mubr.f32.mxu0 0.0
    %1670 = vmatmul.mubr.f32.gmra.mrb[0].mxu0 %v1065
    %v1671 = vpop.f32.mrb[0].mxu0
    %v1672 = vadd.f32 0.0, %v1671
    %v1673 = vpop.f32.mrb[0].mxu0
    %1674 = vmatprep.mubr.f32.mxu0 0.0
    %1675 = vmatmul.mubr.f32.gmra.mrb[0].mxu0 %v1066
    %v1676 = vpop.f32.mrb[0].mxu0
    %v1677 = vadd.f32 0.0, %v1676
    %v1678 = vpop.f32.mrb[0].mxu0
    %1679 = vmatprep.mubr.f32.mxu0 0.0
    %1680 = vmatmul.mubr.f32.gmra.mrb[0].mxu0 %v1067
    %v1681 = vpop.f32.mrb[0].mxu0
    %v1682 = vadd.f32 0.0, %v1681
    %v1683 = vpop.f32.mrb[0].mxu0
    %1684 = vmatprep.mubr.f32.mxu0 0.0
    %1685 = vmatmul.mubr.f32.gmra.mrb[0].mxu0 %v1068
    %v1686 = vpop.f32.mrb[0].mxu0
    %v1687 = vadd.f32 0.0, %v1686
    %v1688 = vpop.f32.mrb[0].mxu0
    %1689 = vmatprep.mubr.f32.mxu0 0.0
    %1690 = vmatmul.mubr.f32.gmra.mrb[0].mxu0 %v1069
    %v1691 = vpop.f32.mrb[0].mxu0
    %v1692 = vadd.f32 0.0, %v1691
    %v1693 = vpop.f32.mrb[0].mxu0
    %1694 = vmatprep.mubr.f32.mxu0 0.0
    %1695 = vmatmul.mubr.f32.gmra.mrb[0].mxu0 %v1070
    %v1696 = vpop.f32.mrb[0].mxu0
    %v1697 = vadd.f32 0.0, %v1696
    %v1698 = vpop.f32.mrb[0].mxu0
    %1699 = vmatprep.mubr.f32.mxu0 0.0
    %1700 = vmatmul.mubr.f32.gmra.mrb[0].mxu0 %v1071
    %v1701 = vpop.f32.mrb[0].mxu0
    %v1702 = vadd.f32 0.0, %v1701
    %v1703 = vpop.f32.mrb[0].mxu0
    %1704 = vmatprep.mubr.f32.mxu0 0.0
    %1705 = vmatmul.mubr.f32.gmra.mrb[0].mxu0 %v1072
    %v1706 = vpop.f32.mrb[0].mxu0
    %v1707 = vadd.f32 0.0, %v1706
    %v1708 = vpop.f32.mrb[0].mxu0
    %1709 = vmatprep.mubr.f32.mxu0 0.0
    %1710 = vmatmul.mubr.f32.gmra.mrb[0].mxu0 %v1073
    %v1711 = vpop.f32.mrb[0].mxu0
    %v1712 = vadd.f32 0.0, %v1711
    %v1713 = vpop.f32.mrb[0].mxu0
    %1714 = vmatprep.mubr.f32.mxu0 0.0
    %1715 = vmatmul.mubr.f32.gmra.mrb[0].mxu0 %v1074
    %v1716 = vpop.f32.mrb[0].mxu0
    %v1717 = vadd.f32 0.0, %v1716
    %v1718 = vpop.f32.mrb[0].mxu0
    %1719 = vmatprep.mubr.f32.mxu0 0.0
    %1720 = vmatmul.mubr.f32.gmra.mrb[0].mxu0 %v1075
    %v1721 = vpop.f32.mrb[0].mxu0
    %v1722 = vadd.f32 0.0, %v1721
    %v1723 = vpop.f32.mrb[0].mxu0
    %1724 = vmatprep.mubr.f32.mxu0 0.0
    %1725 = vmatmul.mubr.f32.gmra.mrb[0].mxu0 %v1076
    %v1726 = vpop.f32.mrb[0].mxu0
    %v1727 = vadd.f32 0.0, %v1726
    %v1728 = vpop.f32.mrb[0].mxu0
    %1729 = vmatprep.mubr.f32.mxu0 0.0
    %1730 = vmatmul.mubr.f32.gmra.mrb[0].mxu0 %v1077
    %v1731 = vpop.f32.mrb[0].mxu0
    %v1732 = vadd.f32 0.0, %v1731
    %v1733 = vpop.f32.mrb[0].mxu0
    %1734 = vmatprep.mubr.f32.mxu0 0.0
    %1735 = vmatmul.mubr.f32.gmra.mrb[0].mxu0 %v1078
    %v1736 = vpop.f32.mrb[0].mxu0
    %v1737 = vadd.f32 0.0, %v1736
    %v1738 = vpop.f32.mrb[0].mxu0
    %1739 = vmatprep.mubr.f32.mxu0 0.0
    %1740 = vmatmul.mubr.f32.gmra.mrb[0].mxu0 %v1079
    %v1741 = vpop.f32.mrb[0].mxu0
    %v1742 = vadd.f32 0.0, %v1741
    %v1743 = vpop.f32.mrb[0].mxu0
    %1744 = vmatprep.mubr.f32.mxu0 0.0
    %1745 = vmatmul.mubr.f32.gmra.mrb[0].mxu0 %v1080
    %v1746 = vpop.f32.mrb[0].mxu0
    %v1747 = vadd.f32 0.0, %v1746
    %v1748 = vpop.f32.mrb[0].mxu0
    %1749 = vmatprep.mubr.f32.mxu0 0.0
    %1750 = vmatmul.mubr.f32.gmra.mrb[0].mxu0 %v1081
    %v1751 = vpop.f32.mrb[0].mxu0
    %v1752 = vadd.f32 0.0, %v1751
    %v1753 = vpop.f32.mrb[0].mxu0
    %1754 = vmatprep.mubr.f32.mxu0 0.0
    %1755 = vmatmul.mubr.f32.gmra.mrb[0].mxu0 %v1082
    %v1756 = vpop.f32.mrb[0].mxu0
    %v1757 = vadd.f32 0.0, %v1756
    %v1758 = vpop.f32.mrb[0].mxu0
    %1759 = vmatprep.mubr.f32.mxu0 0.0
    %1760 = vmatmul.mubr.f32.gmra.mrb[0].mxu0 %v1083
    %v1761 = vpop.f32.mrb[0].mxu0
    %v1762 = vadd.f32 0.0, %v1761
    %v1763 = vpop.f32.mrb[0].mxu0
    %1764 = vmatprep.mubr.f32.mxu0 0.0
    %1765 = vmatmul.mubr.f32.gmra.mrb[0].mxu0 %v1084
    %v1766 = vpop.f32.mrb[0].mxu0
    %v1767 = vadd.f32 0.0, %v1766
    %v1768 = vpop.f32.mrb[0].mxu0
    %1769 = vmatprep.mubr.f32.mxu0 0.0
    %1770 = vmatmul.mubr.f32.gmra.mrb[0].mxu0 %v1085
    %v1771 = vpop.f32.mrb[0].mxu0
    %v1772 = vadd.f32 0.0, %v1771
    %v1773 = vpop.f32.mrb[0].mxu0
    %1774 = vmatprep.mubr.f32.mxu0 0.0
    %1775 = vmatmul.mubr.f32.gmra.mrb[0].mxu0 %v1086
    %v1776 = vpop.f32.mrb[0].mxu0
    %v1777 = vadd.f32 0.0, %v1776
    %v1778 = vpop.f32.mrb[0].mxu0
    %1779 = vmatprep.mubr.f32.mxu0 0.0
    %1780 = vmatmul.mubr.f32.gmra.mrb[0].mxu0 %v1087
    %v1781 = vpop.f32.mrb[0].mxu0
    %v1782 = vadd.f32 0.0, %v1781
    %v1783 = vpop.f32.mrb[0].mxu0
    %1784 = vmatprep.mubr.f32.mxu0 0.0
    %1785 = vmatmul.mubr.f32.gmra.mrb[0].mxu0 %v1088
    %v1786 = vpop.f32.mrb[0].mxu0
    %v1787 = vadd.f32 0.0, %v1786
    %v1788 = vpop.f32.mrb[0].mxu0
    %1789 = vmatprep.mubr.f32.mxu0 0.0
    %1790 = vmatmul.mubr.f32.gmra.mrb[0].mxu0 %v1089
    %v1791 = vpop.f32.mrb[0].mxu0
    %v1792 = vadd.f32 0.0, %v1791
    %v1793 = vpop.f32.mrb[0].mxu0
    %1794 = vmatprep.mubr.f32.mxu0 0.0
    %1795 = vmatmul.mubr.f32.gmra.mrb[0].mxu0 %v1090
    %v1796 = vpop.f32.mrb[0].mxu0
    %v1797 = vadd.f32 0.0, %v1796
    %v1798 = vpop.f32.mrb[0].mxu0
    %1799 = vmatprep.mubr.f32.mxu0 0.0
    %1800 = vmatmul.mubr.f32.gmra.mrb[0].mxu0 %v1091
    %v1801 = vpop.f32.mrb[0].mxu0
    %v1802 = vadd.f32 0.0, %v1801
    %v1803 = vpop.f32.mrb[0].mxu0
    %1804 = vmatprep.mubr.f32.mxu0 0.0
    %1805 = vmatmul.mubr.f32.gmra.mrb[0].mxu0 %v1092
    %v1806 = vpop.f32.mrb[0].mxu0
    %v1807 = vadd.f32 0.0, %v1806
    %v1808 = vpop.f32.mrb[0].mxu0
    %1809 = vmatprep.mubr.f32.mxu0 0.0
    %1810 = vmatmul.mubr.f32.gmra.mrb[0].mxu0 %v1093
    %v1811 = vpop.f32.mrb[0].mxu0
    %v1812 = vadd.f32 0.0, %v1811
    %v1813 = vpop.f32.mrb[0].mxu0
    %1814 = vdwg.mxu0
    %s1815 = sld [smem:[#allocation2]]
    %v1816 = vstv %s1815
    %v1817 = vadd.f32 %v1177, %v1816
    %v1818 = vadd.f32 %v1182, %v1816
    %v1819 = vadd.f32 %v1187, %v1816
    %v1820 = vadd.f32 %v1192, %v1816
    %v1821 = vadd.f32 %v1197, %v1816
    %v1822 = vadd.f32 %v1202, %v1816
    %v1823 = vadd.f32 %v1207, %v1816
    %v1824 = vadd.f32 %v1212, %v1816
    %v1825 = vadd.f32 %v1217, %v1816
    %v1826 = vadd.f32 %v1222, %v1816
    %v1827 = vadd.f32 %v1227, %v1816
    %v1828 = vadd.f32 %v1232, %v1816
    %v1829 = vadd.f32 %v1237, %v1816
    %v1830 = vadd.f32 %v1242, %v1816
    %v1831 = vadd.f32 %v1247, %v1816
    %v1832 = vadd.f32 %v1252, %v1816
    %v1833 = vadd.f32 %v1257, %v1816
    %v1834 = vadd.f32 %v1262, %v1816
    %v1835 = vadd.f32 %v1267, %v1816
    %v1836 = vadd.f32 %v1272, %v1816
    %v1837 = vadd.f32 %v1277, %v1816
    %v1838 = vadd.f32 %v1282, %v1816
    %v1839 = vadd.f32 %v1287, %v1816
    %v1840 = vadd.f32 %v1292, %v1816
    %v1841 = vadd.f32 %v1297, %v1816
    %v1842 = vadd.f32 %v1302, %v1816
    %v1843 = vadd.f32 %v1307, %v1816
    %v1844 = vadd.f32 %v1312, %v1816
    %v1845 = vadd.f32 %v1317, %v1816
    %v1846 = vadd.f32 %v1322, %v1816
    %v1847 = vadd.f32 %v1327, %v1816
    %v1848 = vadd.f32 %v1332, %v1816
    %v1849 = vadd.f32 %v1337, %v1816
    %v1850 = vadd.f32 %v1342, %v1816
    %v1851 = vadd.f32 %v1347, %v1816
    %v1852 = vadd.f32 %v1352, %v1816
    %v1853 = vadd.f32 %v1357, %v1816
    %v1854 = vadd.f32 %v1362, %v1816
    %v1855 = vadd.f32 %v1367, %v1816
    %v1856 = vadd.f32 %v1372, %v1816
    %v1857 = vadd.f32 %v1377, %v1816
    %v1858 = vadd.f32 %v1382, %v1816
    %v1859 = vadd.f32 %v1387, %v1816
    %v1860 = vadd.f32 %v1392, %v1816
    %v1861 = vadd.f32 %v1397, %v1816
    %v1862 = vadd.f32 %v1402, %v1816
    %v1863 = vadd.f32 %v1407, %v1816
    %v1864 = vadd.f32 %v1412, %v1816
    %v1865 = vadd.f32 %v1417, %v1816
    %v1866 = vadd.f32 %v1422, %v1816
    %v1867 = vadd.f32 %v1427, %v1816
    %v1868 = vadd.f32 %v1432, %v1816
    %v1869 = vadd.f32 %v1437, %v1816
    %v1870 = vadd.f32 %v1442, %v1816
    %v1871 = vadd.f32 %v1447, %v1816
    %v1872 = vadd.f32 %v1452, %v1816
    %v1873 = vadd.f32 %v1457, %v1816
    %v1874 = vadd.f32 %v1462, %v1816
    %v1875 = vadd.f32 %v1467, %v1816
    %v1876 = vadd.f32 %v1472, %v1816
    %v1877 = vadd.f32 %v1477, %v1816
    %v1878 = vadd.f32 %v1482, %v1816
    %v1879 = vadd.f32 %v1487, %v1816
    %v1880 = vadd.f32 %v1492, %v1816
    %v1881 = vadd.f32 %v1497, %v1816
    %v1882 = vadd.f32 %v1502, %v1816
    %v1883 = vadd.f32 %v1507, %v1816
    %v1884 = vadd.f32 %v1512, %v1816
    %v1885 = vadd.f32 %v1517, %v1816
    %v1886 = vadd.f32 %v1522, %v1816
    %v1887 = vadd.f32 %v1527, %v1816
    %v1888 = vadd.f32 %v1532, %v1816
    %v1889 = vadd.f32 %v1537, %v1816
    %v1890 = vadd.f32 %v1542, %v1816
    %v1891 = vadd.f32 %v1547, %v1816
    %v1892 = vadd.f32 %v1552, %v1816
    %v1893 = vadd.f32 %v1557, %v1816
    %v1894 = vadd.f32 %v1562, %v1816
    %v1895 = vadd.f32 %v1567, %v1816
    %v1896 = vadd.f32 %v1572, %v1816
    %v1897 = vadd.f32 %v1577, %v1816
    %v1898 = vadd.f32 %v1582, %v1816
    %v1899 = vadd.f32 %v1587, %v1816
    %v1900 = vadd.f32 %v1592, %v1816
    %v1901 = vadd.f32 %v1597, %v1816
    %v1902 = vadd.f32 %v1602, %v1816
    %v1903 = vadd.f32 %v1607, %v1816
    %v1904 = vadd.f32 %v1612, %v1816
    %v1905 = vadd.f32 %v1617, %v1816
    %v1906 = vadd.f32 %v1622, %v1816
    %v1907 = vadd.f32 %v1627, %v1816
    %v1908 = vadd.f32 %v1632, %v1816
    %v1909 = vadd.f32 %v1637, %v1816
    %v1910 = vadd.f32 %v1642, %v1816
    %v1911 = vadd.f32 %v1647, %v1816
    %v1912 = vadd.f32 %v1652, %v1816
    %v1913 = vadd.f32 %v1657, %v1816
    %v1914 = vadd.f32 %v1662, %v1816
    %v1915 = vadd.f32 %v1667, %v1816
    %v1916 = vadd.f32 %v1672, %v1816
    %v1917 = vadd.f32 %v1677, %v1816
    %v1918 = vadd.f32 %v1682, %v1816
    %v1919 = vadd.f32 %v1687, %v1816
    %v1920 = vadd.f32 %v1692, %v1816
    %v1921 = vadd.f32 %v1697, %v1816
    %v1922 = vadd.f32 %v1702, %v1816
    %v1923 = vadd.f32 %v1707, %v1816
    %v1924 = vadd.f32 %v1712, %v1816
    %v1925 = vadd.f32 %v1717, %v1816
    %v1926 = vadd.f32 %v1722, %v1816
    %v1927 = vadd.f32 %v1727, %v1816
    %v1928 = vadd.f32 %v1732, %v1816
    %v1929 = vadd.f32 %v1737, %v1816
    %v1930 = vadd.f32 %v1742, %v1816
    %v1931 = vadd.f32 %v1747, %v1816
    %v1932 = vadd.f32 %v1752, %v1816
    %v1933 = vadd.f32 %v1757, %v1816
    %v1934 = vadd.f32 %v1762, %v1816
    %v1935 = vadd.f32 %v1767, %v1816
    %v1936 = vadd.f32 %v1772, %v1816
    %v1937 = vadd.f32 %v1777, %v1816
    %v1938 = vadd.f32 %v1782, %v1816
    %v1939 = vadd.f32 %v1787, %v1816
    %v1940 = vadd.f32 %v1792, %v1816
    %v1941 = vadd.f32 %v1797, %v1816
    %v1942 = vadd.f32 %v1802, %v1816
    %v1943 = vadd.f32 %v1807, %v1816
    %v1944 = vadd.f32 %v1812, %v1816
    %v1945 = vsub.f32 0.0, %v1817
    %v1946 = vsub.f32 0.0, %v1818
    %v1947 = vsub.f32 0.0, %v1819
    %v1948 = vsub.f32 0.0, %v1820
    %v1949 = vsub.f32 0.0, %v1821
    %v1950 = vsub.f32 0.0, %v1822
    %v1951 = vsub.f32 0.0, %v1823
    %v1952 = vsub.f32 0.0, %v1824
    %v1953 = vsub.f32 0.0, %v1825
    %v1954 = vsub.f32 0.0, %v1826
    %v1955 = vsub.f32 0.0, %v1827
    %v1956 = vsub.f32 0.0, %v1828
    %v1957 = vsub.f32 0.0, %v1829
    %v1958 = vsub.f32 0.0, %v1830
    %v1959 = vsub.f32 0.0, %v1831
    %v1960 = vsub.f32 0.0, %v1832
    %v1961 = vsub.f32 0.0, %v1833
    %v1962 = vsub.f32 0.0, %v1834
    %v1963 = vsub.f32 0.0, %v1835
    %v1964 = vsub.f32 0.0, %v1836
    %v1965 = vsub.f32 0.0, %v1837
    %v1966 = vsub.f32 0.0, %v1838
    %v1967 = vsub.f32 0.0, %v1839
    %v1968 = vsub.f32 0.0, %v1840
    %v1969 = vsub.f32 0.0, %v1841
    %v1970 = vsub.f32 0.0, %v1842
    %v1971 = vsub.f32 0.0, %v1843
    %v1972 = vsub.f32 0.0, %v1844
    %v1973 = vsub.f32 0.0, %v1845
    %v1974 = vsub.f32 0.0, %v1846
    %v1975 = vsub.f32 0.0, %v1847
    %v1976 = vsub.f32 0.0, %v1848
    %v1977 = vsub.f32 0.0, %v1849
    %v1978 = vsub.f32 0.0, %v1850
    %v1979 = vsub.f32 0.0, %v1851
    %v1980 = vsub.f32 0.0, %v1852
    %v1981 = vsub.f32 0.0, %v1853
    %v1982 = vsub.f32 0.0, %v1854
    %v1983 = vsub.f32 0.0, %v1855
    %v1984 = vsub.f32 0.0, %v1856
    %v1985 = vsub.f32 0.0, %v1857
    %v1986 = vsub.f32 0.0, %v1858
    %v1987 = vsub.f32 0.0, %v1859
    %v1988 = vsub.f32 0.0, %v1860
    %v1989 = vsub.f32 0.0, %v1861
    %v1990 = vsub.f32 0.0, %v1862
    %v1991 = vsub.f32 0.0, %v1863
    %v1992 = vsub.f32 0.0, %v1864
    %v1993 = vsub.f32 0.0, %v1865
    %v1994 = vsub.f32 0.0, %v1866
    %v1995 = vsub.f32 0.0, %v1867
    %v1996 = vsub.f32 0.0, %v1868
    %v1997 = vsub.f32 0.0, %v1869
    %v1998 = vsub.f32 0.0, %v1870
    %v1999 = vsub.f32 0.0, %v1871
    %v2000 = vsub.f32 0.0, %v1872
    %v2001 = vsub.f32 0.0, %v1873
    %v2002 = vsub.f32 0.0, %v1874
    %v2003 = vsub.f32 0.0, %v1875
    %v2004 = vsub.f32 0.0, %v1876
    %v2005 = vsub.f32 0.0, %v1877
    %v2006 = vsub.f32 0.0, %v1878
    %v2007 = vsub.f32 0.0, %v1879
    %v2008 = vsub.f32 0.0, %v1880
    %v2009 = vsub.f32 0.0, %v1881
    %v2010 = vsub.f32 0.0, %v1882
    %v2011 = vsub.f32 0.0, %v1883
    %v2012 = vsub.f32 0.0, %v1884
    %v2013 = vsub.f32 0.0, %v1885
    %v2014 = vsub.f32 0.0, %v1886
    %v2015 = vsub.f32 0.0, %v1887
    %v2016 = vsub.f32 0.0, %v1888
    %v2017 = vsub.f32 0.0, %v1889
    %v2018 = vsub.f32 0.0, %v1890
    %v2019 = vsub.f32 0.0, %v1891
    %v2020 = vsub.f32 0.0, %v1892
    %v2021 = vsub.f32 0.0, %v1893
    %v2022 = vsub.f32 0.0, %v1894
    %v2023 = vsub.f32 0.0, %v1895
    %v2024 = vsub.f32 0.0, %v1896
    %v2025 = vsub.f32 0.0, %v1897
    %v2026 = vsub.f32 0.0, %v1898
    %v2027 = vsub.f32 0.0, %v1899
    %v2028 = vsub.f32 0.0, %v1900
    %v2029 = vsub.f32 0.0, %v1901
    %v2030 = vsub.f32 0.0, %v1902
    %v2031 = vsub.f32 0.0, %v1903
    %v2032 = vsub.f32 0.0, %v1904
    %v2033 = vsub.f32 0.0, %v1905
    %v2034 = vsub.f32 0.0, %v1906
    %v2035 = vsub.f32 0.0, %v1907
    %v2036 = vsub.f32 0.0, %v1908
    %v2037 = vsub.f32 0.0, %v1909
    %v2038 = vsub.f32 0.0, %v1910
    %v2039 = vsub.f32 0.0, %v1911
    %v2040 = vsub.f32 0.0, %v1912
    %v2041 = vsub.f32 0.0, %v1913
    %v2042 = vsub.f32 0.0, %v1914
    %v2043 = vsub.f32 0.0, %v1915
    %v2044 = vsub.f32 0.0, %v1916
    %v2045 = vsub.f32 0.0, %v1917
    %v2046 = vsub.f32 0.0, %v1918
    %v2047 = vsub.f32 0.0, %v1919
    %v2048 = vsub.f32 0.0, %v1920
    %v2049 = vsub.f32 0.0, %v1921
    %v2050 = vsub.f32 0.0, %v1922
    %v2051 = vsub.f32 0.0, %v1923
    %v2052 = vsub.f32 0.0, %v1924
    %v2053 = vsub.f32 0.0, %v1925
    %v2054 = vsub.f32 0.0, %v1926
    %v2055 = vsub.f32 0.0, %v1927
    %v2056 = vsub.f32 0.0, %v1928
    %v2057 = vsub.f32 0.0, %v1929
    %v2058 = vsub.f32 0.0, %v1930
    %v2059 = vsub.f32 0.0, %v1931
    %v2060 = vsub.f32 0.0, %v1932
    %v2061 = vsub.f32 0.0, %v1933
    %v2062 = vsub.f32 0.0, %v1934
    %v2063 = vsub.f32 0.0, %v1935
    %v2064 = vsub.f32 0.0, %v1936
    %v2065 = vsub.f32 0.0, %v1937
    %v2066 = vsub.f32 0.0, %v1938
    %v2067 = vsub.f32 0.0, %v1939
    %v2068 = vsub.f32 0.0, %v1940
    %v2069 = vsub.f32 0.0, %v1941
    %v2070 = vsub.f32 0.0, %v1942
    %v2071 = vsub.f32 0.0, %v1943
    %v2072 = vsub.f32 0.0, %v1944
    %v2073 = vmul.f32 %v1945, 1.442695
    %v2074 = vpow.pop %v2073
    %v2075 = vmul.f32 %v1946, 1.442695
    %v2076 = vpow.pop %v2075
    %v2077 = vmul.f32 %v1947, 1.442695
    %v2078 = vpow.pop %v2077
    %v2079 = vmul.f32 %v1948, 1.442695
    %v2080 = vpow.pop %v2079
    %v2081 = vmul.f32 %v1949, 1.442695
    %v2082 = vpow.pop %v2081
    %v2083 = vmul.f32 %v1950, 1.442695
    %v2084 = vpow.pop %v2083
    %v2085 = vmul.f32 %v1951, 1.442695
    %v2086 = vpow.pop %v2085
    %v2087 = vmul.f32 %v1952, 1.442695
    %v2088 = vpow.pop %v2087
    %v2089 = vmul.f32 %v1953, 1.442695
    %v2090 = vpow.pop %v2089
    %v2091 = vmul.f32 %v1954, 1.442695
    %v2092 = vpow.pop %v2091
    %v2093 = vmul.f32 %v1955, 1.442695
    %v2094 = vpow.pop %v2093
    %v2095 = vmul.f32 %v1956, 1.442695
    %v2096 = vpow.pop %v2095
    %v2097 = vmul.f32 %v1957, 1.442695
    %v2098 = vpow.pop %v2097
    %v2099 = vmul.f32 %v1958, 1.442695
    %v2100 = vpow.pop %v2099
    %v2101 = vmul.f32 %v1959, 1.442695
    %v2102 = vpow.pop %v2101
    %v2103 = vmul.f32 %v1960, 1.442695
    %v2104 = vpow.pop %v2103
    %v2105 = vmul.f32 %v1961, 1.442695
    %v2106 = vpow.pop %v2105
    %v2107 = vmul.f32 %v1962, 1.442695
    %v2108 = vpow.pop %v2107
    %v2109 = vmul.f32 %v1963, 1.442695
    %v2110 = vpow.pop %v2109
    %v2111 = vmul.f32 %v1964, 1.442695
    %v2112 = vpow.pop %v2111
    %v2113 = vmul.f32 %v1965, 1.442695
    %v2114 = vpow.pop %v2113
    %v2115 = vmul.f32 %v1966, 1.442695
    %v2116 = vpow.pop %v2115
    %v2117 = vmul.f32 %v1967, 1.442695
    %v2118 = vpow.pop %v2117
    %v2119 = vmul.f32 %v1968, 1.442695
    %v2120 = vpow.pop %v2119
    %v2121 = vmul.f32 %v1969, 1.442695
    %v2122 = vpow.pop %v2121
    %v2123 = vmul.f32 %v1970, 1.442695
    %v2124 = vpow.pop %v2123
    %v2125 = vmul.f32 %v1971, 1.442695
    %v2126 = vpow.pop %v2125
    %v2127 = vmul.f32 %v1972, 1.442695
    %v2128 = vpow.pop %v2127
    %v2129 = vmul.f32 %v1973, 1.442695
    %v2130 = vpow.pop %v2129
    %v2131 = vmul.f32 %v1974, 1.442695
    %v2132 = vpow.pop %v2131
    %v2133 = vmul.f32 %v1975, 1.442695
    %v2134 = vpow.pop %v2133
    %v2135 = vmul.f32 %v1976, 1.442695
    %v2136 = vpow.pop %v2135
    %v2137 = vmul.f32 %v1977, 1.442695
    %v2138 = vpow.pop %v2137
    %v2139 = vmul.f32 %v1978, 1.442695
    %v2140 = vpow.pop %v2139
    %v2141 = vmul.f32 %v1979, 1.442695
    %v2142 = vpow.pop %v2141
    %v2143 = vmul.f32 %v1980, 1.442695
    %v2144 = vpow.pop %v2143
    %v2145 = vmul.f32 %v1981, 1.442695
    %v2146 = vpow.pop %v2145
    %v2147 = vmul.f32 %v1982, 1.442695
    %v2148 = vpow.pop %v2147
    %v2149 = vmul.f32 %v1983, 1.442695
    %v2150 = vpow.pop %v2149
    %v2151 = vmul.f32 %v1984, 1.442695
    %v2152 = vpow.pop %v2151
    %v2153 = vmul.f32 %v1985, 1.442695
    %v2154 = vpow.pop %v2153
    %v2155 = vmul.f32 %v1986, 1.442695
    %v2156 = vpow.pop %v2155
    %v2157 = vmul.f32 %v1987, 1.442695
    %v2158 = vpow.pop %v2157
    %v2159 = vmul.f32 %v1988, 1.442695
    %v2160 = vpow.pop %v2159
    %v2161 = vmul.f32 %v1989, 1.442695
    %v2162 = vpow.pop %v2161
    %v2163 = vmul.f32 %v1990, 1.442695
    %v2164 = vpow.pop %v2163
    %v2165 = vmul.f32 %v1991, 1.442695
    %v2166 = vpow.pop %v2165
    %v2167 = vmul.f32 %v1992, 1.442695
    %v2168 = vpow.pop %v2167
    %v2169 = vmul.f32 %v1993, 1.442695
    %v2170 = vpow.pop %v2169
    %v2171 = vmul.f32 %v1994, 1.442695
    %v2172 = vpow.pop %v2171
    %v2173 = vmul.f32 %v1995, 1.442695
    %v2174 = vpow.pop %v2173
    %v2175 = vmul.f32 %v1996, 1.442695
    %v2176 = vpow.pop %v2175
    %v2177 = vmul.f32 %v1997, 1.442695
    %v2178 = vpow.pop %v2177
    %v2179 = vmul.f32 %v1998, 1.442695
    %v2180 = vpow.pop %v2179
    %v2181 = vmul.f32 %v1999, 1.442695
    %v2182 = vpow.pop %v2181
    %v2183 = vmul.f32 %v2000, 1.442695
    %v2184 = vpow.pop %v2183
    %v2185 = vmul.f32 %v2001, 1.442695
    %v2186 = vpow.pop %v2185
    %v2187 = vmul.f32 %v2002, 1.442695
    %v2188 = vpow.pop %v2187
    %v2189 = vmul.f32 %v2003, 1.442695
    %v2190 = vpow.pop %v2189
    %v2191 = vmul.f32 %v2004, 1.442695
    %v2192 = vpow.pop %v2191
    %v2193 = vmul.f32 %v2005, 1.442695
    %v2194 = vpow.pop %v2193
    %v2195 = vmul.f32 %v2006, 1.442695
    %v2196 = vpow.pop %v2195
    %v2197 = vmul.f32 %v2007, 1.442695
    %v2198 = vpow.pop %v2197
    %v2199 = vmul.f32 %v2008, 1.442695
    %v2200 = vpow.pop %v2199
    %v2201 = vmul.f32 %v2009, 1.442695
    %v2202 = vpow.pop %v2201
    %v2203 = vmul.f32 %v2010, 1.442695
    %v2204 = vpow.pop %v2203
    %v2205 = vmul.f32 %v2011, 1.442695
    %v2206 = vpow.pop %v2205
    %v2207 = vmul.f32 %v2012, 1.442695
    %v2208 = vpow.pop %v2207
    %v2209 = vmul.f32 %v2013, 1.442695
    %v2210 = vpow.pop %v2209
    %v2211 = vmul.f32 %v2014, 1.442695
    %v2212 = vpow.pop %v2211
    %v2213 = vmul.f32 %v2015, 1.442695
    %v2214 = vpow.pop %v2213
    %v2215 = vmul.f32 %v2016, 1.442695
    %v2216 = vpow.pop %v2215
    %v2217 = vmul.f32 %v2017, 1.442695
    %v2218 = vpow.pop %v2217
    %v2219 = vmul.f32 %v2018, 1.442695
    %v2220 = vpow.pop %v2219
    %v2221 = vmul.f32 %v2019, 1.442695
    %v2222 = vpow.pop %v2221
    %v2223 = vmul.f32 %v2020, 1.442695
    %v2224 = vpow.pop %v2223
    %v2225 = vmul.f32 %v2021, 1.442695
    %v2226 = vpow.pop %v2225
    %v2227 = vmul.f32 %v2022, 1.442695
    %v2228 = vpow.pop %v2227
    %v2229 = vmul.f32 %v2023, 1.442695
    %v2230 = vpow.pop %v2229
    %v2231 = vmul.f32 %v2024, 1.442695
    %v2232 = vpow.pop %v2231
    %v2233 = vmul.f32 %v2025, 1.442695
    %v2234 = vpow.pop %v2233
    %v2235 = vmul.f32 %v2026, 1.442695
    %v2236 = vpow.pop %v2235
    %v2237 = vmul.f32 %v2027, 1.442695
    %v2238 = vpow.pop %v2237
    %v2239 = vmul.f32 %v2028, 1.442695
    %v2240 = vpow.pop %v2239
    %v2241 = vmul.f32 %v2029, 1.442695
    %v2242 = vpow.pop %v2241
    %v2243 = vmul.f32 %v2030, 1.442695
    %v2244 = vpow.pop %v2243
    %v2245 = vmul.f32 %v2031, 1.442695
    %v2246 = vpow.pop %v2245
    %v2247 = vmul.f32 %v2032, 1.442695
    %v2248 = vpow.pop %v2247
    %v2249 = vmul.f32 %v2033, 1.442695
    %v2250 = vpow.pop %v2249
    %v2251 = vmul.f32 %v2034, 1.442695
    %v2252 = vpow.pop %v2251
    %v2253 = vmul.f32 %v2035, 1.442695
    %v2254 = vpow.pop %v2253
    %v2255 = vmul.f32 %v2036, 1.442695
    %v2256 = vpow.pop %v2255
    %v2257 = vmul.f32 %v2037, 1.442695
    %v2258 = vpow.pop %v2257
    %v2259 = vmul.f32 %v2038, 1.442695
    %v2260 = vpow.pop %v2259
    %v2261 = vmul.f32 %v2039, 1.442695
    %v2262 = vpow.pop %v2261
    %v2263 = vmul.f32 %v2040, 1.442695
    %v2264 = vpow.pop %v2263
    %v2265 = vmul.f32 %v2041, 1.442695
    %v2266 = vpow.pop %v2265
    %v2267 = vmul.f32 %v2042, 1.442695
    %v2268 = vpow.pop %v2267
    %v2269 = vmul.f32 %v2043, 1.442695
    %v2270 = vpow.pop %v2269
    %v2271 = vmul.f32 %v2044, 1.442695
    %v2272 = vpow.pop %v2271
    %v2273 = vmul.f32 %v2045, 1.442695
    %v2274 = vpow.pop %v2273
    %v2275 = vmul.f32 %v2046, 1.442695
    %v2276 = vpow.pop %v2275
    %v2277 = vmul.f32 %v2047, 1.442695
    %v2278 = vpow.pop %v2277
    %v2279 = vmul.f32 %v2048, 1.442695
    %v2280 = vpow.pop %v2279
    %v2281 = vmul.f32 %v2049, 1.442695
    %v2282 = vpow.pop %v2281
    %v2283 = vmul.f32 %v2050, 1.442695
    %v2284 = vpow.pop %v2283
    %v2285 = vmul.f32 %v2051, 1.442695
    %v2286 = vpow.pop %v2285
    %v2287 = vmul.f32 %v2052, 1.442695
    %v2288 = vpow.pop %v2287
    %v2289 = vmul.f32 %v2053, 1.442695
    %v2290 = vpow.pop %v2289
    %v2291 = vmul.f32 %v2054, 1.442695
    %v2292 = vpow.pop %v2291
    %v2293 = vmul.f32 %v2055, 1.442695
    %v2294 = vpow.pop %v2293
    %v2295 = vmul.f32 %v2056, 1.442695
    %v2296 = vpow.pop %v2295
    %v2297 = vmul.f32 %v2057, 1.442695
    %v2298 = vpow.pop %v2297
    %v2299 = vmul.f32 %v2058, 1.442695
    %v2300 = vpow.pop %v2299
    %v2301 = vmul.f32 %v2059, 1.442695
    %v2302 = vpow.pop %v2301
    %v2303 = vmul.f32 %v2060, 1.442695
    %v2304 = vpow.pop %v2303
    %v2305 = vmul.f32 %v2061, 1.442695
    %v2306 = vpow.pop %v2305
    %v2307 = vmul.f32 %v2062, 1.442695
    %v2308 = vpow.pop %v2307
    %v2309 = vmul.f32 %v2063, 1.442695
    %v2310 = vpow.pop %v2309
    %v2311 = vmul.f32 %v2064, 1.442695
    %v2312 = vpow.pop %v2311
    %v2313 = vmul.f32 %v2065, 1.442695
    %v2314 = vpow.pop %v2313
    %v2315 = vmul.f32 %v2066, 1.442695
    %v2316 = vpow.pop %v2315
    %v2317 = vmul.f32 %v2067, 1.442695
    %v2318 = vpow.pop %v2317
    %v2319 = vmul.f32 %v2068, 1.442695
    %v2320 = vpow.pop %v2319
    %v2321 = vmul.f32 %v2069, 1.442695
    %v2322 = vpow.pop %v2321
    %v2323 = vmul.f32 %v2070, 1.442695
    %v2324 = vpow.pop %v2323
    %v2325 = vmul.f32 %v2071, 1.442695
    %v2326 = vpow.pop %v2325
    %v2327 = vmul.f32 %v2072, 1.442695
    %v2328 = vpow.pop %v2327
    %v2329 = vadd.f32 %v2074, 1.0
    %v2330 = vadd.f32 %v2076, 1.0
    %v2331 = vadd.f32 %v2078, 1.0
    %v2332 = vadd.f32 %v2080, 1.0
    %v2333 = vadd.f32 %v2082, 1.0
    %v2334 = vadd.f32 %v2084, 1.0
    %v2335 = vadd.f32 %v2086, 1.0
    %v2336 = vadd.f32 %v2088, 1.0
    %v2337 = vadd.f32 %v2090, 1.0
    %v2338 = vadd.f32 %v2092, 1.0
    %v2339 = vadd.f32 %v2094, 1.0
    %v2340 = vadd.f32 %v2096, 1.0
    %v2341 = vadd.f32 %v2098, 1.0
    %v2342 = vadd.f32 %v2100, 1.0
    %v2343 = vadd.f32 %v2102, 1.0
    %v2344 = vadd.f32 %v2104, 1.0
    %v2345 = vadd.f32 %v2106, 1.0
    %v2346 = vadd.f32 %v2108, 1.0
    %v2347 = vadd.f32 %v2110, 1.0
    %v2348 = vadd.f32 %v2112, 1.0
    %v2349 = vadd.f32 %v2114, 1.0
    %v2350 = vadd.f32 %v2116, 1.0
    %v2351 = vadd.f32 %v2118, 1.0
    %v2352 = vadd.f32 %v2120, 1.0
    %v2353 = vadd.f32 %v2122, 1.0
    %v2354 = vadd.f32 %v2124, 1.0
    %v2355 = vadd.f32 %v2126, 1.0
    %v2356 = vadd.f32 %v2128, 1.0
    %v2357 = vadd.f32 %v2130, 1.0
    %v2358 = vadd.f32 %v2132, 1.0
    %v2359 = vadd.f32 %v2134, 1.0
    %v2360 = vadd.f32 %v2136, 1.0
    %v2361 = vadd.f32 %v2138, 1.0
    %v2362 = vadd.f32 %v2140, 1.0
    %v2363 = vadd.f32 %v2142, 1.0
    %v2364 = vadd.f32 %v2144, 1.0
    %v2365 = vadd.f32 %v2146, 1.0
    %v2366 = vadd.f32 %v2148, 1.0
    %v2367 = vadd.f32 %v2150, 1.0
    %v2368 = vadd.f32 %v2152, 1.0
    %v2369 = vadd.f32 %v2154, 1.0
    %v2370 = vadd.f32 %v2156, 1.0
    %v2371 = vadd.f32 %v2158, 1.0
    %v2372 = vadd.f32 %v2160, 1.0
    %v2373 = vadd.f32 %v2162, 1.0
    %v2374 = vadd.f32 %v2164, 1.0
    %v2375 = vadd.f32 %v2166, 1.0
    %v2376 = vadd.f32 %v2168, 1.0
    %v2377 = vadd.f32 %v2170, 1.0
    %v2378 = vadd.f32 %v2172, 1.0
    %v2379 = vadd.f32 %v2174, 1.0
    %v2380 = vadd.f32 %v2176, 1.0
    %v2381 = vadd.f32 %v2178, 1.0
    %v2382 = vadd.f32 %v2180, 1.0
    %v2383 = vadd.f32 %v2182, 1.0
    %v2384 = vadd.f32 %v2184, 1.0
    %v2385 = vadd.f32 %v2186, 1.0
    %v2386 = vadd.f32 %v2188, 1.0
    %v2387 = vadd.f32 %v2190, 1.0
    %v2388 = vadd.f32 %v2192, 1.0
    %v2389 = vadd.f32 %v2194, 1.0
    %v2390 = vadd.f32 %v2196, 1.0
    %v2391 = vadd.f32 %v2198, 1.0
    %v2392 = vadd.f32 %v2200, 1.0
    %v2393 = vadd.f32 %v2202, 1.0
    %v2394 = vadd.f32 %v2204, 1.0
    %v2395 = vadd.f32 %v2206, 1.0
    %v2396 = vadd.f32 %v2208, 1.0
    %v2397 = vadd.f32 %v2210, 1.0
    %v2398 = vadd.f32 %v2212, 1.0
    %v2399 = vadd.f32 %v2214, 1.0
    %v2400 = vadd.f32 %v2216, 1.0
    %v2401 = vadd.f32 %v2218, 1.0
    %v2402 = vadd.f32 %v2220, 1.0
    %v2403 = vadd.f32 %v2222, 1.0
    %v2404 = vadd.f32 %v2224, 1.0
    %v2405 = vadd.f32 %v2226, 1.0
    %v2406 = vadd.f32 %v2228, 1.0
    %v2407 = vadd.f32 %v2230, 1.0
    %v2408 = vadd.f32 %v2232, 1.0
    %v2409 = vadd.f32 %v2234, 1.0
    %v2410 = vadd.f32 %v2236, 1.0
    %v2411 = vadd.f32 %v2238, 1.0
    %v2412 = vadd.f32 %v2240, 1.0
    %v2413 = vadd.f32 %v2242, 1.0
    %v2414 = vadd.f32 %v2244, 1.0
    %v2415 = vadd.f32 %v2246, 1.0
    %v2416 = vadd.f32 %v2248, 1.0
    %v2417 = vadd.f32 %v2250, 1.0
    %v2418 = vadd.f32 %v2252, 1.0
    %v2419 = vadd.f32 %v2254, 1.0
    %v2420 = vadd.f32 %v2256, 1.0
    %v2421 = vadd.f32 %v2258, 1.0
    %v2422 = vadd.f32 %v2260, 1.0
    %v2423 = vadd.f32 %v2262, 1.0
    %v2424 = vadd.f32 %v2264, 1.0
    %v2425 = vadd.f32 %v2266, 1.0
    %v2426 = vadd.f32 %v2268, 1.0
    %v2427 = vadd.f32 %v2270, 1.0
    %v2428 = vadd.f32 %v2272, 1.0
    %v2429 = vadd.f32 %v2274, 1.0
    %v2430 = vadd.f32 %v2276, 1.0
    %v2431 = vadd.f32 %v2278, 1.0
    %v2432 = vadd.f32 %v2280, 1.0
    %v2433 = vadd.f32 %v2282, 1.0
    %v2434 = vadd.f32 %v2284, 1.0
    %v2435 = vadd.f32 %v2286, 1.0
    %v2436 = vadd.f32 %v2288, 1.0
    %v2437 = vadd.f32 %v2290, 1.0
    %v2438 = vadd.f32 %v2292, 1.0
    %v2439 = vadd.f32 %v2294, 1.0
    %v2440 = vadd.f32 %v2296, 1.0
    %v2441 = vadd.f32 %v2298, 1.0
    %v2442 = vadd.f32 %v2300, 1.0
    %v2443 = vadd.f32 %v2302, 1.0
    %v2444 = vadd.f32 %v2304, 1.0
    %v2445 = vadd.f32 %v2306, 1.0
    %v2446 = vadd.f32 %v2308, 1.0
    %v2447 = vadd.f32 %v2310, 1.0
    %v2448 = vadd.f32 %v2312, 1.0
    %v2449 = vadd.f32 %v2314, 1.0
    %v2450 = vadd.f32 %v2316, 1.0
    %v2451 = vadd.f32 %v2318, 1.0
    %v2452 = vadd.f32 %v2320, 1.0
    %v2453 = vadd.f32 %v2322, 1.0
    %v2454 = vadd.f32 %v2324, 1.0
    %v2455 = vadd.f32 %v2326, 1.0
    %v2456 = vadd.f32 %v2328, 1.0
    %v2457 = vrcp.pop %v2329
    %v2458 = vrcp.pop %v2330
    %v2459 = vrcp.pop %v2331
    %v2460 = vrcp.pop %v2332
    %v2461 = vrcp.pop %v2333
    %v2462 = vrcp.pop %v2334
    %v2463 = vrcp.pop %v2335
    %v2464 = vrcp.pop %v2336
    %v2465 = vrcp.pop %v2337
    %v2466 = vrcp.pop %v2338
    %v2467 = vrcp.pop %v2339
    %v2468 = vrcp.pop %v2340
    %v2469 = vrcp.pop %v2341
    %v2470 = vrcp.pop %v2342
    %v2471 = vrcp.pop %v2343
    %v2472 = vrcp.pop %v2344
    %v2473 = vrcp.pop %v2345
    %v2474 = vrcp.pop %v2346
    %v2475 = vrcp.pop %v2347
    %v2476 = vrcp.pop %v2348
    %v2477 = vrcp.pop %v2349
    %v2478 = vrcp.pop %v2350
    %v2479 = vrcp.pop %v2351
    %v2480 = vrcp.pop %v2352
    %v2481 = vrcp.pop %v2353
    %v2482 = vrcp.pop %v2354
    %v2483 = vrcp.pop %v2355
    %v2484 = vrcp.pop %v2356
    %v2485 = vrcp.pop %v2357
    %v2486 = vrcp.pop %v2358
    %v2487 = vrcp.pop %v2359
    %v2488 = vrcp.pop %v2360
    %v2489 = vrcp.pop %v2361
    %v2490 = vrcp.pop %v2362
    %v2491 = vrcp.pop %v2363
    %v2492 = vrcp.pop %v2364
    %v2493 = vrcp.pop %v2365
    %v2494 = vrcp.pop %v2366
    %v2495 = vrcp.pop %v2367
    %v2496 = vrcp.pop %v2368
    %v2497 = vrcp.pop %v2369
    %v2498 = vrcp.pop %v2370
    %v2499 = vrcp.pop %v2371
    %v2500 = vrcp.pop %v2372
    %v2501 = vrcp.pop %v2373
    %v2502 = vrcp.pop %v2374
    %v2503 = vrcp.pop %v2375
    %v2504 = vrcp.pop %v2376
    %v2505 = vrcp.pop %v2377
    %v2506 = vrcp.pop %v2378
    %v2507 = vrcp.pop %v2379
    %v2508 = vrcp.pop %v2380
    %v2509 = vrcp.pop %v2381
    %v2510 = vrcp.pop %v2382
    %v2511 = vrcp.pop %v2383
    %v2512 = vrcp.pop %v2384
    %v2513 = vrcp.pop %v2385
    %v2514 = vrcp.pop %v2386
    %v2515 = vrcp.pop %v2387
    %v2516 = vrcp.pop %v2388
    %v2517 = vrcp.pop %v2389
    %v2518 = vrcp.pop %v2390
    %v2519 = vrcp.pop %v2391
    %v2520 = vrcp.pop %v2392
    %v2521 = vrcp.pop %v2393
    %v2522 = vrcp.pop %v2394
    %v2523 = vrcp.pop %v2395
    %v2524 = vrcp.pop %v2396
    %v2525 = vrcp.pop %v2397
    %v2526 = vrcp.pop %v2398
    %v2527 = vrcp.pop %v2399
    %v2528 = vrcp.pop %v2400
    %v2529 = vrcp.pop %v2401
    %v2530 = vrcp.pop %v2402
    %v2531 = vrcp.pop %v2403
    %v2532 = vrcp.pop %v2404
    %v2533 = vrcp.pop %v2405
    %v2534 = vrcp.pop %v2406
    %v2535 = vrcp.pop %v2407
    %v2536 = vrcp.pop %v2408
    %v2537 = vrcp.pop %v2409
    %v2538 = vrcp.pop %v2410
    %v2539 = vrcp.pop %v2411
    %v2540 = vrcp.pop %v2412
    %v2541 = vrcp.pop %v2413
    %v2542 = vrcp.pop %v2414
    %v2543 = vrcp.pop %v2415
    %v2544 = vrcp.pop %v2416
    %v2545 = vrcp.pop %v2417
    %v2546 = vrcp.pop %v2418
    %v2547 = vrcp.pop %v2419
    %v2548 = vrcp.pop %v2420
    %v2549 = vrcp.pop %v2421
    %v2550 = vrcp.pop %v2422
    %v2551 = vrcp.pop %v2423
    %v2552 = vrcp.pop %v2424
    %v2553 = vrcp.pop %v2425
    %v2554 = vrcp.pop %v2426
    %v2555 = vrcp.pop %v2427
    %v2556 = vrcp.pop %v2428
    %v2557 = vrcp.pop %v2429
    %v2558 = vrcp.pop %v2430
    %v2559 = vrcp.pop %v2431
    %v2560 = vrcp.pop %v2432
    %v2561 = vrcp.pop %v2433
    %v2562 = vrcp.pop %v2434
    %v2563 = vrcp.pop %v2435
    %v2564 = vrcp.pop %v2436
    %v2565 = vrcp.pop %v2437
    %v2566 = vrcp.pop %v2438
    %v2567 = vrcp.pop %v2439
    %v2568 = vrcp.pop %v2440
    %v2569 = vrcp.pop %v2441
    %v2570 = vrcp.pop %v2442
    %v2571 = vrcp.pop %v2443
    %v2572 = vrcp.pop %v2444
    %v2573 = vrcp.pop %v2445
    %v2574 = vrcp.pop %v2446
    %v2575 = vrcp.pop %v2447
    %v2576 = vrcp.pop %v2448
    %v2577 = vrcp.pop %v2449
    %v2578 = vrcp.pop %v2450
    %v2579 = vrcp.pop %v2451
    %v2580 = vrcp.pop %v2452
    %v2581 = vrcp.pop %v2453
    %v2582 = vrcp.pop %v2454
    %v2583 = vrcp.pop %v2455
    %v2584 = vrcp.pop %v2456
    %2713 = vset.pattern.permute.xlu0 0
    %2714 = vperm.xlu0 %2713, %v2457
    %v2715 = vpop.permute.xlu0 %2714
    %2716 = vset.pattern.permute.xlu0 0
    %2717 = vperm.xlu0 %2716, %v2458
    %v2718 = vpop.permute.xlu0 %2717
    %2719 = vset.pattern.permute.xlu0 0
    %2720 = vperm.xlu0 %2719, %v2459
    %v2721 = vpop.permute.xlu0 %2720
    %2722 = vset.pattern.permute.xlu0 0
    %2723 = vperm.xlu0 %2722, %v2460
    %v2724 = vpop.permute.xlu0 %2723
    %2725 = vset.pattern.permute.xlu0 0
    %2726 = vperm.xlu0 %2725, %v2461
    %v2727 = vpop.permute.xlu0 %2726
    %2728 = vset.pattern.permute.xlu0 0
    %2729 = vperm.xlu0 %2728, %v2462
    %v2730 = vpop.permute.xlu0 %2729
    %2731 = vset.pattern.permute.xlu0 0
    %2732 = vperm.xlu0 %2731, %v2463
    %v2733 = vpop.permute.xlu0 %2732
    %2734 = vset.pattern.permute.xlu0 0
    %2735 = vperm.xlu0 %2734, %v2464
    %v2736 = vpop.permute.xlu0 %2735
    %2737 = vset.pattern.permute.xlu0 0
    %2738 = vperm.xlu0 %2737, %v2465
    %v2739 = vpop.permute.xlu0 %2738
    %2740 = vset.pattern.permute.xlu0 0
    %2741 = vperm.xlu0 %2740, %v2466
    %v2742 = vpop.permute.xlu0 %2741
    %2743 = vset.pattern.permute.xlu0 0
    %2744 = vperm.xlu0 %2743, %v2467
    %v2745 = vpop.permute.xlu0 %2744
    %2746 = vset.pattern.permute.xlu0 0
    %2747 = vperm.xlu0 %2746, %v2468
    %v2748 = vpop.permute.xlu0 %2747
    %2749 = vset.pattern.permute.xlu0 0
    %2750 = vperm.xlu0 %2749, %v2469
    %v2751 = vpop.permute.xlu0 %2750
    %2752 = vset.pattern.permute.xlu0 0
    %2753 = vperm.xlu0 %2752, %v2470
    %v2754 = vpop.permute.xlu0 %2753
    %2755 = vset.pattern.permute.xlu0 0
    %2756 = vperm.xlu0 %2755, %v2471
    %v2757 = vpop.permute.xlu0 %2756
    %2758 = vset.pattern.permute.xlu0 0
    %2759 = vperm.xlu0 %2758, %v2472
    %v2760 = vpop.permute.xlu0 %2759
    %2761 = vset.pattern.permute.xlu0 0
    %2762 = vperm.xlu0 %2761, %v2473
    %v2763 = vpop.permute.xlu0 %2762
    %2764 = vset.pattern.permute.xlu0 0
    %2765 = vperm.xlu0 %2764, %v2474
    %v2766 = vpop.permute.xlu0 %2765
    %2767 = vset.pattern.permute.xlu0 0
    %2768 = vperm.xlu0 %2767, %v2475
    %v2769 = vpop.permute.xlu0 %2768
    %2770 = vset.pattern.permute.xlu0 0
    %2771 = vperm.xlu0 %2770, %v2476
    %v2772 = vpop.permute.xlu0 %2771
    %2773 = vset.pattern.permute.xlu0 0
    %2774 = vperm.xlu0 %2773, %v2477
    %v2775 = vpop.permute.xlu0 %2774
    %2776 = vset.pattern.permute.xlu0 0
    %2777 = vperm.xlu0 %2776, %v2478
    %v2778 = vpop.permute.xlu0 %2777
    %2779 = vset.pattern.permute.xlu0 0
    %2780 = vperm.xlu0 %2779, %v2479
    %v2781 = vpop.permute.xlu0 %2780
    %2782 = vset.pattern.permute.xlu0 0
    %2783 = vperm.xlu0 %2782, %v2480
    %v2784 = vpop.permute.xlu0 %2783
    %2785 = vset.pattern.permute.xlu0 0
    %2786 = vperm.xlu0 %2785, %v2481
    %v2787 = vpop.permute.xlu0 %2786
    %2788 = vset.pattern.permute.xlu0 0
    %2789 = vperm.xlu0 %2788, %v2482
    %v2790 = vpop.permute.xlu0 %2789
    %2791 = vset.pattern.permute.xlu0 0
    %2792 = vperm.xlu0 %2791, %v2483
    %v2793 = vpop.permute.xlu0 %2792
    %2794 = vset.pattern.permute.xlu0 0
    %2795 = vperm.xlu0 %2794, %v2484
    %v2796 = vpop.permute.xlu0 %2795
    %2797 = vset.pattern.permute.xlu0 0
    %2798 = vperm.xlu0 %2797, %v2485
    %v2799 = vpop.permute.xlu0 %2798
    %2800 = vset.pattern.permute.xlu0 0
    %2801 = vperm.xlu0 %2800, %v2486
    %v2802 = vpop.permute.xlu0 %2801
    %2803 = vset.pattern.permute.xlu0 0
    %2804 = vperm.xlu0 %2803, %v2487
    %v2805 = vpop.permute.xlu0 %2804
    %2806 = vset.pattern.permute.xlu0 0
    %2807 = vperm.xlu0 %2806, %v2488
    %v2808 = vpop.permute.xlu0 %2807
    %2809 = vset.pattern.permute.xlu0 0
    %2810 = vperm.xlu0 %2809, %v2489
    %v2811 = vpop.permute.xlu0 %2810
    %2812 = vset.pattern.permute.xlu0 0
    %2813 = vperm.xlu0 %2812, %v2490
    %v2814 = vpop.permute.xlu0 %2813
    %2815 = vset.pattern.permute.xlu0 0
    %2816 = vperm.xlu0 %2815, %v2491
    %v2817 = vpop.permute.xlu0 %2816
    %2818 = vset.pattern.permute.xlu0 0
    %2819 = vperm.xlu0 %2818, %v2492
    %v2820 = vpop.permute.xlu0 %2819
    %2821 = vset.pattern.permute.xlu0 0
    %2822 = vperm.xlu0 %2821, %v2493
    %v2823 = vpop.permute.xlu0 %2822
    %2824 = vset.pattern.permute.xlu0 0
    %2825 = vperm.xlu0 %2824, %v2494
    %v2826 = vpop.permute.xlu0 %2825
    %2827 = vset.pattern.permute.xlu0 0
    %2828 = vperm.xlu0 %2827, %v2495
    %v2829 = vpop.permute.xlu0 %2828
    %2830 = vset.pattern.permute.xlu0 0
    %2831 = vperm.xlu0 %2830, %v2496
    %v2832 = vpop.permute.xlu0 %2831
    %2833 = vset.pattern.permute.xlu0 0
    %2834 = vperm.xlu0 %2833, %v2497
    %v2835 = vpop.permute.xlu0 %2834
    %2836 = vset.pattern.permute.xlu0 0
    %2837 = vperm.xlu0 %2836, %v2498
    %v2838 = vpop.permute.xlu0 %2837
    %2839 = vset.pattern.permute.xlu0 0
    %2840 = vperm.xlu0 %2839, %v2499
    %v2841 = vpop.permute.xlu0 %2840
    %2842 = vset.pattern.permute.xlu0 0
    %2843 = vperm.xlu0 %2842, %v2500
    %v2844 = vpop.permute.xlu0 %2843
    %2845 = vset.pattern.permute.xlu0 0
    %2846 = vperm.xlu0 %2845, %v2501
    %v2847 = vpop.permute.xlu0 %2846
    %2848 = vset.pattern.permute.xlu0 0
    %2849 = vperm.xlu0 %2848, %v2502
    %v2850 = vpop.permute.xlu0 %2849
    %2851 = vset.pattern.permute.xlu0 0
    %2852 = vperm.xlu0 %2851, %v2503
    %v2853 = vpop.permute.xlu0 %2852
    %2854 = vset.pattern.permute.xlu0 0
    %2855 = vperm.xlu0 %2854, %v2504
    %v2856 = vpop.permute.xlu0 %2855
    %2857 = vset.pattern.permute.xlu0 0
    %2858 = vperm.xlu0 %2857, %v2505
    %v2859 = vpop.permute.xlu0 %2858
    %2860 = vset.pattern.permute.xlu0 0
    %2861 = vperm.xlu0 %2860, %v2506
    %v2862 = vpop.permute.xlu0 %2861
    %2863 = vset.pattern.permute.xlu0 0
    %2864 = vperm.xlu0 %2863, %v2507
    %v2865 = vpop.permute.xlu0 %2864
    %2866 = vset.pattern.permute.xlu0 0
    %2867 = vperm.xlu0 %2866, %v2508
    %v2868 = vpop.permute.xlu0 %2867
    %2869 = vset.pattern.permute.xlu0 0
    %2870 = vperm.xlu0 %2869, %v2509
    %v2871 = vpop.permute.xlu0 %2870
    %2872 = vset.pattern.permute.xlu0 0
    %2873 = vperm.xlu0 %2872, %v2510
    %v2874 = vpop.permute.xlu0 %2873
    %2875 = vset.pattern.permute.xlu0 0
    %2876 = vperm.xlu0 %2875, %v2511
    %v2877 = vpop.permute.xlu0 %2876
    %2878 = vset.pattern.permute.xlu0 0
    %2879 = vperm.xlu0 %2878, %v2512
    %v2880 = vpop.permute.xlu0 %2879
    %2881 = vset.pattern.permute.xlu0 0
    %2882 = vperm.xlu0 %2881, %v2513
    %v2883 = vpop.permute.xlu0 %2882
    %2884 = vset.pattern.permute.xlu0 0
    %2885 = vperm.xlu0 %2884, %v2514
    %v2886 = vpop.permute.xlu0 %2885
    %2887 = vset.pattern.permute.xlu0 0
    %2888 = vperm.xlu0 %2887, %v2515
    %v2889 = vpop.permute.xlu0 %2888
    %2890 = vset.pattern.permute.xlu0 0
    %2891 = vperm.xlu0 %2890, %v2516
    %v2892 = vpop.permute.xlu0 %2891
    %2893 = vset.pattern.permute.xlu0 0
    %2894 = vperm.xlu0 %2893, %v2517
    %v2895 = vpop.permute.xlu0 %2894
    %2896 = vset.pattern.permute.xlu0 0
    %2897 = vperm.xlu0 %2896, %v2518
    %v2898 = vpop.permute.xlu0 %2897
    %2899 = vset.pattern.permute.xlu0 0
    %2900 = vperm.xlu0 %2899, %v2519
    %v2901 = vpop.permute.xlu0 %2900
    %2902 = vset.pattern.permute.xlu0 0
    %2903 = vperm.xlu0 %2902, %v2520
    %v2904 = vpop.permute.xlu0 %2903
    %2905 = vset.pattern.permute.xlu0 0
    %2906 = vperm.xlu0 %2905, %v2521
    %v2907 = vpop.permute.xlu0 %2906
    %2908 = vset.pattern.permute.xlu0 0
    %2909 = vperm.xlu0 %2908, %v2522
    %v2910 = vpop.permute.xlu0 %2909
    %2911 = vset.pattern.permute.xlu0 0
    %2912 = vperm.xlu0 %2911, %v2523
    %v2913 = vpop.permute.xlu0 %2912
    %2914 = vset.pattern.permute.xlu0 0
    %2915 = vperm.xlu0 %2914, %v2524
    %v2916 = vpop.permute.xlu0 %2915
    %2917 = vset.pattern.permute.xlu0 0
    %2918 = vperm.xlu0 %2917, %v2525
    %v2919 = vpop.permute.xlu0 %2918
    %2920 = vset.pattern.permute.xlu0 0
    %2921 = vperm.xlu0 %2920, %v2526
    %v2922 = vpop.permute.xlu0 %2921
    %2923 = vset.pattern.permute.xlu0 0
    %2924 = vperm.xlu0 %2923, %v2527
    %v2925 = vpop.permute.xlu0 %2924
    %2926 = vset.pattern.permute.xlu0 0
    %2927 = vperm.xlu0 %2926, %v2528
    %v2928 = vpop.permute.xlu0 %2927
    %2929 = vset.pattern.permute.xlu0 0
    %2930 = vperm.xlu0 %2929, %v2529
    %v2931 = vpop.permute.xlu0 %2930
    %2932 = vset.pattern.permute.xlu0 0
    %2933 = vperm.xlu0 %2932, %v2530
    %v2934 = vpop.permute.xlu0 %2933
    %2935 = vset.pattern.permute.xlu0 0
    %2936 = vperm.xlu0 %2935, %v2531
    %v2937 = vpop.permute.xlu0 %2936
    %2938 = vset.pattern.permute.xlu0 0
    %2939 = vperm.xlu0 %2938, %v2532
    %v2940 = vpop.permute.xlu0 %2939
    %2941 = vset.pattern.permute.xlu0 0
    %2942 = vperm.xlu0 %2941, %v2533
    %v2943 = vpop.permute.xlu0 %2942
    %2944 = vset.pattern.permute.xlu0 0
    %2945 = vperm.xlu0 %2944, %v2534
    %v2946 = vpop.permute.xlu0 %2945
    %2947 = vset.pattern.permute.xlu0 0
    %2948 = vperm.xlu0 %2947, %v2535
    %v2949 = vpop.permute.xlu0 %2948
    %2950 = vset.pattern.permute.xlu0 0
    %2951 = vperm.xlu0 %2950, %v2536
    %v2952 = vpop.permute.xlu0 %2951
    %2953 = vset.pattern.permute.xlu0 0
    %2954 = vperm.xlu0 %2953, %v2537
    %v2955 = vpop.permute.xlu0 %2954
    %2956 = vset.pattern.permute.xlu0 0
    %2957 = vperm.xlu0 %2956, %v2538
    %v2958 = vpop.permute.xlu0 %2957
    %2959 = vset.pattern.permute.xlu0 0
    %2960 = vperm.xlu0 %2959, %v2539
    %v2961 = vpop.permute.xlu0 %2960
    %2962 = vset.pattern.permute.xlu0 0
    %2963 = vperm.xlu0 %2962, %v2540
    %v2964 = vpop.permute.xlu0 %2963
    %2965 = vset.pattern.permute.xlu0 0
    %2966 = vperm.xlu0 %2965, %v2541
    %v2967 = vpop.permute.xlu0 %2966
    %2968 = vset.pattern.permute.xlu0 0
    %2969 = vperm.xlu0 %2968, %v2542
    %v2970 = vpop.permute.xlu0 %2969
    %2971 = vset.pattern.permute.xlu0 0
    %2972 = vperm.xlu0 %2971, %v2543
    %v2973 = vpop.permute.xlu0 %2972
    %2974 = vset.pattern.permute.xlu0 0
    %2975 = vperm.xlu0 %2974, %v2544
    %v2976 = vpop.permute.xlu0 %2975
    %2977 = vset.pattern.permute.xlu0 0
    %2978 = vperm.xlu0 %2977, %v2545
    %v2979 = vpop.permute.xlu0 %2978
    %2980 = vset.pattern.permute.xlu0 0
    %2981 = vperm.xlu0 %2980, %v2546
    %v2982 = vpop.permute.xlu0 %2981
    %2983 = vset.pattern.permute.xlu0 0
    %2984 = vperm.xlu0 %2983, %v2547
    %v2985 = vpop.permute.xlu0 %2984
    %2986 = vset.pattern.permute.xlu0 0
    %2987 = vperm.xlu0 %2986, %v2548
    %v2988 = vpop.permute.xlu0 %2987
    %2989 = vset.pattern.permute.xlu0 0
    %2990 = vperm.xlu0 %2989, %v2549
    %v2991 = vpop.permute.xlu0 %2990
    %2992 = vset.pattern.permute.xlu0 0
    %2993 = vperm.xlu0 %2992, %v2550
    %v2994 = vpop.permute.xlu0 %2993
    %2995 = vset.pattern.permute.xlu0 0
    %2996 = vperm.xlu0 %2995, %v2551
    %v2997 = vpop.permute.xlu0 %2996
    %2998 = vset.pattern.permute.xlu0 0
    %2999 = vperm.xlu0 %2998, %v2552
    %v3000 = vpop.permute.xlu0 %2999
    %3001 = vset.pattern.permute.xlu0 0
    %3002 = vperm.xlu0 %3001, %v2553
    %v3003 = vpop.permute.xlu0 %3002
    %3004 = vset.pattern.permute.xlu0 0
    %3005 = vperm.xlu0 %3004, %v2554
    %v3006 = vpop.permute.xlu0 %3005
    %3007 = vset.pattern.permute.xlu0 0
    %3008 = vperm.xlu0 %3007, %v2555
    %v3009 = vpop.permute.xlu0 %3008
    %3010 = vset.pattern.permute.xlu0 0
    %3011 = vperm.xlu0 %3010, %v2556
    %v3012 = vpop.permute.xlu0 %3011
    %3013 = vset.pattern.permute.xlu0 0
    %3014 = vperm.xlu0 %3013, %v2557
    %v3015 = vpop.permute.xlu0 %3014
    %3016 = vset.pattern.permute.xlu0 0
    %3017 = vperm.xlu0 %3016, %v2558
    %v3018 = vpop.permute.xlu0 %3017
    %3019 = vset.pattern.permute.xlu0 0
    %3020 = vperm.xlu0 %3019, %v2559
    %v3021 = vpop.permute.xlu0 %3020
    %3022 = vset.pattern.permute.xlu0 0
    %3023 = vperm.xlu0 %3022, %v2560
    %v3024 = vpop.permute.xlu0 %3023
    %3025 = vset.pattern.permute.xlu0 0
    %3026 = vperm.xlu0 %3025, %v2561
    %v3027 = vpop.permute.xlu0 %3026
    %3028 = vset.pattern.permute.xlu0 0
    %3029 = vperm.xlu0 %3028, %v2562
    %v3030 = vpop.permute.xlu0 %3029
    %3031 = vset.pattern.permute.xlu0 0
    %3032 = vperm.xlu0 %3031, %v2563
    %v3033 = vpop.permute.xlu0 %3032
    %3034 = vset.pattern.permute.xlu0 0
    %3035 = vperm.xlu0 %3034, %v2564
    %v3036 = vpop.permute.xlu0 %3035
    %3037 = vset.pattern.permute.xlu0 0
    %3038 = vperm.xlu0 %3037, %v2565
    %v3039 = vpop.permute.xlu0 %3038
    %3040 = vset.pattern.permute.xlu0 0
    %3041 = vperm.xlu0 %3040, %v2566
    %v3042 = vpop.permute.xlu0 %3041
    %3043 = vset.pattern.permute.xlu0 0
    %3044 = vperm.xlu0 %3043, %v2567
    %v3045 = vpop.permute.xlu0 %3044
    %3046 = vset.pattern.permute.xlu0 0
    %3047 = vperm.xlu0 %3046, %v2568
    %v3048 = vpop.permute.xlu0 %3047
    %3049 = vset.pattern.permute.xlu0 0
    %3050 = vperm.xlu0 %3049, %v2569
    %v3051 = vpop.permute.xlu0 %3050
    %3052 = vset.pattern.permute.xlu0 0
    %3053 = vperm.xlu0 %3052, %v2570
    %v3054 = vpop.permute.xlu0 %3053
    %3055 = vset.pattern.permute.xlu0 0
    %3056 = vperm.xlu0 %3055, %v2571
    %v3057 = vpop.permute.xlu0 %3056
    %3058 = vset.pattern.permute.xlu0 0
    %3059 = vperm.xlu0 %3058, %v2572
    %v3060 = vpop.permute.xlu0 %3059
    %3061 = vset.pattern.permute.xlu0 0
    %3062 = vperm.xlu0 %3061, %v2573
    %v3063 = vpop.permute.xlu0 %3062
    %3064 = vset.pattern.permute.xlu0 0
    %3065 = vperm.xlu0 %3064, %v2574
    %v3066 = vpop.permute.xlu0 %3065
    %3067 = vset.pattern.permute.xlu0 0
    %3068 = vperm.xlu0 %3067, %v2575
    %v3069 = vpop.permute.xlu0 %3068
    %3070 = vset.pattern.permute.xlu0 0
    %3071 = vperm.xlu0 %3070, %v2576
    %v3072 = vpop.permute.xlu0 %3071
    %3073 = vset.pattern.permute.xlu0 0
    %3074 = vperm.xlu0 %3073, %v2577
    %v3075 = vpop.permute.xlu0 %3074
    %3076 = vset.pattern.permute.xlu0 0
    %3077 = vperm.xlu0 %3076, %v2578
    %v3078 = vpop.permute.xlu0 %3077
    %3079 = vset.pattern.permute.xlu0 0
    %3080 = vperm.xlu0 %3079, %v2579
    %v3081 = vpop.permute.xlu0 %3080
    %3082 = vset.pattern.permute.xlu0 0
    %3083 = vperm.xlu0 %3082, %v2580
    %v3084 = vpop.permute.xlu0 %3083
    %3085 = vset.pattern.permute.xlu0 0
    %3086 = vperm.xlu0 %3085, %v2581
    %v3087 = vpop.permute.xlu0 %3086
    %3088 = vset.pattern.permute.xlu0 0
    %3089 = vperm.xlu0 %3088, %v2582
    %v3090 = vpop.permute.xlu0 %3089
    %3091 = vset.pattern.permute.xlu0 0
    %3092 = vperm.xlu0 %3091, %v2583
    %v3093 = vpop.permute.xlu0 %3092
    %3094 = vset.pattern.permute.xlu0 0
    %3095 = vperm.xlu0 %3094, %v2584
    %v3096 = vpop.permute.xlu0 %3095
    %v3097 = vlaneseq
    %v3098 = vand.u32 %v3097, 127
    %v3099 = vlaneseq
    %v3100 = vshrl.u32 %v3099, 7
    %v3101 = vsub.s32 %v3098, %v3100
    %v3102 = vrot.slane %v2715, %v3101
    %v3103 = vadd.s32 %v3098, 4294967288
    %v3104 = vlaneseq
    %v3105 = vshrl.u32 %v3104, 7
    %v3106 = vsub.s32 %v3103, %v3105
    %v3107 = vrot.slane %v2718, %v3106
    %vm3108 = vcmask 130112
    %v3109 = vsel %vm3108, %v3107, %v3102
    %v3110 = vadd.s32 %v3098, 4294967280
    %v3111 = vlaneseq
    %v3112 = vshrl.u32 %v3111, 7
    %v3113 = vsub.s32 %v3110, %v3112
    %v3114 = vrot.slane %v2721, %v3113
    %vm3115 = vcmask 195712
    %v3116 = vsel %vm3115, %v3114, %v3109
    %v3117 = vadd.s32 %v3098, 4294967272
    %v3118 = vlaneseq
    %v3119 = vshrl.u32 %v3118, 7
    %v3120 = vsub.s32 %v3117, %v3119
    %v3121 = vrot.slane %v2724, %v3120
    %vm3122 = vcmask 261312
    %v3123 = vsel %vm3122, %v3121, %v3116
    %v3124 = vadd.s32 %v3098, 4294967264
    %v3125 = vlaneseq
    %v3126 = vshrl.u32 %v3125, 7
    %v3127 = vsub.s32 %v3124, %v3126
    %v3128 = vrot.slane %v2727, %v3127
    %vm3129 = vcmask 326912
    %v3130 = vsel %vm3129, %v3128, %v3123
    %v3131 = vadd.s32 %v3098, 4294967256
    %v3132 = vlaneseq
    %v3133 = vshrl.u32 %v3132, 7
    %v3134 = vsub.s32 %v3131, %v3133
    %v3135 = vrot.slane %v2730, %v3134
    %vm3136 = vcmask 392512
    %v3137 = vsel %vm3136, %v3135, %v3130
    %v3138 = vadd.s32 %v3098, 4294967248
    %v3139 = vlaneseq
    %v3140 = vshrl.u32 %v3139, 7
    %v3141 = vsub.s32 %v3138, %v3140
    %v3142 = vrot.slane %v2733, %v3141
    %vm3143 = vcmask 458112
    %v3144 = vsel %vm3143, %v3142, %v3137
    %v3145 = vadd.s32 %v3098, 4294967240
    %v3146 = vlaneseq
    %v3147 = vshrl.u32 %v3146, 7
    %v3148 = vsub.s32 %v3145, %v3147
    %v3149 = vrot.slane %v2736, %v3148
    %vm3150 = vcmask 523712
    %v3151 = vsel %vm3150, %v3149, %v3144
    %v3152 = vadd.s32 %v3098, 4294967232
    %v3153 = vlaneseq
    %v3154 = vshrl.u32 %v3153, 7
    %v3155 = vsub.s32 %v3152, %v3154
    %v3156 = vrot.slane %v2739, %v3155
    %vm3157 = vcmask 589312
    %v3158 = vsel %vm3157, %v3156, %v3151
    %v3159 = vadd.s32 %v3098, 4294967224
    %v3160 = vlaneseq
    %v3161 = vshrl.u32 %v3160, 7
    %v3162 = vsub.s32 %v3159, %v3161
    %v3163 = vrot.slane %v2742, %v3162
    %vm3164 = vcmask 654912
    %v3165 = vsel %vm3164, %v3163, %v3158
    %v3166 = vadd.s32 %v3098, 4294967216
    %v3167 = vlaneseq
    %v3168 = vshrl.u32 %v3167, 7
    %v3169 = vsub.s32 %v3166, %v3168
    %v3170 = vrot.slane %v2745, %v3169
    %vm3171 = vcmask 720512
    %v3172 = vsel %vm3171, %v3170, %v3165
    %v3173 = vadd.s32 %v3098, 4294967208
    %v3174 = vlaneseq
    %v3175 = vshrl.u32 %v3174, 7
    %v3176 = vsub.s32 %v3173, %v3175
    %v3177 = vrot.slane %v2748, %v3176
    %vm3178 = vcmask 786112
    %v3179 = vsel %vm3178, %v3177, %v3172
    %v3180 = vadd.s32 %v3098, 4294967200
    %v3181 = vlaneseq
    %v3182 = vshrl.u32 %v3181, 7
    %v3183 = vsub.s32 %v3180, %v3182
    %v3184 = vrot.slane %v2751, %v3183
    %vm3185 = vcmask 851712
    %v3186 = vsel %vm3185, %v3184, %v3179
    %v3187 = vadd.s32 %v3098, 4294967192
    %v3188 = vlaneseq
    %v3189 = vshrl.u32 %v3188, 7
    %v3190 = vsub.s32 %v3187, %v3189
    %v3191 = vrot.slane %v2754, %v3190
    %vm3192 = vcmask 917312
    %v3193 = vsel %vm3192, %v3191, %v3186
    %v3194 = vadd.s32 %v3098, 4294967184
    %v3195 = vlaneseq
    %v3196 = vshrl.u32 %v3195, 7
    %v3197 = vsub.s32 %v3194, %v3196
    %v3198 = vrot.slane %v2757, %v3197
    %vm3199 = vcmask 982912
    %v3200 = vsel %vm3199, %v3198, %v3193
    %v3201 = vadd.s32 %v3098, 4294967176
    %v3202 = vlaneseq
    %v3203 = vshrl.u32 %v3202, 7
    %v3204 = vsub.s32 %v3201, %v3203
    %v3205 = vrot.slane %v2760, %v3204
    %vm3206 = vcmask 1048512
    %v3207 = vsel %vm3206, %v3205, %v3200
    %v3208 = vlaneseq
    %v3209 = vshrl.u32 %v3208, 7
    %v3210 = vsub.s32 %v3098, %v3209
    %v3211 = vrot.slane %v2763, %v3210
    %v3212 = vlaneseq
    %v3213 = vshrl.u32 %v3212, 7
    %v3214 = vsub.s32 %v3103, %v3213
    %v3215 = vrot.slane %v2766, %v3214
    %v3216 = vsel %vm3108, %v3215, %v3211
    %v3217 = vlaneseq
    %v3218 = vshrl.u32 %v3217, 7
    %v3219 = vsub.s32 %v3110, %v3218
    %v3220 = vrot.slane %v2769, %v3219
    %v3221 = vsel %vm3115, %v3220, %v3216
    %v3222 = vlaneseq
    %v3223 = vshrl.u32 %v3222, 7
    %v3224 = vsub.s32 %v3117, %v3223
    %v3225 = vrot.slane %v2772, %v3224
    %v3226 = vsel %vm3122, %v3225, %v3221
    %v3227 = vlaneseq
    %v3228 = vshrl.u32 %v3227, 7
    %v3229 = vsub.s32 %v3124, %v3228
    %v3230 = vrot.slane %v2775, %v3229
    %v3231 = vsel %vm3129, %v3230, %v3226
    %v3232 = vlaneseq
    %v3233 = vshrl.u32 %v3232, 7
    %v3234 = vsub.s32 %v3131, %v3233
    %v3235 = vrot.slane %v2778, %v3234
    %v3236 = vsel %vm3136, %v3235, %v3231
    %v3237 = vlaneseq
    %v3238 = vshrl.u32 %v3237, 7
    %v3239 = vsub.s32 %v3138, %v3238
    %v3240 = vrot.slane %v2781, %v3239
    %v3241 = vsel %vm3143, %v3240, %v3236
    %v3242 = vlaneseq
    %v3243 = vshrl.u32 %v3242, 7
    %v3244 = vsub.s32 %v3145, %v3243
    %v3245 = vrot.slane %v2784, %v3244
    %v3246 = vsel %vm3150, %v3245, %v3241
    %v3247 = vlaneseq
    %v3248 = vshrl.u32 %v3247, 7
    %v3249 = vsub.s32 %v3152, %v3248
    %v3250 = vrot.slane %v2787, %v3249
    %v3251 = vsel %vm3157, %v3250, %v3246
    %v3252 = vlaneseq
    %v3253 = vshrl.u32 %v3252, 7
    %v3254 = vsub.s32 %v3159, %v3253
    %v3255 = vrot.slane %v2790, %v3254
    %v3256 = vsel %vm3164, %v3255, %v3251
    %v3257 = vlaneseq
    %v3258 = vshrl.u32 %v3257, 7
    %v3259 = vsub.s32 %v3166, %v3258
    %v3260 = vrot.slane %v2793, %v3259
    %v3261 = vsel %vm3171, %v3260, %v3256
    %v3262 = vlaneseq
    %v3263 = vshrl.u32 %v3262, 7
    %v3264 = vsub.s32 %v3173, %v3263
    %v3265 = vrot.slane %v2796, %v3264
    %v3266 = vsel %vm3178, %v3265, %v3261
    %v3267 = vlaneseq
    %v3268 = vshrl.u32 %v3267, 7
    %v3269 = vsub.s32 %v3180, %v3268
    %v3270 = vrot.slane %v2799, %v3269
    %v3271 = vsel %vm3185, %v3270, %v3266
    %v3272 = vlaneseq
    %v3273 = vshrl.u32 %v3272, 7
    %v3274 = vsub.s32 %v3187, %v3273
    %v3275 = vrot.slane %v2802, %v3274
    %v3276 = vsel %vm3192, %v3275, %v3271
    %v3277 = vlaneseq
    %v3278 = vshrl.u32 %v3277, 7
    %v3279 = vsub.s32 %v3194, %v3278
    %v3280 = vrot.slane %v2805, %v3279
    %v3281 = vsel %vm3199, %v3280, %v3276
    %v3282 = vlaneseq
    %v3283 = vshrl.u32 %v3282, 7
    %v3284 = vsub.s32 %v3201, %v3283
    %v3285 = vrot.slane %v2808, %v3284
    %v3286 = vsel %vm3206, %v3285, %v3281
    %v3287 = vlaneseq
    %v3288 = vshrl.u32 %v3287, 7
    %v3289 = vsub.s32 %v3098, %v3288
    %v3290 = vrot.slane %v2811, %v3289
    %v3291 = vlaneseq
    %v3292 = vshrl.u32 %v3291, 7
    %v3293 = vsub.s32 %v3103, %v3292
    %v3294 = vrot.slane %v2814, %v3293
    %v3295 = vsel %vm3108, %v3294, %v3290
    %v3296 = vlaneseq
    %v3297 = vshrl.u32 %v3296, 7
    %v3298 = vsub.s32 %v3110, %v3297
    %v3299 = vrot.slane %v2817, %v3298
    %v3300 = vsel %vm3115, %v3299, %v3295
    %v3301 = vlaneseq
    %v3302 = vshrl.u32 %v3301, 7
    %v3303 = vsub.s32 %v3117, %v3302
    %v3304 = vrot.slane %v2820, %v3303
    %v3305 = vsel %vm3122, %v3304, %v3300
    %v3306 = vlaneseq
    %v3307 = vshrl.u32 %v3306, 7
    %v3308 = vsub.s32 %v3124, %v3307
    %v3309 = vrot.slane %v2823, %v3308
    %v3310 = vsel %vm3129, %v3309, %v3305
    %v3311 = vlaneseq
    %v3312 = vshrl.u32 %v3311, 7
    %v3313 = vsub.s32 %v3131, %v3312
    %v3314 = vrot.slane %v2826, %v3313
    %v3315 = vsel %vm3136, %v3314, %v3310
    %v3316 = vlaneseq
    %v3317 = vshrl.u32 %v3316, 7
    %v3318 = vsub.s32 %v3138, %v3317
    %v3319 = vrot.slane %v2829, %v3318
    %v3320 = vsel %vm3143, %v3319, %v3315
    %v3321 = vlaneseq
    %v3322 = vshrl.u32 %v3321, 7
    %v3323 = vsub.s32 %v3145, %v3322
    %v3324 = vrot.slane %v2832, %v3323
    %v3325 = vsel %vm3150, %v3324, %v3320
    %v3326 = vlaneseq
    %v3327 = vshrl.u32 %v3326, 7
    %v3328 = vsub.s32 %v3152, %v3327
    %v3329 = vrot.slane %v2835, %v3328
    %v3330 = vsel %vm3157, %v3329, %v3325
    %v3331 = vlaneseq
    %v3332 = vshrl.u32 %v3331, 7
    %v3333 = vsub.s32 %v3159, %v3332
    %v3334 = vrot.slane %v2838, %v3333
    %v3335 = vsel %vm3164, %v3334, %v3330
    %v3336 = vlaneseq
    %v3337 = vshrl.u32 %v3336, 7
    %v3338 = vsub.s32 %v3166, %v3337
    %v3339 = vrot.slane %v2841, %v3338
    %v3340 = vsel %vm3171, %v3339, %v3335
    %v3341 = vlaneseq
    %v3342 = vshrl.u32 %v3341, 7
    %v3343 = vsub.s32 %v3173, %v3342
    %v3344 = vrot.slane %v2844, %v3343
    %v3345 = vsel %vm3178, %v3344, %v3340
    %v3346 = vlaneseq
    %v3347 = vshrl.u32 %v3346, 7
    %v3348 = vsub.s32 %v3180, %v3347
    %v3349 = vrot.slane %v2847, %v3348
    %v3350 = vsel %vm3185, %v3349, %v3345
    %v3351 = vlaneseq
    %v3352 = vshrl.u32 %v3351, 7
    %v3353 = vsub.s32 %v3187, %v3352
    %v3354 = vrot.slane %v2850, %v3353
    %v3355 = vsel %vm3192, %v3354, %v3350
    %v3356 = vlaneseq
    %v3357 = vshrl.u32 %v3356, 7
    %v3358 = vsub.s32 %v3194, %v3357
    %v3359 = vrot.slane %v2853, %v3358
    %v3360 = vsel %vm3199, %v3359, %v3355
    %v3361 = vlaneseq
    %v3362 = vshrl.u32 %v3361, 7
    %v3363 = vsub.s32 %v3201, %v3362
    %v3364 = vrot.slane %v2856, %v3363
    %v3365 = vsel %vm3206, %v3364, %v3360
    %v3366 = vlaneseq
    %v3367 = vshrl.u32 %v3366, 7
    %v3368 = vsub.s32 %v3098, %v3367
    %v3369 = vrot.slane %v2859, %v3368
    %v3370 = vlaneseq
    %v3371 = vshrl.u32 %v3370, 7
    %v3372 = vsub.s32 %v3103, %v3371
    %v3373 = vrot.slane %v2862, %v3372
    %v3374 = vsel %vm3108, %v3373, %v3369
    %v3375 = vlaneseq
    %v3376 = vshrl.u32 %v3375, 7
    %v3377 = vsub.s32 %v3110, %v3376
    %v3378 = vrot.slane %v2865, %v3377
    %v3379 = vsel %vm3115, %v3378, %v3374
    %v3380 = vlaneseq
    %v3381 = vshrl.u32 %v3380, 7
    %v3382 = vsub.s32 %v3117, %v3381
    %v3383 = vrot.slane %v2868, %v3382
    %v3384 = vsel %vm3122, %v3383, %v3379
    %v3385 = vlaneseq
    %v3386 = vshrl.u32 %v3385, 7
    %v3387 = vsub.s32 %v3124, %v3386
    %v3388 = vrot.slane %v2871, %v3387
    %v3389 = vsel %vm3129, %v3388, %v3384
    %v3390 = vlaneseq
    %v3391 = vshrl.u32 %v3390, 7
    %v3392 = vsub.s32 %v3131, %v3391
    %v3393 = vrot.slane %v2874, %v3392
    %v3394 = vsel %vm3136, %v3393, %v3389
    %v3395 = vlaneseq
    %v3396 = vshrl.u32 %v3395, 7
    %v3397 = vsub.s32 %v3138, %v3396
    %v3398 = vrot.slane %v2877, %v3397
    %v3399 = vsel %vm3143, %v3398, %v3394
    %v3400 = vlaneseq
    %v3401 = vshrl.u32 %v3400, 7
    %v3402 = vsub.s32 %v3145, %v3401
    %v3403 = vrot.slane %v2880, %v3402
    %v3404 = vsel %vm3150, %v3403, %v3399
    %v3405 = vlaneseq
    %v3406 = vshrl.u32 %v3405, 7
    %v3407 = vsub.s32 %v3152, %v3406
    %v3408 = vrot.slane %v2883, %v3407
    %v3409 = vsel %vm3157, %v3408, %v3404
    %v3410 = vlaneseq
    %v3411 = vshrl.u32 %v3410, 7
    %v3412 = vsub.s32 %v3159, %v3411
    %v3413 = vrot.slane %v2886, %v3412
    %v3414 = vsel %vm3164, %v3413, %v3409
    %v3415 = vlaneseq
    %v3416 = vshrl.u32 %v3415, 7
    %v3417 = vsub.s32 %v3166, %v3416
    %v3418 = vrot.slane %v2889, %v3417
    %v3419 = vsel %vm3171, %v3418, %v3414
    %v3420 = vlaneseq
    %v3421 = vshrl.u32 %v3420, 7
    %v3422 = vsub.s32 %v3173, %v3421
    %v3423 = vrot.slane %v2892, %v3422
    %v3424 = vsel %vm3178, %v3423, %v3419
    %v3425 = vlaneseq
    %v3426 = vshrl.u32 %v3425, 7
    %v3427 = vsub.s32 %v3180, %v3426
    %v3428 = vrot.slane %v2895, %v3427
    %v3429 = vsel %vm3185, %v3428, %v3424
    %v3430 = vlaneseq
    %v3431 = vshrl.u32 %v3430, 7
    %v3432 = vsub.s32 %v3187, %v3431
    %v3433 = vrot.slane %v2898, %v3432
    %v3434 = vsel %vm3192, %v3433, %v3429
    %v3435 = vlaneseq
    %v3436 = vshrl.u32 %v3435, 7
    %v3437 = vsub.s32 %v3194, %v3436
    %v3438 = vrot.slane %v2901, %v3437
    %v3439 = vsel %vm3199, %v3438, %v3434
    %v3440 = vlaneseq
    %v3441 = vshrl.u32 %v3440, 7
    %v3442 = vsub.s32 %v3201, %v3441
    %v3443 = vrot.slane %v2904, %v3442
    %v3444 = vsel %vm3206, %v3443, %v3439
    %v3445 = vlaneseq
    %v3446 = vshrl.u32 %v3445, 7
    %v3447 = vsub.s32 %v3098, %v3446
    %v3448 = vrot.slane %v2907, %v3447
    %v3449 = vlaneseq
    %v3450 = vshrl.u32 %v3449, 7
    %v3451 = vsub.s32 %v3103, %v3450
    %v3452 = vrot.slane %v2910, %v3451
    %v3453 = vsel %vm3108, %v3452, %v3448
    %v3454 = vlaneseq
    %v3455 = vshrl.u32 %v3454, 7
    %v3456 = vsub.s32 %v3110, %v3455
    %v3457 = vrot.slane %v2913, %v3456
    %v3458 = vsel %vm3115, %v3457, %v3453
    %v3459 = vlaneseq
    %v3460 = vshrl.u32 %v3459, 7
    %v3461 = vsub.s32 %v3117, %v3460
    %v3462 = vrot.slane %v2916, %v3461
    %v3463 = vsel %vm3122, %v3462, %v3458
    %v3464 = vlaneseq
    %v3465 = vshrl.u32 %v3464, 7
    %v3466 = vsub.s32 %v3124, %v3465
    %v3467 = vrot.slane %v2919, %v3466
    %v3468 = vsel %vm3129, %v3467, %v3463
    %v3469 = vlaneseq
    %v3470 = vshrl.u32 %v3469, 7
    %v3471 = vsub.s32 %v3131, %v3470
    %v3472 = vrot.slane %v2922, %v3471
    %v3473 = vsel %vm3136, %v3472, %v3468
    %v3474 = vlaneseq
    %v3475 = vshrl.u32 %v3474, 7
    %v3476 = vsub.s32 %v3138, %v3475
    %v3477 = vrot.slane %v2925, %v3476
    %v3478 = vsel %vm3143, %v3477, %v3473
    %v3479 = vlaneseq
    %v3480 = vshrl.u32 %v3479, 7
    %v3481 = vsub.s32 %v3145, %v3480
    %v3482 = vrot.slane %v2928, %v3481
    %v3483 = vsel %vm3150, %v3482, %v3478
    %v3484 = vlaneseq
    %v3485 = vshrl.u32 %v3484, 7
    %v3486 = vsub.s32 %v3152, %v3485
    %v3487 = vrot.slane %v2931, %v3486
    %v3488 = vsel %vm3157, %v3487, %v3483
    %v3489 = vlaneseq
    %v3490 = vshrl.u32 %v3489, 7
    %v3491 = vsub.s32 %v3159, %v3490
    %v3492 = vrot.slane %v2934, %v3491
    %v3493 = vsel %vm3164, %v3492, %v3488
    %v3494 = vlaneseq
    %v3495 = vshrl.u32 %v3494, 7
    %v3496 = vsub.s32 %v3166, %v3495
    %v3497 = vrot.slane %v2937, %v3496
    %v3498 = vsel %vm3171, %v3497, %v3493
    %v3499 = vlaneseq
    %v3500 = vshrl.u32 %v3499, 7
    %v3501 = vsub.s32 %v3173, %v3500
    %v3502 = vrot.slane %v2940, %v3501
    %v3503 = vsel %vm3178, %v3502, %v3498
    %v3504 = vlaneseq
    %v3505 = vshrl.u32 %v3504, 7
    %v3506 = vsub.s32 %v3180, %v3505
    %v3507 = vrot.slane %v2943, %v3506
    %v3508 = vsel %vm3185, %v3507, %v3503
    %v3509 = vlaneseq
    %v3510 = vshrl.u32 %v3509, 7
    %v3511 = vsub.s32 %v3187, %v3510
    %v3512 = vrot.slane %v2946, %v3511
    %v3513 = vsel %vm3192, %v3512, %v3508
    %v3514 = vlaneseq
    %v3515 = vshrl.u32 %v3514, 7
    %v3516 = vsub.s32 %v3194, %v3515
    %v3517 = vrot.slane %v2949, %v3516
    %v3518 = vsel %vm3199, %v3517, %v3513
    %v3519 = vlaneseq
    %v3520 = vshrl.u32 %v3519, 7
    %v3521 = vsub.s32 %v3201, %v3520
    %v3522 = vrot.slane %v2952, %v3521
    %v3523 = vsel %vm3206, %v3522, %v3518
    %v3524 = vlaneseq
    %v3525 = vshrl.u32 %v3524, 7
    %v3526 = vsub.s32 %v3098, %v3525
    %v3527 = vrot.slane %v2955, %v3526
    %v3528 = vlaneseq
    %v3529 = vshrl.u32 %v3528, 7
    %v3530 = vsub.s32 %v3103, %v3529
    %v3531 = vrot.slane %v2958, %v3530
    %v3532 = vsel %vm3108, %v3531, %v3527
    %v3533 = vlaneseq
    %v3534 = vshrl.u32 %v3533, 7
    %v3535 = vsub.s32 %v3110, %v3534
    %v3536 = vrot.slane %v2961, %v3535
    %v3537 = vsel %vm3115, %v3536, %v3532
    %v3538 = vlaneseq
    %v3539 = vshrl.u32 %v3538, 7
    %v3540 = vsub.s32 %v3117, %v3539
    %v3541 = vrot.slane %v2964, %v3540
    %v3542 = vsel %vm3122, %v3541, %v3537
    %v3543 = vlaneseq
    %v3544 = vshrl.u32 %v3543, 7
    %v3545 = vsub.s32 %v3124, %v3544
    %v3546 = vrot.slane %v2967, %v3545
    %v3547 = vsel %vm3129, %v3546, %v3542
    %v3548 = vlaneseq
    %v3549 = vshrl.u32 %v3548, 7
    %v3550 = vsub.s32 %v3131, %v3549
    %v3551 = vrot.slane %v2970, %v3550
    %v3552 = vsel %vm3136, %v3551, %v3547
    %v3553 = vlaneseq
    %v3554 = vshrl.u32 %v3553, 7
    %v3555 = vsub.s32 %v3138, %v3554
    %v3556 = vrot.slane %v2973, %v3555
    %v3557 = vsel %vm3143, %v3556, %v3552
    %v3558 = vlaneseq
    %v3559 = vshrl.u32 %v3558, 7
    %v3560 = vsub.s32 %v3145, %v3559
    %v3561 = vrot.slane %v2976, %v3560
    %v3562 = vsel %vm3150, %v3561, %v3557
    %v3563 = vlaneseq
    %v3564 = vshrl.u32 %v3563, 7
    %v3565 = vsub.s32 %v3152, %v3564
    %v3566 = vrot.slane %v2979, %v3565
    %v3567 = vsel %vm3157, %v3566, %v3562
    %v3568 = vlaneseq
    %v3569 = vshrl.u32 %v3568, 7
    %v3570 = vsub.s32 %v3159, %v3569
    %v3571 = vrot.slane %v2982, %v3570
    %v3572 = vsel %vm3164, %v3571, %v3567
    %v3573 = vlaneseq
    %v3574 = vshrl.u32 %v3573, 7
    %v3575 = vsub.s32 %v3166, %v3574
    %v3576 = vrot.slane %v2985, %v3575
    %v3577 = vsel %vm3171, %v3576, %v3572
    %v3578 = vlaneseq
    %v3579 = vshrl.u32 %v3578, 7
    %v3580 = vsub.s32 %v3173, %v3579
    %v3581 = vrot.slane %v2988, %v3580
    %v3582 = vsel %vm3178, %v3581, %v3577
    %v3583 = vlaneseq
    %v3584 = vshrl.u32 %v3583, 7
    %v3585 = vsub.s32 %v3180, %v3584
    %v3586 = vrot.slane %v2991, %v3585
    %v3587 = vsel %vm3185, %v3586, %v3582
    %v3588 = vlaneseq
    %v3589 = vshrl.u32 %v3588, 7
    %v3590 = vsub.s32 %v3187, %v3589
    %v3591 = vrot.slane %v2994, %v3590
    %v3592 = vsel %vm3192, %v3591, %v3587
    %v3593 = vlaneseq
    %v3594 = vshrl.u32 %v3593, 7
    %v3595 = vsub.s32 %v3194, %v3594
    %v3596 = vrot.slane %v2997, %v3595
    %v3597 = vsel %vm3199, %v3596, %v3592
    %v3598 = vlaneseq
    %v3599 = vshrl.u32 %v3598, 7
    %v3600 = vsub.s32 %v3201, %v3599
    %v3601 = vrot.slane %v3000, %v3600
    %v3602 = vsel %vm3206, %v3601, %v3597
    %v3603 = vlaneseq
    %v3604 = vshrl.u32 %v3603, 7
    %v3605 = vsub.s32 %v3098, %v3604
    %v3606 = vrot.slane %v3003, %v3605
    %v3607 = vlaneseq
    %v3608 = vshrl.u32 %v3607, 7
    %v3609 = vsub.s32 %v3103, %v3608
    %v3610 = vrot.slane %v3006, %v3609
    %v3611 = vsel %vm3108, %v3610, %v3606
    %v3612 = vlaneseq
    %v3613 = vshrl.u32 %v3612, 7
    %v3614 = vsub.s32 %v3110, %v3613
    %v3615 = vrot.slane %v3009, %v3614
    %v3616 = vsel %vm3115, %v3615, %v3611
    %v3617 = vlaneseq
    %v3618 = vshrl.u32 %v3617, 7
    %v3619 = vsub.s32 %v3117, %v3618
    %v3620 = vrot.slane %v3012, %v3619
    %v3621 = vsel %vm3122, %v3620, %v3616
    %v3622 = vlaneseq
    %v3623 = vshrl.u32 %v3622, 7
    %v3624 = vsub.s32 %v3124, %v3623
    %v3625 = vrot.slane %v3015, %v3624
    %v3626 = vsel %vm3129, %v3625, %v3621
    %v3627 = vlaneseq
    %v3628 = vshrl.u32 %v3627, 7
    %v3629 = vsub.s32 %v3131, %v3628
    %v3630 = vrot.slane %v3018, %v3629
    %v3631 = vsel %vm3136, %v3630, %v3626
    %v3632 = vlaneseq
    %v3633 = vshrl.u32 %v3632, 7
    %v3634 = vsub.s32 %v3138, %v3633
    %v3635 = vrot.slane %v3021, %v3634
    %v3636 = vsel %vm3143, %v3635, %v3631
    %v3637 = vlaneseq
    %v3638 = vshrl.u32 %v3637, 7
    %v3639 = vsub.s32 %v3145, %v3638
    %v3640 = vrot.slane %v3024, %v3639
    %v3641 = vsel %vm3150, %v3640, %v3636
    %v3642 = vlaneseq
    %v3643 = vshrl.u32 %v3642, 7
    %v3644 = vsub.s32 %v3152, %v3643
    %v3645 = vrot.slane %v3027, %v3644
    %v3646 = vsel %vm3157, %v3645, %v3641
    %v3647 = vlaneseq
    %v3648 = vshrl.u32 %v3647, 7
    %v3649 = vsub.s32 %v3159, %v3648
    %v3650 = vrot.slane %v3030, %v3649
    %v3651 = vsel %vm3164, %v3650, %v3646
    %v3652 = vlaneseq
    %v3653 = vshrl.u32 %v3652, 7
    %v3654 = vsub.s32 %v3166, %v3653
    %v3655 = vrot.slane %v3033, %v3654
    %v3656 = vsel %vm3171, %v3655, %v3651
    %v3657 = vlaneseq
    %v3658 = vshrl.u32 %v3657, 7
    %v3659 = vsub.s32 %v3173, %v3658
    %v3660 = vrot.slane %v3036, %v3659
    %v3661 = vsel %vm3178, %v3660, %v3656
    %v3662 = vlaneseq
    %v3663 = vshrl.u32 %v3662, 7
    %v3664 = vsub.s32 %v3180, %v3663
    %v3665 = vrot.slane %v3039, %v3664
    %v3666 = vsel %vm3185, %v3665, %v3661
    %v3667 = vlaneseq
    %v3668 = vshrl.u32 %v3667, 7
    %v3669 = vsub.s32 %v3187, %v3668
    %v3670 = vrot.slane %v3042, %v3669
    %v3671 = vsel %vm3192, %v3670, %v3666
    %v3672 = vlaneseq
    %v3673 = vshrl.u32 %v3672, 7
    %v3674 = vsub.s32 %v3194, %v3673
    %v3675 = vrot.slane %v3045, %v3674
    %v3676 = vsel %vm3199, %v3675, %v3671
    %v3677 = vlaneseq
    %v3678 = vshrl.u32 %v3677, 7
    %v3679 = vsub.s32 %v3201, %v3678
    %v3680 = vrot.slane %v3048, %v3679
    %v3681 = vsel %vm3206, %v3680, %v3676
    %v3682 = vlaneseq
    %v3683 = vshrl.u32 %v3682, 7
    %v3684 = vsub.s32 %v3098, %v3683
    %v3685 = vrot.slane %v3051, %v3684
    %v3686 = vlaneseq
    %v3687 = vshrl.u32 %v3686, 7
    %v3688 = vsub.s32 %v3103, %v3687
    %v3689 = vrot.slane %v3054, %v3688
    %v3690 = vsel %vm3108, %v3689, %v3685
    %v3691 = vlaneseq
    %v3692 = vshrl.u32 %v3691, 7
    %v3693 = vsub.s32 %v3110, %v3692
    %v3694 = vrot.slane %v3057, %v3693
    %v3695 = vsel %vm3115, %v3694, %v3690
    %v3696 = vlaneseq
    %v3697 = vshrl.u32 %v3696, 7
    %v3698 = vsub.s32 %v3117, %v3697
    %v3699 = vrot.slane %v3060, %v3698
    %v3700 = vsel %vm3122, %v3699, %v3695
    %v3701 = vlaneseq
    %v3702 = vshrl.u32 %v3701, 7
    %v3703 = vsub.s32 %v3124, %v3702
    %v3704 = vrot.slane %v3063, %v3703
    %v3705 = vsel %vm3129, %v3704, %v3700
    %v3706 = vlaneseq
    %v3707 = vshrl.u32 %v3706, 7
    %v3708 = vsub.s32 %v3131, %v3707
    %v3709 = vrot.slane %v3066, %v3708
    %v3710 = vsel %vm3136, %v3709, %v3705
    %v3711 = vlaneseq
    %v3712 = vshrl.u32 %v3711, 7
    %v3713 = vsub.s32 %v3138, %v3712
    %v3714 = vrot.slane %v3069, %v3713
    %v3715 = vsel %vm3143, %v3714, %v3710
    %v3716 = vlaneseq
    %v3717 = vshrl.u32 %v3716, 7
    %v3718 = vsub.s32 %v3145, %v3717
    %v3719 = vrot.slane %v3072, %v3718
    %v3720 = vsel %vm3150, %v3719, %v3715
    %v3721 = vlaneseq
    %v3722 = vshrl.u32 %v3721, 7
    %v3723 = vsub.s32 %v3152, %v3722
    %v3724 = vrot.slane %v3075, %v3723
    %v3725 = vsel %vm3157, %v3724, %v3720
    %v3726 = vlaneseq
    %v3727 = vshrl.u32 %v3726, 7
    %v3728 = vsub.s32 %v3159, %v3727
    %v3729 = vrot.slane %v3078, %v3728
    %v3730 = vsel %vm3164, %v3729, %v3725
    %v3731 = vlaneseq
    %v3732 = vshrl.u32 %v3731, 7
    %v3733 = vsub.s32 %v3166, %v3732
    %v3734 = vrot.slane %v3081, %v3733
    %v3735 = vsel %vm3171, %v3734, %v3730
    %v3736 = vlaneseq
    %v3737 = vshrl.u32 %v3736, 7
    %v3738 = vsub.s32 %v3173, %v3737
    %v3739 = vrot.slane %v3084, %v3738
    %v3740 = vsel %vm3178, %v3739, %v3735
    %v3741 = vlaneseq
    %v3742 = vshrl.u32 %v3741, 7
    %v3743 = vsub.s32 %v3180, %v3742
    %v3744 = vrot.slane %v3087, %v3743
    %v3745 = vsel %vm3185, %v3744, %v3740
    %v3746 = vlaneseq
    %v3747 = vshrl.u32 %v3746, 7
    %v3748 = vsub.s32 %v3187, %v3747
    %v3749 = vrot.slane %v3090, %v3748
    %v3750 = vsel %vm3192, %v3749, %v3745
    %v3751 = vlaneseq
    %v3752 = vshrl.u32 %v3751, 7
    %v3753 = vsub.s32 %v3194, %v3752
    %v3754 = vrot.slane %v3093, %v3753
    %v3755 = vsel %vm3199, %v3754, %v3750
    %v3756 = vlaneseq
    %v3757 = vshrl.u32 %v3756, 7
    %v3758 = vsub.s32 %v3201, %v3757
    %v3759 = vrot.slane %v3096, %v3758
    %v3760 = vsel %vm3206, %v3759, %v3755
    %vm3761 = vcmask 1041409
    %v3762 = vsel %vm3761, %v3286, %v3207
    %vm3763 = vcmask 1042434
    %v3764 = vsel %vm3763, %v3365, %v3762
    %vm3765 = vcmask 1043459
    %v3766 = vsel %vm3765, %v3444, %v3764
    %vm3767 = vcmask 1044484
    %v3768 = vsel %vm3767, %v3523, %v3766
    %vm3769 = vcmask 1045509
    %v3770 = vsel %vm3769, %v3602, %v3768
    %vm3771 = vcmask 1046534
    %v3772 = vsel %vm3771, %v3681, %v3770
    %vm3773 = vcmask 1047559
    %v3774 = vsel %vm3773, %v3760, %v3772
    %3776 = vst [vmem:[#allocation3] sm:$0xff] %v3774
    // Predicated region
    $region22: #{tpu_custom_call.1} parent=1 // pred_check
      _
    $region23: #{tpu_custom_call.1} parent=1 // pred_check_branch
      %3778 = sbr.rel (0) target = $region25
    $region24: #{tpu_custom_call.1} parent=1 // pred_region
      %s3780 = ssub.s32 128, 128
      %3781 = vsyncadd [#allocation4], %s3780
      %s3783 = sshll.u32 [#allocation3], 4
      %s3784 = int_to_ptr.vmem [resolvable:$true] %s3783
      %3786 = dma.vmem_to_hbm [thread:$0]  %s3784, 128, %s5, [#allocation4]
    $region25: #{tpu_custom_call.1} parent=1 // pred_fallthru
      _
    // Predicated region
    $region26: #{tpu_custom_call.1} parent=1 // pred_check
      _
    $region27: #{tpu_custom_call.1} parent=1 // pred_check_branch
      %3788 = sbr.rel (0) target = $region29
    $region28: #{tpu_custom_call.1} parent=1 // pred_region
      %3789 = dma.done [#allocation4], 128
    $region29: #{tpu_custom_call.1} parent=1 // pred_fallthru
      _
    %3790 = vsyncpa [#allocation4], 1

</llo_original>
